<compile_context>
chip_gen: v7x
topology: tpu7x:2x2x1
jax: 0.10.0
libtpu: 0.0.40
codegen_flags: <defaults>
</compile_context>

<pallas_src>
import jax
import jax.numpy as jnp
from jax.experimental import pallas as pl
from jax.experimental.pallas import tpu as pltpu


def _make_icbam_kernel(Bb, C, H, W, k_ca, ks_sa):
    """Build the fused ICBAM kernel body for one (Bb, C, H*W) block."""
    HW = H * W
    pad_ca = (k_ca - 1) // 2
    pad_sa = (ks_sa - 1) // 2
    inv_hw = 1.0 / float(HW)
    inv_c = 1.0 / float(C)
    inv_w = 1.0 / float(W)
    n_sa = ks_sa * ks_sa

    def kernel(wca_ref, wsa_ref, x_ref, o_ref):
        # ---- hoisted, data-independent index arithmetic (iotas are not CSE'd by JAX) ----
        # Banded Conv1d(1,1,k) matrix rebuilt in-kernel from the k SMEM taps: removes the
        # C*C HBM input (and its resident double-buffered VMEM) of the previous version.
        rows = jax.lax.broadcasted_iota(jnp.int32, (C, C), 0)   # output channel c
        cols = jax.lax.broadcasted_iota(jnp.int32, (C, C), 1)   # input  channel c'
        diff = cols - rows + pad_ca                              # == j  <=>  c' = c + j - pad
        wmat = jnp.zeros((C, C), jnp.float32)
        for j in range(k_ca):
            wmat = wmat + jnp.where(diff == j, wca_ref[j], 0.0)

        # Flattened-spatial (lane) index -> (row, col).  Vector integer division is avoided
        # on purpose: (flat + 0.5) * (1/W) truncated is exact for all practical H, W.
        flat = jax.lax.broadcasted_iota(jnp.int32, (1, HW), 1)
        frow = ((flat.astype(jnp.float32) + 0.5) * inv_w).astype(jnp.int32)
        fcol = flat - frow * W

        for b in range(Bb):                                      # Bb is small and static
            xb = x_ref[b].astype(jnp.float32)                    # (C, HW), f32 compute

            # ---------------- ImprovedChannelAttention ----------------
            avg = jnp.sum(xb, axis=-1, keepdims=True) * inv_hw   # AdaptiveAvgPool2d(1)
            mx = jnp.max(xb, axis=-1, keepdims=True)             # AdaptiveMaxPool2d(1)
            pooled = jnp.concatenate([avg, mx], axis=-1)         # (C, 2): one stacked RHS
            conv = jnp.dot(wmat, pooled, preferred_element_type=jnp.float32)   # (C, 2)
            gate_c = jax.nn.sigmoid(jnp.sum(conv, axis=-1, keepdims=True))     # (C, 1)
            y = xb * gate_c                                      # channel-attended features

            # -------------------- SpatialAttention ---------------------
            mean_c = jnp.sum(y, axis=0, keepdims=True) * inv_c   # (1, HW) channel mean
            max_c = jnp.max(y, axis=0, keepdims=True)            # (1, HW) channel max

            # ks x ks conv over the (H, W) maps, done in flattened layout via lane rolls
            # plus boundary masks (zero-padding semantics, cross-correlation like Conv2d).
            acc = jnp.zeros((1, HW), jnp.float32)
            for ki in range(ks_sa):
                dy = ki - pad_sa
                for kj in range(ks_sa):
                    dx = kj - pad_sa
                    shift = dy * W + dx
                    valid = ((frow + dy >= 0) & (frow + dy < H) &
                             (fcol + dx >= 0) & (fcol + dx < W))
                    if shift == 0:
                        m_sh, x_sh = mean_c, max_c
                    else:
                        amt = (-shift) % HW
                        m_sh = pltpu.roll(mean_c, amt, 1)
                        x_sh = pltpu.roll(max_c, amt, 1)
                    m_sh = jnp.where(valid, m_sh, 0.0)
                    x_sh = jnp.where(valid, x_sh, 0.0)
                    acc = (acc + wsa_ref[ki * ks_sa + kj] * m_sh
                               + wsa_ref[n_sa + ki * ks_sa + kj] * x_sh)

            gate_s = jax.nn.sigmoid(acc)                         # (1, HW)
            o_ref[b] = (y * gate_s).astype(o_ref.dtype)

    return kernel


def _vmem_capacity_bytes():
    try:
        return int(pltpu.get_tpu_info().vmem_capacity_bytes)
    except Exception:
        return 64 * 1024 * 1024          # conservative: v7x per-TensorCore VMEM


def _pick_batch_block(B, per_elem_bytes, vmem_budget_bytes, max_bb=8):
    """Largest divisor of B whose per-step VMEM footprint fits; keep >= 2 grid steps when
    B > 1 so both TensorCores on v7x get work (no-op on single-TC v5e/v6e)."""
    best = 1
    for d in range(1, min(B, max_bb) + 1):
        if B % d != 0:
            continue
        if B > 1 and (B // d) < 2:
            continue
        # ~2x double-buffered input + 2x output + in-kernel f32 temporaries.
        if 8 * d * per_elem_bytes > vmem_budget_bytes:
            continue
        best = d
    return best


def icbam_forward(x, w_ca, w_sa):
    """ICBAM forward.  x: (B, C, H, W).  w_ca: (k,) Conv1d(1,1,k,bias=False) taps.
    w_sa: (2, ks, ks) Conv2d(2,1,ks,bias=False) taps."""
    B, C, H, W = x.shape
    HW = H * W
    k_ca = int(w_ca.shape[0])
    ks_sa = int(w_sa.shape[-1])

    vmem_cap = _vmem_capacity_bytes()
    per_elem_bytes = C * HW * 4                    # f32 compute per batch element
    Bb = _pick_batch_block(B, per_elem_bytes, vmem_cap // 2)
    grid = (B // Bb,)
    vmem_limit = min(int(vmem_cap * 0.8), 96 * 1024 * 1024)

    # Free (row-major) reshape: spatial collapses onto the lane axis; H*W that is a multiple
    # of 128 (e.g. 16x16=256, 80x80=6400) gives lane-dense, unmasked output stores.
    x_flat = x.reshape(B, C, HW)
    w_ca_f = w_ca.astype(jnp.float32).reshape(k_ca)
    w_sa_f = w_sa.astype(jnp.float32).reshape(2 * ks_sa * ks_sa)

    kernel = _make_icbam_kernel(Bb, C, H, W, k_ca, ks_sa)

    out_flat = pl.pallas_call(
        kernel,
        out_shape=jax.ShapeDtypeStruct((B, C, HW), x.dtype),
        grid_spec=pltpu.PrefetchScalarGridSpec(
            num_scalar_prefetch=0,
            grid=grid,
            in_specs=[
                pl.BlockSpec(memory_space=pltpu.MemorySpace.SMEM),   # Conv1d taps (k,)
                pl.BlockSpec(memory_space=pltpu.MemorySpace.SMEM),   # Conv2d taps (2*ks*ks,)
                pl.BlockSpec((Bb, C, HW), lambda b: (b, 0, 0)),
            ],
            out_specs=pl.BlockSpec((Bb, C, HW), lambda b: (b, 0, 0)),
        ),
        compiler_params=pltpu.CompilerParams(
            dimension_semantics=("parallel",),
            vmem_limit_bytes=vmem_limit,
        ),
    )(w_ca_f, w_sa_f, x_flat)
    return out_flat.reshape(B, C, H, W)


def _reference(x, w_ca, w_sa):
    """Pure-JAX (f32) reference of the intended ICBAM forward."""
    B, C, H, W = x.shape
    k = w_ca.shape[0]
    pad = (k - 1) // 2

    # ImprovedChannelAttention (shared Conv1d on avg- and max-pooled channel vectors).
    avg = x.mean(axis=(2, 3))                      # (B, C)
    mx = x.max(axis=(2, 3))                        # (B, C)

    def conv1d(v):                                 # zero-padded cross-correlation over C
        vp = jnp.pad(v, ((0, 0), (pad, pad)))
        return sum(w_ca[j] * vp[:, j:j + C] for j in range(k))

    g = jax.nn.sigmoid(conv1d(avg) + conv1d(mx))   # (B, C)
    y = x * g[:, :, None, None]

    # SpatialAttention: Conv2d(2,1,ks) over [channel-mean, channel-max], sigmoid gate.
    ks = w_sa.shape[-1]
    ps = (ks - 1) // 2
    mean_c = y.mean(axis=1)                        # (B, H, W)
    max_c = y.max(axis=1)                          # (B, H, W)
    mp = jnp.pad(mean_c, ((0, 0), (ps, ps), (ps, ps)))
    xp = jnp.pad(max_c, ((0, 0), (ps, ps), (ps, ps)))
    s = jnp.zeros((B, H, W), jnp.float32)
    for ki in range(ks):
        for kj in range(ks):
            s = (s + w_sa[0, ki, kj] * mp[:, ki:ki + H, kj:kj + W]
                   + w_sa[1, ki, kj] * xp[:, ki:ki + H, kj:kj + W])
    return y * jax.nn.sigmoid(s)[:, None, :, :]


if __name__ == "__main__":
    key = jax.random.PRNGKey(0)
    kx, k1, k2 = jax.random.split(key, 3)

    B, C, H, W = 2, 4, 16, 16
    k_ca, ks_sa = 3, 7
    x = jax.random.normal(kx, (B, C, H, W), dtype=jnp.float32)

    # Deterministic Conv1d(1,1,3) and Conv2d(2,1,7) weights (kaiming-uniform-like bounds).
    b1 = 1.0 / (k_ca ** 0.5)
    w_ca = jax.random.uniform(k1, (k_ca,), minval=-b1, maxval=b1, dtype=jnp.float32)
    b2 = 1.0 / ((2 * ks_sa * ks_sa) ** 0.5)
    w_sa = jax.random.uniform(k2, (2, ks_sa, ks_sa), minval=-b2, maxval=b2,
                              dtype=jnp.float32)

    out = jax.block_until_ready(icbam_forward(x, w_ca, w_sa))
    ref = _reference(x, w_ca, w_sa)

    assert out.shape == x.shape and out.dtype == x.dtype
    max_err = float(jnp.max(jnp.abs(out - ref)))
    assert jnp.allclose(out, ref, atol=1e-4, rtol=1e-4), max_err

    print("KERNEL_OK")
</pallas_src>

<mosaic_0001>
module attributes {stable_mosaic.version = 11 : i64} {
  func.func @kernel(%arg0: i32, %arg1: memref<3xf32, #tpu.memory_space<smem>>, %arg2: memref<98xf32, #tpu.memory_space<smem>>, %arg3: memref<1x4x256xf32, #tpu.memory_space<vmem>>, %arg4: memref<1x4x256xf32, #tpu.memory_space<vmem>>) attributes {dimension_semantics = [#tpu.dimension_semantics<parallel>], iteration_bounds = array<i64: 2>, scalar_prefetch = 0 : i64, scratch_operands = 0 : i64, tpu.core_type = #tpu.core_type<tc>, window_params = [{transform_indices = @transform_0, window_bounds = array<i64: 3>}, {transform_indices = @transform_1, window_bounds = array<i64: 98>}, {transform_indices = @transform_2, window_bounds = array<i64: 1, 4, 256>}, {transform_indices = @transform_3, window_bounds = array<i64: 1, 4, 256>}]} {
    %0 = tpu.iota {dimensions = array<i32: 0>} : vector<4x4xi32>
    %1 = tpu.iota {dimensions = array<i32: 1>} : vector<4x4xi32>
    %2 = arith.subi %1, %0 : vector<4x4xi32>
    %c1_i32 = arith.constant 1 : i32
    %3 = vector.broadcast %c1_i32 : i32 to vector<4x4xi32>
    %4 = arith.addi %2, %3 : vector<4x4xi32>
    %cst = arith.constant 0.000000e+00 : f32
    %5 = vector.broadcast %cst : f32 to vector<4x4xf32>
    %c0_i32 = arith.constant 0 : i32
    %6 = vector.broadcast %c0_i32 : i32 to vector<4x4xi32>
    %7 = arith.cmpi eq, %4, %6 : vector<4x4xi32>
    %c0 = arith.constant 0 : index
    %8 = memref.load %arg1[%c0] : memref<3xf32, #tpu.memory_space<smem>>
    %cst_0 = arith.constant 0.000000e+00 : f32
    %9 = vector.broadcast %8 : f32 to vector<4x4xf32>
    %10 = vector.broadcast %cst_0 : f32 to vector<4x4xf32>
    %11 = arith.select %7, %9, %10 : vector<4x4xi1>, vector<4x4xf32>
    %12 = arith.addf %5, %11 : vector<4x4xf32>
    %c1_i32_1 = arith.constant 1 : i32
    %13 = vector.broadcast %c1_i32_1 : i32 to vector<4x4xi32>
    %14 = arith.cmpi eq, %4, %13 : vector<4x4xi32>
    %c1 = arith.constant 1 : index
    %15 = memref.load %arg1[%c1] : memref<3xf32, #tpu.memory_space<smem>>
    %cst_2 = arith.constant 0.000000e+00 : f32
    %16 = vector.broadcast %15 : f32 to vector<4x4xf32>
    %17 = vector.broadcast %cst_2 : f32 to vector<4x4xf32>
    %18 = arith.select %14, %16, %17 : vector<4x4xi1>, vector<4x4xf32>
    %19 = arith.addf %12, %18 : vector<4x4xf32>
    %c2_i32 = arith.constant 2 : i32
    %20 = vector.broadcast %c2_i32 : i32 to vector<4x4xi32>
    %21 = arith.cmpi eq, %4, %20 : vector<4x4xi32>
    %c2 = arith.constant 2 : index
    %22 = memref.load %arg1[%c2] : memref<3xf32, #tpu.memory_space<smem>>
    %cst_3 = arith.constant 0.000000e+00 : f32
    %23 = vector.broadcast %22 : f32 to vector<4x4xf32>
    %24 = vector.broadcast %cst_3 : f32 to vector<4x4xf32>
    %25 = arith.select %21, %23, %24 : vector<4x4xi1>, vector<4x4xf32>
    %26 = arith.addf %19, %25 : vector<4x4xf32>
    %27 = tpu.iota {dimensions = array<i32: 1>} : vector<1x256xi32>
    %28 = arith.sitofp %27 : vector<1x256xi32> to vector<1x256xf32>
    %cst_4 = arith.constant 5.000000e-01 : f32
    %29 = vector.broadcast %cst_4 : f32 to vector<1x256xf32>
    %30 = arith.addf %28, %29 : vector<1x256xf32>
    %cst_5 = arith.constant 6.250000e-02 : f32
    %31 = vector.broadcast %cst_5 : f32 to vector<1x256xf32>
    %32 = arith.mulf %30, %31 : vector<1x256xf32>
    %33 = arith.fptosi %32 : vector<1x256xf32> to vector<1x256xi32>
    %c16_i32 = arith.constant 16 : i32
    %34 = vector.broadcast %c16_i32 : i32 to vector<1x256xi32>
    %35 = arith.muli %33, %34 : vector<1x256xi32>
    %36 = arith.subi %27, %35 : vector<1x256xi32>
    %c0_6 = arith.constant 0 : index
    %c0_7 = arith.constant 0 : index
    %c0_8 = arith.constant 0 : index
    %37 = vector.load %arg3[%c0_6, %c0_7, %c0_8] : memref<1x4x256xf32, #tpu.memory_space<vmem>>, vector<1x4x256xf32>
    %38 = vector.shape_cast %37 : vector<1x4x256xf32> to vector<4x256xf32>
    %cst_9 = arith.constant dense<0.000000e+00> : vector<4xf32>
    %39 = vector.multi_reduction <add>, %38, %cst_9 [1] : vector<4x256xf32> to vector<4xf32>
    %40 = vector.shape_cast %39 : vector<4xf32> to vector<4x1xf32>
    %cst_10 = arith.constant 3.906250e-03 : f32
    %41 = vector.broadcast %cst_10 : f32 to vector<4x1xf32>
    %42 = arith.mulf %40, %41 : vector<4x1xf32>
    %cst_11 = arith.constant dense<0xFF800000> : vector<4xf32>
    %43 = vector.multi_reduction <maximumf>, %38, %cst_11 [1] : vector<4x256xf32> to vector<4xf32>
    %44 = vector.shape_cast %43 : vector<4xf32> to vector<4x1xf32>
    %45 = tpu.concatenate %42, %44 in 1 : vector<4x1xf32>, vector<4x1xf32> -> vector<4x2xf32>
    %cst_12 = arith.constant dense<0.000000e+00> : vector<4x2xf32>
    %46 = tpu.matmul %26, %45, %cst_12 {dimension_numbers = #tpu.dot_dimension_numbers<[1], [0], [0], [1], [0, 0, 1, 1], [], []>} : vector<4x4xf32>, vector<4x2xf32>, vector<4x2xf32> -> vector<4x2xf32>
    %cst_13 = arith.constant dense<0.000000e+00> : vector<4xf32>
    %47 = vector.multi_reduction <add>, %46, %cst_13 [1] : vector<4x2xf32> to vector<4xf32>
    %48 = vector.shape_cast %47 : vector<4xf32> to vector<4x1xf32>
    %49 = arith.negf %48 : vector<4x1xf32>
    %50 = math.exp %49 : vector<4x1xf32>
    %cst_14 = arith.constant 1.000000e+00 : f32
    %51 = vector.broadcast %cst_14 : f32 to vector<4x1xf32>
    %52 = arith.addf %51, %50 : vector<4x1xf32>
    %53 = arith.divf %51, %52 : vector<4x1xf32>
    %54 = vector.broadcast %53 : vector<4x1xf32> to vector<4x256xf32>
    %55 = arith.mulf %38, %54 : vector<4x256xf32>
    %cst_15 = arith.constant dense<0.000000e+00> : vector<256xf32>
    %56 = vector.multi_reduction <add>, %55, %cst_15 [0] : vector<4x256xf32> to vector<256xf32>
    %57 = vector.shape_cast %56 : vector<256xf32> to vector<1x256xf32>
    %cst_16 = arith.constant 2.500000e-01 : f32
    %58 = vector.broadcast %cst_16 : f32 to vector<1x256xf32>
    %59 = arith.mulf %57, %58 : vector<1x256xf32>
    %cst_17 = arith.constant dense<0xFF800000> : vector<256xf32>
    %60 = vector.multi_reduction <maximumf>, %55, %cst_17 [0] : vector<4x256xf32> to vector<256xf32>
    %61 = vector.shape_cast %60 : vector<256xf32> to vector<1x256xf32>
    %cst_18 = arith.constant 0.000000e+00 : f32
    %62 = vector.broadcast %cst_18 : f32 to vector<1x256xf32>
    %c-3_i32 = arith.constant -3 : i32
    %63 = vector.broadcast %c-3_i32 : i32 to vector<1x256xi32>
    %64 = arith.addi %33, %63 : vector<1x256xi32>
    %c0_i32_19 = arith.constant 0 : i32
    %65 = vector.broadcast %c0_i32_19 : i32 to vector<1x256xi32>
    %66 = arith.cmpi sge, %64, %65 : vector<1x256xi32>
    %c-3_i32_20 = arith.constant -3 : i32
    %67 = vector.broadcast %c-3_i32_20 : i32 to vector<1x256xi32>
    %68 = arith.addi %33, %67 : vector<1x256xi32>
    %c16_i32_21 = arith.constant 16 : i32
    %69 = vector.broadcast %c16_i32_21 : i32 to vector<1x256xi32>
    %70 = arith.cmpi slt, %68, %69 : vector<1x256xi32>
    %71 = arith.andi %66, %70 : vector<1x256xi1>
    %c-3_i32_22 = arith.constant -3 : i32
    %72 = vector.broadcast %c-3_i32_22 : i32 to vector<1x256xi32>
    %73 = arith.addi %36, %72 : vector<1x256xi32>
    %c0_i32_23 = arith.constant 0 : i32
    %74 = vector.broadcast %c0_i32_23 : i32 to vector<1x256xi32>
    %75 = arith.cmpi sge, %73, %74 : vector<1x256xi32>
    %76 = arith.andi %71, %75 : vector<1x256xi1>
    %c-3_i32_24 = arith.constant -3 : i32
    %77 = vector.broadcast %c-3_i32_24 : i32 to vector<1x256xi32>
    %78 = arith.addi %36, %77 : vector<1x256xi32>
    %c16_i32_25 = arith.constant 16 : i32
    %79 = vector.broadcast %c16_i32_25 : i32 to vector<1x256xi32>
    %80 = arith.cmpi slt, %78, %79 : vector<1x256xi32>
    %81 = arith.andi %76, %80 : vector<1x256xi1>
    %c51_i32 = arith.constant 51 : i32
    %82 = tpu.dynamic_rotate %59 by %c51_i32 dim 1 : vector<1x256xf32>, i32 -> vector<1x256xf32>
    %c51_i32_26 = arith.constant 51 : i32
    %83 = tpu.dynamic_rotate %61 by %c51_i32_26 dim 1 : vector<1x256xf32>, i32 -> vector<1x256xf32>
    %cst_27 = arith.constant 0.000000e+00 : f32
    %84 = vector.broadcast %cst_27 : f32 to vector<1x256xf32>
    %85 = arith.select %81, %82, %84 : vector<1x256xi1>, vector<1x256xf32>
    %cst_28 = arith.constant 0.000000e+00 : f32
    %86 = vector.broadcast %cst_28 : f32 to vector<1x256xf32>
    %87 = arith.select %81, %83, %86 : vector<1x256xi1>, vector<1x256xf32>
    %c0_29 = arith.constant 0 : index
    %88 = memref.load %arg2[%c0_29] : memref<98xf32, #tpu.memory_space<smem>>
    %89 = vector.broadcast %88 : f32 to vector<1x256xf32>
    %90 = arith.mulf %89, %85 : vector<1x256xf32>
    %91 = arith.addf %62, %90 : vector<1x256xf32>
    %c49 = arith.constant 49 : index
    %92 = memref.load %arg2[%c49] : memref<98xf32, #tpu.memory_space<smem>>
    %93 = vector.broadcast %92 : f32 to vector<1x256xf32>
    %94 = arith.mulf %93, %87 : vector<1x256xf32>
    %95 = arith.addf %91, %94 : vector<1x256xf32>
    %c-3_i32_30 = arith.constant -3 : i32
    %96 = vector.broadcast %c-3_i32_30 : i32 to vector<1x256xi32>
    %97 = arith.addi %33, %96 : vector<1x256xi32>
    %c0_i32_31 = arith.constant 0 : i32
    %98 = vector.broadcast %c0_i32_31 : i32 to vector<1x256xi32>
    %99 = arith.cmpi sge, %97, %98 : vector<1x256xi32>
    %c-3_i32_32 = arith.constant -3 : i32
    %100 = vector.broadcast %c-3_i32_32 : i32 to vector<1x256xi32>
    %101 = arith.addi %33, %100 : vector<1x256xi32>
    %c16_i32_33 = arith.constant 16 : i32
    %102 = vector.broadcast %c16_i32_33 : i32 to vector<1x256xi32>
    %103 = arith.cmpi slt, %101, %102 : vector<1x256xi32>
    %104 = arith.andi %99, %103 : vector<1x256xi1>
    %c-2_i32 = arith.constant -2 : i32
    %105 = vector.broadcast %c-2_i32 : i32 to vector<1x256xi32>
    %106 = arith.addi %36, %105 : vector<1x256xi32>
    %c0_i32_34 = arith.constant 0 : i32
    %107 = vector.broadcast %c0_i32_34 : i32 to vector<1x256xi32>
    %108 = arith.cmpi sge, %106, %107 : vector<1x256xi32>
    %109 = arith.andi %104, %108 : vector<1x256xi1>
    %c-2_i32_35 = arith.constant -2 : i32
    %110 = vector.broadcast %c-2_i32_35 : i32 to vector<1x256xi32>
    %111 = arith.addi %36, %110 : vector<1x256xi32>
    %c16_i32_36 = arith.constant 16 : i32
    %112 = vector.broadcast %c16_i32_36 : i32 to vector<1x256xi32>
    %113 = arith.cmpi slt, %111, %112 : vector<1x256xi32>
    %114 = arith.andi %109, %113 : vector<1x256xi1>
    %c50_i32 = arith.constant 50 : i32
    %115 = tpu.dynamic_rotate %59 by %c50_i32 dim 1 : vector<1x256xf32>, i32 -> vector<1x256xf32>
    %c50_i32_37 = arith.constant 50 : i32
    %116 = tpu.dynamic_rotate %61 by %c50_i32_37 dim 1 : vector<1x256xf32>, i32 -> vector<1x256xf32>
    %cst_38 = arith.constant 0.000000e+00 : f32
    %117 = vector.broadcast %cst_38 : f32 to vector<1x256xf32>
    %118 = arith.select %114, %115, %117 : vector<1x256xi1>, vector<1x256xf32>
    %cst_39 = arith.constant 0.000000e+00 : f32
    %119 = vector.broadcast %cst_39 : f32 to vector<1x256xf32>
    %120 = arith.select %114, %116, %119 : vector<1x256xi1>, vector<1x256xf32>
    %c1_40 = arith.constant 1 : index
    %121 = memref.load %arg2[%c1_40] : memref<98xf32, #tpu.memory_space<smem>>
    %122 = vector.broadcast %121 : f32 to vector<1x256xf32>
    %123 = arith.mulf %122, %118 : vector<1x256xf32>
    %124 = arith.addf %95, %123 : vector<1x256xf32>
    %c50 = arith.constant 50 : index
    %125 = memref.load %arg2[%c50] : memref<98xf32, #tpu.memory_space<smem>>
    %126 = vector.broadcast %125 : f32 to vector<1x256xf32>
    %127 = arith.mulf %126, %120 : vector<1x256xf32>
    %128 = arith.addf %124, %127 : vector<1x256xf32>
    %c-3_i32_41 = arith.constant -3 : i32
    %129 = vector.broadcast %c-3_i32_41 : i32 to vector<1x256xi32>
    %130 = arith.addi %33, %129 : vector<1x256xi32>
    %c0_i32_42 = arith.constant 0 : i32
    %131 = vector.broadcast %c0_i32_42 : i32 to vector<1x256xi32>
    %132 = arith.cmpi sge, %130, %131 : vector<1x256xi32>
    %c-3_i32_43 = arith.constant -3 : i32
    %133 = vector.broadcast %c-3_i32_43 : i32 to vector<1x256xi32>
    %134 = arith.addi %33, %133 : vector<1x256xi32>
    %c16_i32_44 = arith.constant 16 : i32
    %135 = vector.broadcast %c16_i32_44 : i32 to vector<1x256xi32>
    %136 = arith.cmpi slt, %134, %135 : vector<1x256xi32>
    %137 = arith.andi %132, %136 : vector<1x256xi1>
    %c-1_i32 = arith.constant -1 : i32
    %138 = vector.broadcast %c-1_i32 : i32 to vector<1x256xi32>
    %139 = arith.addi %36, %138 : vector<1x256xi32>
    %c0_i32_45 = arith.constant 0 : i32
    %140 = vector.broadcast %c0_i32_45 : i32 to vector<1x256xi32>
    %141 = arith.cmpi sge, %139, %140 : vector<1x256xi32>
    %142 = arith.andi %137, %141 : vector<1x256xi1>
    %c-1_i32_46 = arith.constant -1 : i32
    %143 = vector.broadcast %c-1_i32_46 : i32 to vector<1x256xi32>
    %144 = arith.addi %36, %143 : vector<1x256xi32>
    %c16_i32_47 = arith.constant 16 : i32
    %145 = vector.broadcast %c16_i32_47 : i32 to vector<1x256xi32>
    %146 = arith.cmpi slt, %144, %145 : vector<1x256xi32>
    %147 = arith.andi %142, %146 : vector<1x256xi1>
    %c49_i32 = arith.constant 49 : i32
    %148 = tpu.dynamic_rotate %59 by %c49_i32 dim 1 : vector<1x256xf32>, i32 -> vector<1x256xf32>
    %c49_i32_48 = arith.constant 49 : i32
    %149 = tpu.dynamic_rotate %61 by %c49_i32_48 dim 1 : vector<1x256xf32>, i32 -> vector<1x256xf32>
    %cst_49 = arith.constant 0.000000e+00 : f32
    %150 = vector.broadcast %cst_49 : f32 to vector<1x256xf32>
    %151 = arith.select %147, %148, %150 : vector<1x256xi1>, vector<1x256xf32>
    %cst_50 = arith.constant 0.000000e+00 : f32
    %152 = vector.broadcast %cst_50 : f32 to vector<1x256xf32>
    %153 = arith.select %147, %149, %152 : vector<1x256xi1>, vector<1x256xf32>
    %c2_51 = arith.constant 2 : index
    %154 = memref.load %arg2[%c2_51] : memref<98xf32, #tpu.memory_space<smem>>
    %155 = vector.broadcast %154 : f32 to vector<1x256xf32>
    %156 = arith.mulf %155, %151 : vector<1x256xf32>
    %157 = arith.addf %128, %156 : vector<1x256xf32>
    %c51 = arith.constant 51 : index
    %158 = memref.load %arg2[%c51] : memref<98xf32, #tpu.memory_space<smem>>
    %159 = vector.broadcast %158 : f32 to vector<1x256xf32>
    %160 = arith.mulf %159, %153 : vector<1x256xf32>
    %161 = arith.addf %157, %160 : vector<1x256xf32>
    %c-3_i32_52 = arith.constant -3 : i32
    %162 = vector.broadcast %c-3_i32_52 : i32 to vector<1x256xi32>
    %163 = arith.addi %33, %162 : vector<1x256xi32>
    %c0_i32_53 = arith.constant 0 : i32
    %164 = vector.broadcast %c0_i32_53 : i32 to vector<1x256xi32>
    %165 = arith.cmpi sge, %163, %164 : vector<1x256xi32>
    %c-3_i32_54 = arith.constant -3 : i32
    %166 = vector.broadcast %c-3_i32_54 : i32 to vector<1x256xi32>
    %167 = arith.addi %33, %166 : vector<1x256xi32>
    %c16_i32_55 = arith.constant 16 : i32
    %168 = vector.broadcast %c16_i32_55 : i32 to vector<1x256xi32>
    %169 = arith.cmpi slt, %167, %168 : vector<1x256xi32>
    %170 = arith.andi %165, %169 : vector<1x256xi1>
    %c0_i32_56 = arith.constant 0 : i32
    %171 = vector.broadcast %c0_i32_56 : i32 to vector<1x256xi32>
    %172 = arith.addi %36, %171 : vector<1x256xi32>
    %c0_i32_57 = arith.constant 0 : i32
    %173 = vector.broadcast %c0_i32_57 : i32 to vector<1x256xi32>
    %174 = arith.cmpi sge, %172, %173 : vector<1x256xi32>
    %175 = arith.andi %170, %174 : vector<1x256xi1>
    %c0_i32_58 = arith.constant 0 : i32
    %176 = vector.broadcast %c0_i32_58 : i32 to vector<1x256xi32>
    %177 = arith.addi %36, %176 : vector<1x256xi32>
    %c16_i32_59 = arith.constant 16 : i32
    %178 = vector.broadcast %c16_i32_59 : i32 to vector<1x256xi32>
    %179 = arith.cmpi slt, %177, %178 : vector<1x256xi32>
    %180 = arith.andi %175, %179 : vector<1x256xi1>
    %c48_i32 = arith.constant 48 : i32
    %181 = tpu.dynamic_rotate %59 by %c48_i32 dim 1 : vector<1x256xf32>, i32 -> vector<1x256xf32>
    %c48_i32_60 = arith.constant 48 : i32
    %182 = tpu.dynamic_rotate %61 by %c48_i32_60 dim 1 : vector<1x256xf32>, i32 -> vector<1x256xf32>
    %cst_61 = arith.constant 0.000000e+00 : f32
    %183 = vector.broadcast %cst_61 : f32 to vector<1x256xf32>
    %184 = arith.select %180, %181, %183 : vector<1x256xi1>, vector<1x256xf32>
    %cst_62 = arith.constant 0.000000e+00 : f32
    %185 = vector.broadcast %cst_62 : f32 to vector<1x256xf32>
    %186 = arith.select %180, %182, %185 : vector<1x256xi1>, vector<1x256xf32>
    %c3 = arith.constant 3 : index
    %187 = memref.load %arg2[%c3] : memref<98xf32, #tpu.memory_space<smem>>
    %188 = vector.broadcast %187 : f32 to vector<1x256xf32>
    %189 = arith.mulf %188, %184 : vector<1x256xf32>
    %190 = arith.addf %161, %189 : vector<1x256xf32>
    %c52 = arith.constant 52 : index
    %191 = memref.load %arg2[%c52] : memref<98xf32, #tpu.memory_space<smem>>
    %192 = vector.broadcast %191 : f32 to vector<1x256xf32>
    %193 = arith.mulf %192, %186 : vector<1x256xf32>
    %194 = arith.addf %190, %193 : vector<1x256xf32>
    %c-3_i32_63 = arith.constant -3 : i32
    %195 = vector.broadcast %c-3_i32_63 : i32 to vector<1x256xi32>
    %196 = arith.addi %33, %195 : vector<1x256xi32>
    %c0_i32_64 = arith.constant 0 : i32
    %197 = vector.broadcast %c0_i32_64 : i32 to vector<1x256xi32>
    %198 = arith.cmpi sge, %196, %197 : vector<1x256xi32>
    %c-3_i32_65 = arith.constant -3 : i32
    %199 = vector.broadcast %c-3_i32_65 : i32 to vector<1x256xi32>
    %200 = arith.addi %33, %199 : vector<1x256xi32>
    %c16_i32_66 = arith.constant 16 : i32
    %201 = vector.broadcast %c16_i32_66 : i32 to vector<1x256xi32>
    %202 = arith.cmpi slt, %200, %201 : vector<1x256xi32>
    %203 = arith.andi %198, %202 : vector<1x256xi1>
    %c1_i32_67 = arith.constant 1 : i32
    %204 = vector.broadcast %c1_i32_67 : i32 to vector<1x256xi32>
    %205 = arith.addi %36, %204 : vector<1x256xi32>
    %c0_i32_68 = arith.constant 0 : i32
    %206 = vector.broadcast %c0_i32_68 : i32 to vector<1x256xi32>
    %207 = arith.cmpi sge, %205, %206 : vector<1x256xi32>
    %208 = arith.andi %203, %207 : vector<1x256xi1>
    %c1_i32_69 = arith.constant 1 : i32
    %209 = vector.broadcast %c1_i32_69 : i32 to vector<1x256xi32>
    %210 = arith.addi %36, %209 : vector<1x256xi32>
    %c16_i32_70 = arith.constant 16 : i32
    %211 = vector.broadcast %c16_i32_70 : i32 to vector<1x256xi32>
    %212 = arith.cmpi slt, %210, %211 : vector<1x256xi32>
    %213 = arith.andi %208, %212 : vector<1x256xi1>
    %c47_i32 = arith.constant 47 : i32
    %214 = tpu.dynamic_rotate %59 by %c47_i32 dim 1 : vector<1x256xf32>, i32 -> vector<1x256xf32>
    %c47_i32_71 = arith.constant 47 : i32
    %215 = tpu.dynamic_rotate %61 by %c47_i32_71 dim 1 : vector<1x256xf32>, i32 -> vector<1x256xf32>
    %cst_72 = arith.constant 0.000000e+00 : f32
    %216 = vector.broadcast %cst_72 : f32 to vector<1x256xf32>
    %217 = arith.select %213, %214, %216 : vector<1x256xi1>, vector<1x256xf32>
    %cst_73 = arith.constant 0.000000e+00 : f32
    %218 = vector.broadcast %cst_73 : f32 to vector<1x256xf32>
    %219 = arith.select %213, %215, %218 : vector<1x256xi1>, vector<1x256xf32>
    %c4 = arith.constant 4 : index
    %220 = memref.load %arg2[%c4] : memref<98xf32, #tpu.memory_space<smem>>
    %221 = vector.broadcast %220 : f32 to vector<1x256xf32>
    %222 = arith.mulf %221, %217 : vector<1x256xf32>
    %223 = arith.addf %194, %222 : vector<1x256xf32>
    %c53 = arith.constant 53 : index
    %224 = memref.load %arg2[%c53] : memref<98xf32, #tpu.memory_space<smem>>
    %225 = vector.broadcast %224 : f32 to vector<1x256xf32>
    %226 = arith.mulf %225, %219 : vector<1x256xf32>
    %227 = arith.addf %223, %226 : vector<1x256xf32>
    %c-3_i32_74 = arith.constant -3 : i32
    %228 = vector.broadcast %c-3_i32_74 : i32 to vector<1x256xi32>
    %229 = arith.addi %33, %228 : vector<1x256xi32>
    %c0_i32_75 = arith.constant 0 : i32
    %230 = vector.broadcast %c0_i32_75 : i32 to vector<1x256xi32>
    %231 = arith.cmpi sge, %229, %230 : vector<1x256xi32>
    %c-3_i32_76 = arith.constant -3 : i32
    %232 = vector.broadcast %c-3_i32_76 : i32 to vector<1x256xi32>
    %233 = arith.addi %33, %232 : vector<1x256xi32>
    %c16_i32_77 = arith.constant 16 : i32
    %234 = vector.broadcast %c16_i32_77 : i32 to vector<1x256xi32>
    %235 = arith.cmpi slt, %233, %234 : vector<1x256xi32>
    %236 = arith.andi %231, %235 : vector<1x256xi1>
    %c2_i32_78 = arith.constant 2 : i32
    %237 = vector.broadcast %c2_i32_78 : i32 to vector<1x256xi32>
    %238 = arith.addi %36, %237 : vector<1x256xi32>
    %c0_i32_79 = arith.constant 0 : i32
    %239 = vector.broadcast %c0_i32_79 : i32 to vector<1x256xi32>
    %240 = arith.cmpi sge, %238, %239 : vector<1x256xi32>
    %241 = arith.andi %236, %240 : vector<1x256xi1>
    %c2_i32_80 = arith.constant 2 : i32
    %242 = vector.broadcast %c2_i32_80 : i32 to vector<1x256xi32>
    %243 = arith.addi %36, %242 : vector<1x256xi32>
    %c16_i32_81 = arith.constant 16 : i32
    %244 = vector.broadcast %c16_i32_81 : i32 to vector<1x256xi32>
    %245 = arith.cmpi slt, %243, %244 : vector<1x256xi32>
    %246 = arith.andi %241, %245 : vector<1x256xi1>
    %c46_i32 = arith.constant 46 : i32
    %247 = tpu.dynamic_rotate %59 by %c46_i32 dim 1 : vector<1x256xf32>, i32 -> vector<1x256xf32>
    %c46_i32_82 = arith.constant 46 : i32
    %248 = tpu.dynamic_rotate %61 by %c46_i32_82 dim 1 : vector<1x256xf32>, i32 -> vector<1x256xf32>
    %cst_83 = arith.constant 0.000000e+00 : f32
    %249 = vector.broadcast %cst_83 : f32 to vector<1x256xf32>
    %250 = arith.select %246, %247, %249 : vector<1x256xi1>, vector<1x256xf32>
    %cst_84 = arith.constant 0.000000e+00 : f32
    %251 = vector.broadcast %cst_84 : f32 to vector<1x256xf32>
    %252 = arith.select %246, %248, %251 : vector<1x256xi1>, vector<1x256xf32>
    %c5 = arith.constant 5 : index
    %253 = memref.load %arg2[%c5] : memref<98xf32, #tpu.memory_space<smem>>
    %254 = vector.broadcast %253 : f32 to vector<1x256xf32>
    %255 = arith.mulf %254, %250 : vector<1x256xf32>
    %256 = arith.addf %227, %255 : vector<1x256xf32>
    %c54 = arith.constant 54 : index
    %257 = memref.load %arg2[%c54] : memref<98xf32, #tpu.memory_space<smem>>
    %258 = vector.broadcast %257 : f32 to vector<1x256xf32>
    %259 = arith.mulf %258, %252 : vector<1x256xf32>
    %260 = arith.addf %256, %259 : vector<1x256xf32>
    %c-3_i32_85 = arith.constant -3 : i32
    %261 = vector.broadcast %c-3_i32_85 : i32 to vector<1x256xi32>
    %262 = arith.addi %33, %261 : vector<1x256xi32>
    %c0_i32_86 = arith.constant 0 : i32
    %263 = vector.broadcast %c0_i32_86 : i32 to vector<1x256xi32>
    %264 = arith.cmpi sge, %262, %263 : vector<1x256xi32>
    %c-3_i32_87 = arith.constant -3 : i32
    %265 = vector.broadcast %c-3_i32_87 : i32 to vector<1x256xi32>
    %266 = arith.addi %33, %265 : vector<1x256xi32>
    %c16_i32_88 = arith.constant 16 : i32
    %267 = vector.broadcast %c16_i32_88 : i32 to vector<1x256xi32>
    %268 = arith.cmpi slt, %266, %267 : vector<1x256xi32>
    %269 = arith.andi %264, %268 : vector<1x256xi1>
    %c3_i32 = arith.constant 3 : i32
    %270 = vector.broadcast %c3_i32 : i32 to vector<1x256xi32>
    %271 = arith.addi %36, %270 : vector<1x256xi32>
    %c0_i32_89 = arith.constant 0 : i32
    %272 = vector.broadcast %c0_i32_89 : i32 to vector<1x256xi32>
    %273 = arith.cmpi sge, %271, %272 : vector<1x256xi32>
    %274 = arith.andi %269, %273 : vector<1x256xi1>
    %c3_i32_90 = arith.constant 3 : i32
    %275 = vector.broadcast %c3_i32_90 : i32 to vector<1x256xi32>
    %276 = arith.addi %36, %275 : vector<1x256xi32>
    %c16_i32_91 = arith.constant 16 : i32
    %277 = vector.broadcast %c16_i32_91 : i32 to vector<1x256xi32>
    %278 = arith.cmpi slt, %276, %277 : vector<1x256xi32>
    %279 = arith.andi %274, %278 : vector<1x256xi1>
    %c45_i32 = arith.constant 45 : i32
    %280 = tpu.dynamic_rotate %59 by %c45_i32 dim 1 : vector<1x256xf32>, i32 -> vector<1x256xf32>
    %c45_i32_92 = arith.constant 45 : i32
    %281 = tpu.dynamic_rotate %61 by %c45_i32_92 dim 1 : vector<1x256xf32>, i32 -> vector<1x256xf32>
    %cst_93 = arith.constant 0.000000e+00 : f32
    %282 = vector.broadcast %cst_93 : f32 to vector<1x256xf32>
    %283 = arith.select %279, %280, %282 : vector<1x256xi1>, vector<1x256xf32>
    %cst_94 = arith.constant 0.000000e+00 : f32
    %284 = vector.broadcast %cst_94 : f32 to vector<1x256xf32>
    %285 = arith.select %279, %281, %284 : vector<1x256xi1>, vector<1x256xf32>
    %c6 = arith.constant 6 : index
    %286 = memref.load %arg2[%c6] : memref<98xf32, #tpu.memory_space<smem>>
    %287 = vector.broadcast %286 : f32 to vector<1x256xf32>
    %288 = arith.mulf %287, %283 : vector<1x256xf32>
    %289 = arith.addf %260, %288 : vector<1x256xf32>
    %c55 = arith.constant 55 : index
    %290 = memref.load %arg2[%c55] : memref<98xf32, #tpu.memory_space<smem>>
    %291 = vector.broadcast %290 : f32 to vector<1x256xf32>
    %292 = arith.mulf %291, %285 : vector<1x256xf32>
    %293 = arith.addf %289, %292 : vector<1x256xf32>
    %c-2_i32_95 = arith.constant -2 : i32
    %294 = vector.broadcast %c-2_i32_95 : i32 to vector<1x256xi32>
    %295 = arith.addi %33, %294 : vector<1x256xi32>
    %c0_i32_96 = arith.constant 0 : i32
    %296 = vector.broadcast %c0_i32_96 : i32 to vector<1x256xi32>
    %297 = arith.cmpi sge, %295, %296 : vector<1x256xi32>
    %c-2_i32_97 = arith.constant -2 : i32
    %298 = vector.broadcast %c-2_i32_97 : i32 to vector<1x256xi32>
    %299 = arith.addi %33, %298 : vector<1x256xi32>
    %c16_i32_98 = arith.constant 16 : i32
    %300 = vector.broadcast %c16_i32_98 : i32 to vector<1x256xi32>
    %301 = arith.cmpi slt, %299, %300 : vector<1x256xi32>
    %302 = arith.andi %297, %301 : vector<1x256xi1>
    %c-3_i32_99 = arith.constant -3 : i32
    %303 = vector.broadcast %c-3_i32_99 : i32 to vector<1x256xi32>
    %304 = arith.addi %36, %303 : vector<1x256xi32>
    %c0_i32_100 = arith.constant 0 : i32
    %305 = vector.broadcast %c0_i32_100 : i32 to vector<1x256xi32>
    %306 = arith.cmpi sge, %304, %305 : vector<1x256xi32>
    %307 = arith.andi %302, %306 : vector<1x256xi1>
    %c-3_i32_101 = arith.constant -3 : i32
    %308 = vector.broadcast %c-3_i32_101 : i32 to vector<1x256xi32>
    %309 = arith.addi %36, %308 : vector<1x256xi32>
    %c16_i32_102 = arith.constant 16 : i32
    %310 = vector.broadcast %c16_i32_102 : i32 to vector<1x256xi32>
    %311 = arith.cmpi slt, %309, %310 : vector<1x256xi32>
    %312 = arith.andi %307, %311 : vector<1x256xi1>
    %c35_i32 = arith.constant 35 : i32
    %313 = tpu.dynamic_rotate %59 by %c35_i32 dim 1 : vector<1x256xf32>, i32 -> vector<1x256xf32>
    %c35_i32_103 = arith.constant 35 : i32
    %314 = tpu.dynamic_rotate %61 by %c35_i32_103 dim 1 : vector<1x256xf32>, i32 -> vector<1x256xf32>
    %cst_104 = arith.constant 0.000000e+00 : f32
    %315 = vector.broadcast %cst_104 : f32 to vector<1x256xf32>
    %316 = arith.select %312, %313, %315 : vector<1x256xi1>, vector<1x256xf32>
    %cst_105 = arith.constant 0.000000e+00 : f32
    %317 = vector.broadcast %cst_105 : f32 to vector<1x256xf32>
    %318 = arith.select %312, %314, %317 : vector<1x256xi1>, vector<1x256xf32>
    %c7 = arith.constant 7 : index
    %319 = memref.load %arg2[%c7] : memref<98xf32, #tpu.memory_space<smem>>
    %320 = vector.broadcast %319 : f32 to vector<1x256xf32>
    %321 = arith.mulf %320, %316 : vector<1x256xf32>
    %322 = arith.addf %293, %321 : vector<1x256xf32>
    %c56 = arith.constant 56 : index
    %323 = memref.load %arg2[%c56] : memref<98xf32, #tpu.memory_space<smem>>
    %324 = vector.broadcast %323 : f32 to vector<1x256xf32>
    %325 = arith.mulf %324, %318 : vector<1x256xf32>
    %326 = arith.addf %322, %325 : vector<1x256xf32>
    %c-2_i32_106 = arith.constant -2 : i32
    %327 = vector.broadcast %c-2_i32_106 : i32 to vector<1x256xi32>
    %328 = arith.addi %33, %327 : vector<1x256xi32>
    %c0_i32_107 = arith.constant 0 : i32
    %329 = vector.broadcast %c0_i32_107 : i32 to vector<1x256xi32>
    %330 = arith.cmpi sge, %328, %329 : vector<1x256xi32>
    %c-2_i32_108 = arith.constant -2 : i32
    %331 = vector.broadcast %c-2_i32_108 : i32 to vector<1x256xi32>
    %332 = arith.addi %33, %331 : vector<1x256xi32>
    %c16_i32_109 = arith.constant 16 : i32
    %333 = vector.broadcast %c16_i32_109 : i32 to vector<1x256xi32>
    %334 = arith.cmpi slt, %332, %333 : vector<1x256xi32>
    %335 = arith.andi %330, %334 : vector<1x256xi1>
    %c-2_i32_110 = arith.constant -2 : i32
    %336 = vector.broadcast %c-2_i32_110 : i32 to vector<1x256xi32>
    %337 = arith.addi %36, %336 : vector<1x256xi32>
    %c0_i32_111 = arith.constant 0 : i32
    %338 = vector.broadcast %c0_i32_111 : i32 to vector<1x256xi32>
    %339 = arith.cmpi sge, %337, %338 : vector<1x256xi32>
    %340 = arith.andi %335, %339 : vector<1x256xi1>
    %c-2_i32_112 = arith.constant -2 : i32
    %341 = vector.broadcast %c-2_i32_112 : i32 to vector<1x256xi32>
    %342 = arith.addi %36, %341 : vector<1x256xi32>
    %c16_i32_113 = arith.constant 16 : i32
    %343 = vector.broadcast %c16_i32_113 : i32 to vector<1x256xi32>
    %344 = arith.cmpi slt, %342, %343 : vector<1x256xi32>
    %345 = arith.andi %340, %344 : vector<1x256xi1>
    %c34_i32 = arith.constant 34 : i32
    %346 = tpu.dynamic_rotate %59 by %c34_i32 dim 1 : vector<1x256xf32>, i32 -> vector<1x256xf32>
    %c34_i32_114 = arith.constant 34 : i32
    %347 = tpu.dynamic_rotate %61 by %c34_i32_114 dim 1 : vector<1x256xf32>, i32 -> vector<1x256xf32>
    %cst_115 = arith.constant 0.000000e+00 : f32
    %348 = vector.broadcast %cst_115 : f32 to vector<1x256xf32>
    %349 = arith.select %345, %346, %348 : vector<1x256xi1>, vector<1x256xf32>
    %cst_116 = arith.constant 0.000000e+00 : f32
    %350 = vector.broadcast %cst_116 : f32 to vector<1x256xf32>
    %351 = arith.select %345, %347, %350 : vector<1x256xi1>, vector<1x256xf32>
    %c8 = arith.constant 8 : index
    %352 = memref.load %arg2[%c8] : memref<98xf32, #tpu.memory_space<smem>>
    %353 = vector.broadcast %352 : f32 to vector<1x256xf32>
    %354 = arith.mulf %353, %349 : vector<1x256xf32>
    %355 = arith.addf %326, %354 : vector<1x256xf32>
    %c57 = arith.constant 57 : index
    %356 = memref.load %arg2[%c57] : memref<98xf32, #tpu.memory_space<smem>>
    %357 = vector.broadcast %356 : f32 to vector<1x256xf32>
    %358 = arith.mulf %357, %351 : vector<1x256xf32>
    %359 = arith.addf %355, %358 : vector<1x256xf32>
    %c-2_i32_117 = arith.constant -2 : i32
    %360 = vector.broadcast %c-2_i32_117 : i32 to vector<1x256xi32>
    %361 = arith.addi %33, %360 : vector<1x256xi32>
    %c0_i32_118 = arith.constant 0 : i32
    %362 = vector.broadcast %c0_i32_118 : i32 to vector<1x256xi32>
    %363 = arith.cmpi sge, %361, %362 : vector<1x256xi32>
    %c-2_i32_119 = arith.constant -2 : i32
    %364 = vector.broadcast %c-2_i32_119 : i32 to vector<1x256xi32>
    %365 = arith.addi %33, %364 : vector<1x256xi32>
    %c16_i32_120 = arith.constant 16 : i32
    %366 = vector.broadcast %c16_i32_120 : i32 to vector<1x256xi32>
    %367 = arith.cmpi slt, %365, %366 : vector<1x256xi32>
    %368 = arith.andi %363, %367 : vector<1x256xi1>
    %c-1_i32_121 = arith.constant -1 : i32
    %369 = vector.broadcast %c-1_i32_121 : i32 to vector<1x256xi32>
    %370 = arith.addi %36, %369 : vector<1x256xi32>
    %c0_i32_122 = arith.constant 0 : i32
    %371 = vector.broadcast %c0_i32_122 : i32 to vector<1x256xi32>
    %372 = arith.cmpi sge, %370, %371 : vector<1x256xi32>
    %373 = arith.andi %368, %372 : vector<1x256xi1>
    %c-1_i32_123 = arith.constant -1 : i32
    %374 = vector.broadcast %c-1_i32_123 : i32 to vector<1x256xi32>
    %375 = arith.addi %36, %374 : vector<1x256xi32>
    %c16_i32_124 = arith.constant 16 : i32
    %376 = vector.broadcast %c16_i32_124 : i32 to vector<1x256xi32>
    %377 = arith.cmpi slt, %375, %376 : vector<1x256xi32>
    %378 = arith.andi %373, %377 : vector<1x256xi1>
    %c33_i32 = arith.constant 33 : i32
    %379 = tpu.dynamic_rotate %59 by %c33_i32 dim 1 : vector<1x256xf32>, i32 -> vector<1x256xf32>
    %c33_i32_125 = arith.constant 33 : i32
    %380 = tpu.dynamic_rotate %61 by %c33_i32_125 dim 1 : vector<1x256xf32>, i32 -> vector<1x256xf32>
    %cst_126 = arith.constant 0.000000e+00 : f32
    %381 = vector.broadcast %cst_126 : f32 to vector<1x256xf32>
    %382 = arith.select %378, %379, %381 : vector<1x256xi1>, vector<1x256xf32>
    %cst_127 = arith.constant 0.000000e+00 : f32
    %383 = vector.broadcast %cst_127 : f32 to vector<1x256xf32>
    %384 = arith.select %378, %380, %383 : vector<1x256xi1>, vector<1x256xf32>
    %c9 = arith.constant 9 : index
    %385 = memref.load %arg2[%c9] : memref<98xf32, #tpu.memory_space<smem>>
    %386 = vector.broadcast %385 : f32 to vector<1x256xf32>
    %387 = arith.mulf %386, %382 : vector<1x256xf32>
    %388 = arith.addf %359, %387 : vector<1x256xf32>
    %c58 = arith.constant 58 : index
    %389 = memref.load %arg2[%c58] : memref<98xf32, #tpu.memory_space<smem>>
    %390 = vector.broadcast %389 : f32 to vector<1x256xf32>
    %391 = arith.mulf %390, %384 : vector<1x256xf32>
    %392 = arith.addf %388, %391 : vector<1x256xf32>
    %c-2_i32_128 = arith.constant -2 : i32
    %393 = vector.broadcast %c-2_i32_128 : i32 to vector<1x256xi32>
    %394 = arith.addi %33, %393 : vector<1x256xi32>
    %c0_i32_129 = arith.constant 0 : i32
    %395 = vector.broadcast %c0_i32_129 : i32 to vector<1x256xi32>
    %396 = arith.cmpi sge, %394, %395 : vector<1x256xi32>
    %c-2_i32_130 = arith.constant -2 : i32
    %397 = vector.broadcast %c-2_i32_130 : i32 to vector<1x256xi32>
    %398 = arith.addi %33, %397 : vector<1x256xi32>
    %c16_i32_131 = arith.constant 16 : i32
    %399 = vector.broadcast %c16_i32_131 : i32 to vector<1x256xi32>
    %400 = arith.cmpi slt, %398, %399 : vector<1x256xi32>
    %401 = arith.andi %396, %400 : vector<1x256xi1>
    %c0_i32_132 = arith.constant 0 : i32
    %402 = vector.broadcast %c0_i32_132 : i32 to vector<1x256xi32>
    %403 = arith.addi %36, %402 : vector<1x256xi32>
    %c0_i32_133 = arith.constant 0 : i32
    %404 = vector.broadcast %c0_i32_133 : i32 to vector<1x256xi32>
    %405 = arith.cmpi sge, %403, %404 : vector<1x256xi32>
    %406 = arith.andi %401, %405 : vector<1x256xi1>
    %c0_i32_134 = arith.constant 0 : i32
    %407 = vector.broadcast %c0_i32_134 : i32 to vector<1x256xi32>
    %408 = arith.addi %36, %407 : vector<1x256xi32>
    %c16_i32_135 = arith.constant 16 : i32
    %409 = vector.broadcast %c16_i32_135 : i32 to vector<1x256xi32>
    %410 = arith.cmpi slt, %408, %409 : vector<1x256xi32>
    %411 = arith.andi %406, %410 : vector<1x256xi1>
    %c32_i32 = arith.constant 32 : i32
    %412 = tpu.dynamic_rotate %59 by %c32_i32 dim 1 : vector<1x256xf32>, i32 -> vector<1x256xf32>
    %c32_i32_136 = arith.constant 32 : i32
    %413 = tpu.dynamic_rotate %61 by %c32_i32_136 dim 1 : vector<1x256xf32>, i32 -> vector<1x256xf32>
    %cst_137 = arith.constant 0.000000e+00 : f32
    %414 = vector.broadcast %cst_137 : f32 to vector<1x256xf32>
    %415 = arith.select %411, %412, %414 : vector<1x256xi1>, vector<1x256xf32>
    %cst_138 = arith.constant 0.000000e+00 : f32
    %416 = vector.broadcast %cst_138 : f32 to vector<1x256xf32>
    %417 = arith.select %411, %413, %416 : vector<1x256xi1>, vector<1x256xf32>
    %c10 = arith.constant 10 : index
    %418 = memref.load %arg2[%c10] : memref<98xf32, #tpu.memory_space<smem>>
    %419 = vector.broadcast %418 : f32 to vector<1x256xf32>
    %420 = arith.mulf %419, %415 : vector<1x256xf32>
    %421 = arith.addf %392, %420 : vector<1x256xf32>
    %c59 = arith.constant 59 : index
    %422 = memref.load %arg2[%c59] : memref<98xf32, #tpu.memory_space<smem>>
    %423 = vector.broadcast %422 : f32 to vector<1x256xf32>
    %424 = arith.mulf %423, %417 : vector<1x256xf32>
    %425 = arith.addf %421, %424 : vector<1x256xf32>
    %c-2_i32_139 = arith.constant -2 : i32
    %426 = vector.broadcast %c-2_i32_139 : i32 to vector<1x256xi32>
    %427 = arith.addi %33, %426 : vector<1x256xi32>
    %c0_i32_140 = arith.constant 0 : i32
    %428 = vector.broadcast %c0_i32_140 : i32 to vector<1x256xi32>
    %429 = arith.cmpi sge, %427, %428 : vector<1x256xi32>
    %c-2_i32_141 = arith.constant -2 : i32
    %430 = vector.broadcast %c-2_i32_141 : i32 to vector<1x256xi32>
    %431 = arith.addi %33, %430 : vector<1x256xi32>
    %c16_i32_142 = arith.constant 16 : i32
    %432 = vector.broadcast %c16_i32_142 : i32 to vector<1x256xi32>
    %433 = arith.cmpi slt, %431, %432 : vector<1x256xi32>
    %434 = arith.andi %429, %433 : vector<1x256xi1>
    %c1_i32_143 = arith.constant 1 : i32
    %435 = vector.broadcast %c1_i32_143 : i32 to vector<1x256xi32>
    %436 = arith.addi %36, %435 : vector<1x256xi32>
    %c0_i32_144 = arith.constant 0 : i32
    %437 = vector.broadcast %c0_i32_144 : i32 to vector<1x256xi32>
    %438 = arith.cmpi sge, %436, %437 : vector<1x256xi32>
    %439 = arith.andi %434, %438 : vector<1x256xi1>
    %c1_i32_145 = arith.constant 1 : i32
    %440 = vector.broadcast %c1_i32_145 : i32 to vector<1x256xi32>
    %441 = arith.addi %36, %440 : vector<1x256xi32>
    %c16_i32_146 = arith.constant 16 : i32
    %442 = vector.broadcast %c16_i32_146 : i32 to vector<1x256xi32>
    %443 = arith.cmpi slt, %441, %442 : vector<1x256xi32>
    %444 = arith.andi %439, %443 : vector<1x256xi1>
    %c31_i32 = arith.constant 31 : i32
    %445 = tpu.dynamic_rotate %59 by %c31_i32 dim 1 : vector<1x256xf32>, i32 -> vector<1x256xf32>
    %c31_i32_147 = arith.constant 31 : i32
    %446 = tpu.dynamic_rotate %61 by %c31_i32_147 dim 1 : vector<1x256xf32>, i32 -> vector<1x256xf32>
    %cst_148 = arith.constant 0.000000e+00 : f32
    %447 = vector.broadcast %cst_148 : f32 to vector<1x256xf32>
    %448 = arith.select %444, %445, %447 : vector<1x256xi1>, vector<1x256xf32>
    %cst_149 = arith.constant 0.000000e+00 : f32
    %449 = vector.broadcast %cst_149 : f32 to vector<1x256xf32>
    %450 = arith.select %444, %446, %449 : vector<1x256xi1>, vector<1x256xf32>
    %c11 = arith.constant 11 : index
    %451 = memref.load %arg2[%c11] : memref<98xf32, #tpu.memory_space<smem>>
    %452 = vector.broadcast %451 : f32 to vector<1x256xf32>
    %453 = arith.mulf %452, %448 : vector<1x256xf32>
    %454 = arith.addf %425, %453 : vector<1x256xf32>
    %c60 = arith.constant 60 : index
    %455 = memref.load %arg2[%c60] : memref<98xf32, #tpu.memory_space<smem>>
    %456 = vector.broadcast %455 : f32 to vector<1x256xf32>
    %457 = arith.mulf %456, %450 : vector<1x256xf32>
    %458 = arith.addf %454, %457 : vector<1x256xf32>
    %c-2_i32_150 = arith.constant -2 : i32
    %459 = vector.broadcast %c-2_i32_150 : i32 to vector<1x256xi32>
    %460 = arith.addi %33, %459 : vector<1x256xi32>
    %c0_i32_151 = arith.constant 0 : i32
    %461 = vector.broadcast %c0_i32_151 : i32 to vector<1x256xi32>
    %462 = arith.cmpi sge, %460, %461 : vector<1x256xi32>
    %c-2_i32_152 = arith.constant -2 : i32
    %463 = vector.broadcast %c-2_i32_152 : i32 to vector<1x256xi32>
    %464 = arith.addi %33, %463 : vector<1x256xi32>
    %c16_i32_153 = arith.constant 16 : i32
    %465 = vector.broadcast %c16_i32_153 : i32 to vector<1x256xi32>
    %466 = arith.cmpi slt, %464, %465 : vector<1x256xi32>
    %467 = arith.andi %462, %466 : vector<1x256xi1>
    %c2_i32_154 = arith.constant 2 : i32
    %468 = vector.broadcast %c2_i32_154 : i32 to vector<1x256xi32>
    %469 = arith.addi %36, %468 : vector<1x256xi32>
    %c0_i32_155 = arith.constant 0 : i32
    %470 = vector.broadcast %c0_i32_155 : i32 to vector<1x256xi32>
    %471 = arith.cmpi sge, %469, %470 : vector<1x256xi32>
    %472 = arith.andi %467, %471 : vector<1x256xi1>
    %c2_i32_156 = arith.constant 2 : i32
    %473 = vector.broadcast %c2_i32_156 : i32 to vector<1x256xi32>
    %474 = arith.addi %36, %473 : vector<1x256xi32>
    %c16_i32_157 = arith.constant 16 : i32
    %475 = vector.broadcast %c16_i32_157 : i32 to vector<1x256xi32>
    %476 = arith.cmpi slt, %474, %475 : vector<1x256xi32>
    %477 = arith.andi %472, %476 : vector<1x256xi1>
    %c30_i32 = arith.constant 30 : i32
    %478 = tpu.dynamic_rotate %59 by %c30_i32 dim 1 : vector<1x256xf32>, i32 -> vector<1x256xf32>
    %c30_i32_158 = arith.constant 30 : i32
    %479 = tpu.dynamic_rotate %61 by %c30_i32_158 dim 1 : vector<1x256xf32>, i32 -> vector<1x256xf32>
    %cst_159 = arith.constant 0.000000e+00 : f32
    %480 = vector.broadcast %cst_159 : f32 to vector<1x256xf32>
    %481 = arith.select %477, %478, %480 : vector<1x256xi1>, vector<1x256xf32>
    %cst_160 = arith.constant 0.000000e+00 : f32
    %482 = vector.broadcast %cst_160 : f32 to vector<1x256xf32>
    %483 = arith.select %477, %479, %482 : vector<1x256xi1>, vector<1x256xf32>
    %c12 = arith.constant 12 : index
    %484 = memref.load %arg2[%c12] : memref<98xf32, #tpu.memory_space<smem>>
    %485 = vector.broadcast %484 : f32 to vector<1x256xf32>
    %486 = arith.mulf %485, %481 : vector<1x256xf32>
    %487 = arith.addf %458, %486 : vector<1x256xf32>
    %c61 = arith.constant 61 : index
    %488 = memref.load %arg2[%c61] : memref<98xf32, #tpu.memory_space<smem>>
    %489 = vector.broadcast %488 : f32 to vector<1x256xf32>
    %490 = arith.mulf %489, %483 : vector<1x256xf32>
    %491 = arith.addf %487, %490 : vector<1x256xf32>
    %c-2_i32_161 = arith.constant -2 : i32
    %492 = vector.broadcast %c-2_i32_161 : i32 to vector<1x256xi32>
    %493 = arith.addi %33, %492 : vector<1x256xi32>
    %c0_i32_162 = arith.constant 0 : i32
    %494 = vector.broadcast %c0_i32_162 : i32 to vector<1x256xi32>
    %495 = arith.cmpi sge, %493, %494 : vector<1x256xi32>
    %c-2_i32_163 = arith.constant -2 : i32
    %496 = vector.broadcast %c-2_i32_163 : i32 to vector<1x256xi32>
    %497 = arith.addi %33, %496 : vector<1x256xi32>
    %c16_i32_164 = arith.constant 16 : i32
    %498 = vector.broadcast %c16_i32_164 : i32 to vector<1x256xi32>
    %499 = arith.cmpi slt, %497, %498 : vector<1x256xi32>
    %500 = arith.andi %495, %499 : vector<1x256xi1>
    %c3_i32_165 = arith.constant 3 : i32
    %501 = vector.broadcast %c3_i32_165 : i32 to vector<1x256xi32>
    %502 = arith.addi %36, %501 : vector<1x256xi32>
    %c0_i32_166 = arith.constant 0 : i32
    %503 = vector.broadcast %c0_i32_166 : i32 to vector<1x256xi32>
    %504 = arith.cmpi sge, %502, %503 : vector<1x256xi32>
    %505 = arith.andi %500, %504 : vector<1x256xi1>
    %c3_i32_167 = arith.constant 3 : i32
    %506 = vector.broadcast %c3_i32_167 : i32 to vector<1x256xi32>
    %507 = arith.addi %36, %506 : vector<1x256xi32>
    %c16_i32_168 = arith.constant 16 : i32
    %508 = vector.broadcast %c16_i32_168 : i32 to vector<1x256xi32>
    %509 = arith.cmpi slt, %507, %508 : vector<1x256xi32>
    %510 = arith.andi %505, %509 : vector<1x256xi1>
    %c29_i32 = arith.constant 29 : i32
    %511 = tpu.dynamic_rotate %59 by %c29_i32 dim 1 : vector<1x256xf32>, i32 -> vector<1x256xf32>
    %c29_i32_169 = arith.constant 29 : i32
    %512 = tpu.dynamic_rotate %61 by %c29_i32_169 dim 1 : vector<1x256xf32>, i32 -> vector<1x256xf32>
    %cst_170 = arith.constant 0.000000e+00 : f32
    %513 = vector.broadcast %cst_170 : f32 to vector<1x256xf32>
    %514 = arith.select %510, %511, %513 : vector<1x256xi1>, vector<1x256xf32>
    %cst_171 = arith.constant 0.000000e+00 : f32
    %515 = vector.broadcast %cst_171 : f32 to vector<1x256xf32>
    %516 = arith.select %510, %512, %515 : vector<1x256xi1>, vector<1x256xf32>
    %c13 = arith.constant 13 : index
    %517 = memref.load %arg2[%c13] : memref<98xf32, #tpu.memory_space<smem>>
    %518 = vector.broadcast %517 : f32 to vector<1x256xf32>
    %519 = arith.mulf %518, %514 : vector<1x256xf32>
    %520 = arith.addf %491, %519 : vector<1x256xf32>
    %c62 = arith.constant 62 : index
    %521 = memref.load %arg2[%c62] : memref<98xf32, #tpu.memory_space<smem>>
    %522 = vector.broadcast %521 : f32 to vector<1x256xf32>
    %523 = arith.mulf %522, %516 : vector<1x256xf32>
    %524 = arith.addf %520, %523 : vector<1x256xf32>
    %c-1_i32_172 = arith.constant -1 : i32
    %525 = vector.broadcast %c-1_i32_172 : i32 to vector<1x256xi32>
    %526 = arith.addi %33, %525 : vector<1x256xi32>
    %c0_i32_173 = arith.constant 0 : i32
    %527 = vector.broadcast %c0_i32_173 : i32 to vector<1x256xi32>
    %528 = arith.cmpi sge, %526, %527 : vector<1x256xi32>
    %c-1_i32_174 = arith.constant -1 : i32
    %529 = vector.broadcast %c-1_i32_174 : i32 to vector<1x256xi32>
    %530 = arith.addi %33, %529 : vector<1x256xi32>
    %c16_i32_175 = arith.constant 16 : i32
    %531 = vector.broadcast %c16_i32_175 : i32 to vector<1x256xi32>
    %532 = arith.cmpi slt, %530, %531 : vector<1x256xi32>
    %533 = arith.andi %528, %532 : vector<1x256xi1>
    %c-3_i32_176 = arith.constant -3 : i32
    %534 = vector.broadcast %c-3_i32_176 : i32 to vector<1x256xi32>
    %535 = arith.addi %36, %534 : vector<1x256xi32>
    %c0_i32_177 = arith.constant 0 : i32
    %536 = vector.broadcast %c0_i32_177 : i32 to vector<1x256xi32>
    %537 = arith.cmpi sge, %535, %536 : vector<1x256xi32>
    %538 = arith.andi %533, %537 : vector<1x256xi1>
    %c-3_i32_178 = arith.constant -3 : i32
    %539 = vector.broadcast %c-3_i32_178 : i32 to vector<1x256xi32>
    %540 = arith.addi %36, %539 : vector<1x256xi32>
    %c16_i32_179 = arith.constant 16 : i32
    %541 = vector.broadcast %c16_i32_179 : i32 to vector<1x256xi32>
    %542 = arith.cmpi slt, %540, %541 : vector<1x256xi32>
    %543 = arith.andi %538, %542 : vector<1x256xi1>
    %c19_i32 = arith.constant 19 : i32
    %544 = tpu.dynamic_rotate %59 by %c19_i32 dim 1 : vector<1x256xf32>, i32 -> vector<1x256xf32>
    %c19_i32_180 = arith.constant 19 : i32
    %545 = tpu.dynamic_rotate %61 by %c19_i32_180 dim 1 : vector<1x256xf32>, i32 -> vector<1x256xf32>
    %cst_181 = arith.constant 0.000000e+00 : f32
    %546 = vector.broadcast %cst_181 : f32 to vector<1x256xf32>
    %547 = arith.select %543, %544, %546 : vector<1x256xi1>, vector<1x256xf32>
    %cst_182 = arith.constant 0.000000e+00 : f32
    %548 = vector.broadcast %cst_182 : f32 to vector<1x256xf32>
    %549 = arith.select %543, %545, %548 : vector<1x256xi1>, vector<1x256xf32>
    %c14 = arith.constant 14 : index
    %550 = memref.load %arg2[%c14] : memref<98xf32, #tpu.memory_space<smem>>
    %551 = vector.broadcast %550 : f32 to vector<1x256xf32>
    %552 = arith.mulf %551, %547 : vector<1x256xf32>
    %553 = arith.addf %524, %552 : vector<1x256xf32>
    %c63 = arith.constant 63 : index
    %554 = memref.load %arg2[%c63] : memref<98xf32, #tpu.memory_space<smem>>
    %555 = vector.broadcast %554 : f32 to vector<1x256xf32>
    %556 = arith.mulf %555, %549 : vector<1x256xf32>
    %557 = arith.addf %553, %556 : vector<1x256xf32>
    %c-1_i32_183 = arith.constant -1 : i32
    %558 = vector.broadcast %c-1_i32_183 : i32 to vector<1x256xi32>
    %559 = arith.addi %33, %558 : vector<1x256xi32>
    %c0_i32_184 = arith.constant 0 : i32
    %560 = vector.broadcast %c0_i32_184 : i32 to vector<1x256xi32>
    %561 = arith.cmpi sge, %559, %560 : vector<1x256xi32>
    %c-1_i32_185 = arith.constant -1 : i32
    %562 = vector.broadcast %c-1_i32_185 : i32 to vector<1x256xi32>
    %563 = arith.addi %33, %562 : vector<1x256xi32>
    %c16_i32_186 = arith.constant 16 : i32
    %564 = vector.broadcast %c16_i32_186 : i32 to vector<1x256xi32>
    %565 = arith.cmpi slt, %563, %564 : vector<1x256xi32>
    %566 = arith.andi %561, %565 : vector<1x256xi1>
    %c-2_i32_187 = arith.constant -2 : i32
    %567 = vector.broadcast %c-2_i32_187 : i32 to vector<1x256xi32>
    %568 = arith.addi %36, %567 : vector<1x256xi32>
    %c0_i32_188 = arith.constant 0 : i32
    %569 = vector.broadcast %c0_i32_188 : i32 to vector<1x256xi32>
    %570 = arith.cmpi sge, %568, %569 : vector<1x256xi32>
    %571 = arith.andi %566, %570 : vector<1x256xi1>
    %c-2_i32_189 = arith.constant -2 : i32
    %572 = vector.broadcast %c-2_i32_189 : i32 to vector<1x256xi32>
    %573 = arith.addi %36, %572 : vector<1x256xi32>
    %c16_i32_190 = arith.constant 16 : i32
    %574 = vector.broadcast %c16_i32_190 : i32 to vector<1x256xi32>
    %575 = arith.cmpi slt, %573, %574 : vector<1x256xi32>
    %576 = arith.andi %571, %575 : vector<1x256xi1>
    %c18_i32 = arith.constant 18 : i32
    %577 = tpu.dynamic_rotate %59 by %c18_i32 dim 1 : vector<1x256xf32>, i32 -> vector<1x256xf32>
    %c18_i32_191 = arith.constant 18 : i32
    %578 = tpu.dynamic_rotate %61 by %c18_i32_191 dim 1 : vector<1x256xf32>, i32 -> vector<1x256xf32>
    %cst_192 = arith.constant 0.000000e+00 : f32
    %579 = vector.broadcast %cst_192 : f32 to vector<1x256xf32>
    %580 = arith.select %576, %577, %579 : vector<1x256xi1>, vector<1x256xf32>
    %cst_193 = arith.constant 0.000000e+00 : f32
    %581 = vector.broadcast %cst_193 : f32 to vector<1x256xf32>
    %582 = arith.select %576, %578, %581 : vector<1x256xi1>, vector<1x256xf32>
    %c15 = arith.constant 15 : index
    %583 = memref.load %arg2[%c15] : memref<98xf32, #tpu.memory_space<smem>>
    %584 = vector.broadcast %583 : f32 to vector<1x256xf32>
    %585 = arith.mulf %584, %580 : vector<1x256xf32>
    %586 = arith.addf %557, %585 : vector<1x256xf32>
    %c64 = arith.constant 64 : index
    %587 = memref.load %arg2[%c64] : memref<98xf32, #tpu.memory_space<smem>>
    %588 = vector.broadcast %587 : f32 to vector<1x256xf32>
    %589 = arith.mulf %588, %582 : vector<1x256xf32>
    %590 = arith.addf %586, %589 : vector<1x256xf32>
    %c-1_i32_194 = arith.constant -1 : i32
    %591 = vector.broadcast %c-1_i32_194 : i32 to vector<1x256xi32>
    %592 = arith.addi %33, %591 : vector<1x256xi32>
    %c0_i32_195 = arith.constant 0 : i32
    %593 = vector.broadcast %c0_i32_195 : i32 to vector<1x256xi32>
    %594 = arith.cmpi sge, %592, %593 : vector<1x256xi32>
    %c-1_i32_196 = arith.constant -1 : i32
    %595 = vector.broadcast %c-1_i32_196 : i32 to vector<1x256xi32>
    %596 = arith.addi %33, %595 : vector<1x256xi32>
    %c16_i32_197 = arith.constant 16 : i32
    %597 = vector.broadcast %c16_i32_197 : i32 to vector<1x256xi32>
    %598 = arith.cmpi slt, %596, %597 : vector<1x256xi32>
    %599 = arith.andi %594, %598 : vector<1x256xi1>
    %c-1_i32_198 = arith.constant -1 : i32
    %600 = vector.broadcast %c-1_i32_198 : i32 to vector<1x256xi32>
    %601 = arith.addi %36, %600 : vector<1x256xi32>
    %c0_i32_199 = arith.constant 0 : i32
    %602 = vector.broadcast %c0_i32_199 : i32 to vector<1x256xi32>
    %603 = arith.cmpi sge, %601, %602 : vector<1x256xi32>
    %604 = arith.andi %599, %603 : vector<1x256xi1>
    %c-1_i32_200 = arith.constant -1 : i32
    %605 = vector.broadcast %c-1_i32_200 : i32 to vector<1x256xi32>
    %606 = arith.addi %36, %605 : vector<1x256xi32>
    %c16_i32_201 = arith.constant 16 : i32
    %607 = vector.broadcast %c16_i32_201 : i32 to vector<1x256xi32>
    %608 = arith.cmpi slt, %606, %607 : vector<1x256xi32>
    %609 = arith.andi %604, %608 : vector<1x256xi1>
    %c17_i32 = arith.constant 17 : i32
    %610 = tpu.dynamic_rotate %59 by %c17_i32 dim 1 : vector<1x256xf32>, i32 -> vector<1x256xf32>
    %c17_i32_202 = arith.constant 17 : i32
    %611 = tpu.dynamic_rotate %61 by %c17_i32_202 dim 1 : vector<1x256xf32>, i32 -> vector<1x256xf32>
    %cst_203 = arith.constant 0.000000e+00 : f32
    %612 = vector.broadcast %cst_203 : f32 to vector<1x256xf32>
    %613 = arith.select %609, %610, %612 : vector<1x256xi1>, vector<1x256xf32>
    %cst_204 = arith.constant 0.000000e+00 : f32
    %614 = vector.broadcast %cst_204 : f32 to vector<1x256xf32>
    %615 = arith.select %609, %611, %614 : vector<1x256xi1>, vector<1x256xf32>
    %c16 = arith.constant 16 : index
    %616 = memref.load %arg2[%c16] : memref<98xf32, #tpu.memory_space<smem>>
    %617 = vector.broadcast %616 : f32 to vector<1x256xf32>
    %618 = arith.mulf %617, %613 : vector<1x256xf32>
    %619 = arith.addf %590, %618 : vector<1x256xf32>
    %c65 = arith.constant 65 : index
    %620 = memref.load %arg2[%c65] : memref<98xf32, #tpu.memory_space<smem>>
    %621 = vector.broadcast %620 : f32 to vector<1x256xf32>
    %622 = arith.mulf %621, %615 : vector<1x256xf32>
    %623 = arith.addf %619, %622 : vector<1x256xf32>
    %c-1_i32_205 = arith.constant -1 : i32
    %624 = vector.broadcast %c-1_i32_205 : i32 to vector<1x256xi32>
    %625 = arith.addi %33, %624 : vector<1x256xi32>
    %c0_i32_206 = arith.constant 0 : i32
    %626 = vector.broadcast %c0_i32_206 : i32 to vector<1x256xi32>
    %627 = arith.cmpi sge, %625, %626 : vector<1x256xi32>
    %c-1_i32_207 = arith.constant -1 : i32
    %628 = vector.broadcast %c-1_i32_207 : i32 to vector<1x256xi32>
    %629 = arith.addi %33, %628 : vector<1x256xi32>
    %c16_i32_208 = arith.constant 16 : i32
    %630 = vector.broadcast %c16_i32_208 : i32 to vector<1x256xi32>
    %631 = arith.cmpi slt, %629, %630 : vector<1x256xi32>
    %632 = arith.andi %627, %631 : vector<1x256xi1>
    %c0_i32_209 = arith.constant 0 : i32
    %633 = vector.broadcast %c0_i32_209 : i32 to vector<1x256xi32>
    %634 = arith.addi %36, %633 : vector<1x256xi32>
    %c0_i32_210 = arith.constant 0 : i32
    %635 = vector.broadcast %c0_i32_210 : i32 to vector<1x256xi32>
    %636 = arith.cmpi sge, %634, %635 : vector<1x256xi32>
    %637 = arith.andi %632, %636 : vector<1x256xi1>
    %c0_i32_211 = arith.constant 0 : i32
    %638 = vector.broadcast %c0_i32_211 : i32 to vector<1x256xi32>
    %639 = arith.addi %36, %638 : vector<1x256xi32>
    %c16_i32_212 = arith.constant 16 : i32
    %640 = vector.broadcast %c16_i32_212 : i32 to vector<1x256xi32>
    %641 = arith.cmpi slt, %639, %640 : vector<1x256xi32>
    %642 = arith.andi %637, %641 : vector<1x256xi1>
    %c16_i32_213 = arith.constant 16 : i32
    %643 = tpu.dynamic_rotate %59 by %c16_i32_213 dim 1 : vector<1x256xf32>, i32 -> vector<1x256xf32>
    %c16_i32_214 = arith.constant 16 : i32
    %644 = tpu.dynamic_rotate %61 by %c16_i32_214 dim 1 : vector<1x256xf32>, i32 -> vector<1x256xf32>
    %cst_215 = arith.constant 0.000000e+00 : f32
    %645 = vector.broadcast %cst_215 : f32 to vector<1x256xf32>
    %646 = arith.select %642, %643, %645 : vector<1x256xi1>, vector<1x256xf32>
    %cst_216 = arith.constant 0.000000e+00 : f32
    %647 = vector.broadcast %cst_216 : f32 to vector<1x256xf32>
    %648 = arith.select %642, %644, %647 : vector<1x256xi1>, vector<1x256xf32>
    %c17 = arith.constant 17 : index
    %649 = memref.load %arg2[%c17] : memref<98xf32, #tpu.memory_space<smem>>
    %650 = vector.broadcast %649 : f32 to vector<1x256xf32>
    %651 = arith.mulf %650, %646 : vector<1x256xf32>
    %652 = arith.addf %623, %651 : vector<1x256xf32>
    %c66 = arith.constant 66 : index
    %653 = memref.load %arg2[%c66] : memref<98xf32, #tpu.memory_space<smem>>
    %654 = vector.broadcast %653 : f32 to vector<1x256xf32>
    %655 = arith.mulf %654, %648 : vector<1x256xf32>
    %656 = arith.addf %652, %655 : vector<1x256xf32>
    %c-1_i32_217 = arith.constant -1 : i32
    %657 = vector.broadcast %c-1_i32_217 : i32 to vector<1x256xi32>
    %658 = arith.addi %33, %657 : vector<1x256xi32>
    %c0_i32_218 = arith.constant 0 : i32
    %659 = vector.broadcast %c0_i32_218 : i32 to vector<1x256xi32>
    %660 = arith.cmpi sge, %658, %659 : vector<1x256xi32>
    %c-1_i32_219 = arith.constant -1 : i32
    %661 = vector.broadcast %c-1_i32_219 : i32 to vector<1x256xi32>
    %662 = arith.addi %33, %661 : vector<1x256xi32>
    %c16_i32_220 = arith.constant 16 : i32
    %663 = vector.broadcast %c16_i32_220 : i32 to vector<1x256xi32>
    %664 = arith.cmpi slt, %662, %663 : vector<1x256xi32>
    %665 = arith.andi %660, %664 : vector<1x256xi1>
    %c1_i32_221 = arith.constant 1 : i32
    %666 = vector.broadcast %c1_i32_221 : i32 to vector<1x256xi32>
    %667 = arith.addi %36, %666 : vector<1x256xi32>
    %c0_i32_222 = arith.constant 0 : i32
    %668 = vector.broadcast %c0_i32_222 : i32 to vector<1x256xi32>
    %669 = arith.cmpi sge, %667, %668 : vector<1x256xi32>
    %670 = arith.andi %665, %669 : vector<1x256xi1>
    %c1_i32_223 = arith.constant 1 : i32
    %671 = vector.broadcast %c1_i32_223 : i32 to vector<1x256xi32>
    %672 = arith.addi %36, %671 : vector<1x256xi32>
    %c16_i32_224 = arith.constant 16 : i32
    %673 = vector.broadcast %c16_i32_224 : i32 to vector<1x256xi32>
    %674 = arith.cmpi slt, %672, %673 : vector<1x256xi32>
    %675 = arith.andi %670, %674 : vector<1x256xi1>
    %c15_i32 = arith.constant 15 : i32
    %676 = tpu.dynamic_rotate %59 by %c15_i32 dim 1 : vector<1x256xf32>, i32 -> vector<1x256xf32>
    %c15_i32_225 = arith.constant 15 : i32
    %677 = tpu.dynamic_rotate %61 by %c15_i32_225 dim 1 : vector<1x256xf32>, i32 -> vector<1x256xf32>
    %cst_226 = arith.constant 0.000000e+00 : f32
    %678 = vector.broadcast %cst_226 : f32 to vector<1x256xf32>
    %679 = arith.select %675, %676, %678 : vector<1x256xi1>, vector<1x256xf32>
    %cst_227 = arith.constant 0.000000e+00 : f32
    %680 = vector.broadcast %cst_227 : f32 to vector<1x256xf32>
    %681 = arith.select %675, %677, %680 : vector<1x256xi1>, vector<1x256xf32>
    %c18 = arith.constant 18 : index
    %682 = memref.load %arg2[%c18] : memref<98xf32, #tpu.memory_space<smem>>
    %683 = vector.broadcast %682 : f32 to vector<1x256xf32>
    %684 = arith.mulf %683, %679 : vector<1x256xf32>
    %685 = arith.addf %656, %684 : vector<1x256xf32>
    %c67 = arith.constant 67 : index
    %686 = memref.load %arg2[%c67] : memref<98xf32, #tpu.memory_space<smem>>
    %687 = vector.broadcast %686 : f32 to vector<1x256xf32>
    %688 = arith.mulf %687, %681 : vector<1x256xf32>
    %689 = arith.addf %685, %688 : vector<1x256xf32>
    %c-1_i32_228 = arith.constant -1 : i32
    %690 = vector.broadcast %c-1_i32_228 : i32 to vector<1x256xi32>
    %691 = arith.addi %33, %690 : vector<1x256xi32>
    %c0_i32_229 = arith.constant 0 : i32
    %692 = vector.broadcast %c0_i32_229 : i32 to vector<1x256xi32>
    %693 = arith.cmpi sge, %691, %692 : vector<1x256xi32>
    %c-1_i32_230 = arith.constant -1 : i32
    %694 = vector.broadcast %c-1_i32_230 : i32 to vector<1x256xi32>
    %695 = arith.addi %33, %694 : vector<1x256xi32>
    %c16_i32_231 = arith.constant 16 : i32
    %696 = vector.broadcast %c16_i32_231 : i32 to vector<1x256xi32>
    %697 = arith.cmpi slt, %695, %696 : vector<1x256xi32>
    %698 = arith.andi %693, %697 : vector<1x256xi1>
    %c2_i32_232 = arith.constant 2 : i32
    %699 = vector.broadcast %c2_i32_232 : i32 to vector<1x256xi32>
    %700 = arith.addi %36, %699 : vector<1x256xi32>
    %c0_i32_233 = arith.constant 0 : i32
    %701 = vector.broadcast %c0_i32_233 : i32 to vector<1x256xi32>
    %702 = arith.cmpi sge, %700, %701 : vector<1x256xi32>
    %703 = arith.andi %698, %702 : vector<1x256xi1>
    %c2_i32_234 = arith.constant 2 : i32
    %704 = vector.broadcast %c2_i32_234 : i32 to vector<1x256xi32>
    %705 = arith.addi %36, %704 : vector<1x256xi32>
    %c16_i32_235 = arith.constant 16 : i32
    %706 = vector.broadcast %c16_i32_235 : i32 to vector<1x256xi32>
    %707 = arith.cmpi slt, %705, %706 : vector<1x256xi32>
    %708 = arith.andi %703, %707 : vector<1x256xi1>
    %c14_i32 = arith.constant 14 : i32
    %709 = tpu.dynamic_rotate %59 by %c14_i32 dim 1 : vector<1x256xf32>, i32 -> vector<1x256xf32>
    %c14_i32_236 = arith.constant 14 : i32
    %710 = tpu.dynamic_rotate %61 by %c14_i32_236 dim 1 : vector<1x256xf32>, i32 -> vector<1x256xf32>
    %cst_237 = arith.constant 0.000000e+00 : f32
    %711 = vector.broadcast %cst_237 : f32 to vector<1x256xf32>
    %712 = arith.select %708, %709, %711 : vector<1x256xi1>, vector<1x256xf32>
    %cst_238 = arith.constant 0.000000e+00 : f32
    %713 = vector.broadcast %cst_238 : f32 to vector<1x256xf32>
    %714 = arith.select %708, %710, %713 : vector<1x256xi1>, vector<1x256xf32>
    %c19 = arith.constant 19 : index
    %715 = memref.load %arg2[%c19] : memref<98xf32, #tpu.memory_space<smem>>
    %716 = vector.broadcast %715 : f32 to vector<1x256xf32>
    %717 = arith.mulf %716, %712 : vector<1x256xf32>
    %718 = arith.addf %689, %717 : vector<1x256xf32>
    %c68 = arith.constant 68 : index
    %719 = memref.load %arg2[%c68] : memref<98xf32, #tpu.memory_space<smem>>
    %720 = vector.broadcast %719 : f32 to vector<1x256xf32>
    %721 = arith.mulf %720, %714 : vector<1x256xf32>
    %722 = arith.addf %718, %721 : vector<1x256xf32>
    %c-1_i32_239 = arith.constant -1 : i32
    %723 = vector.broadcast %c-1_i32_239 : i32 to vector<1x256xi32>
    %724 = arith.addi %33, %723 : vector<1x256xi32>
    %c0_i32_240 = arith.constant 0 : i32
    %725 = vector.broadcast %c0_i32_240 : i32 to vector<1x256xi32>
    %726 = arith.cmpi sge, %724, %725 : vector<1x256xi32>
    %c-1_i32_241 = arith.constant -1 : i32
    %727 = vector.broadcast %c-1_i32_241 : i32 to vector<1x256xi32>
    %728 = arith.addi %33, %727 : vector<1x256xi32>
    %c16_i32_242 = arith.constant 16 : i32
    %729 = vector.broadcast %c16_i32_242 : i32 to vector<1x256xi32>
    %730 = arith.cmpi slt, %728, %729 : vector<1x256xi32>
    %731 = arith.andi %726, %730 : vector<1x256xi1>
    %c3_i32_243 = arith.constant 3 : i32
    %732 = vector.broadcast %c3_i32_243 : i32 to vector<1x256xi32>
    %733 = arith.addi %36, %732 : vector<1x256xi32>
    %c0_i32_244 = arith.constant 0 : i32
    %734 = vector.broadcast %c0_i32_244 : i32 to vector<1x256xi32>
    %735 = arith.cmpi sge, %733, %734 : vector<1x256xi32>
    %736 = arith.andi %731, %735 : vector<1x256xi1>
    %c3_i32_245 = arith.constant 3 : i32
    %737 = vector.broadcast %c3_i32_245 : i32 to vector<1x256xi32>
    %738 = arith.addi %36, %737 : vector<1x256xi32>
    %c16_i32_246 = arith.constant 16 : i32
    %739 = vector.broadcast %c16_i32_246 : i32 to vector<1x256xi32>
    %740 = arith.cmpi slt, %738, %739 : vector<1x256xi32>
    %741 = arith.andi %736, %740 : vector<1x256xi1>
    %c13_i32 = arith.constant 13 : i32
    %742 = tpu.dynamic_rotate %59 by %c13_i32 dim 1 : vector<1x256xf32>, i32 -> vector<1x256xf32>
    %c13_i32_247 = arith.constant 13 : i32
    %743 = tpu.dynamic_rotate %61 by %c13_i32_247 dim 1 : vector<1x256xf32>, i32 -> vector<1x256xf32>
    %cst_248 = arith.constant 0.000000e+00 : f32
    %744 = vector.broadcast %cst_248 : f32 to vector<1x256xf32>
    %745 = arith.select %741, %742, %744 : vector<1x256xi1>, vector<1x256xf32>
    %cst_249 = arith.constant 0.000000e+00 : f32
    %746 = vector.broadcast %cst_249 : f32 to vector<1x256xf32>
    %747 = arith.select %741, %743, %746 : vector<1x256xi1>, vector<1x256xf32>
    %c20 = arith.constant 20 : index
    %748 = memref.load %arg2[%c20] : memref<98xf32, #tpu.memory_space<smem>>
    %749 = vector.broadcast %748 : f32 to vector<1x256xf32>
    %750 = arith.mulf %749, %745 : vector<1x256xf32>
    %751 = arith.addf %722, %750 : vector<1x256xf32>
    %c69 = arith.constant 69 : index
    %752 = memref.load %arg2[%c69] : memref<98xf32, #tpu.memory_space<smem>>
    %753 = vector.broadcast %752 : f32 to vector<1x256xf32>
    %754 = arith.mulf %753, %747 : vector<1x256xf32>
    %755 = arith.addf %751, %754 : vector<1x256xf32>
    %c0_i32_250 = arith.constant 0 : i32
    %756 = vector.broadcast %c0_i32_250 : i32 to vector<1x256xi32>
    %757 = arith.addi %33, %756 : vector<1x256xi32>
    %c0_i32_251 = arith.constant 0 : i32
    %758 = vector.broadcast %c0_i32_251 : i32 to vector<1x256xi32>
    %759 = arith.cmpi sge, %757, %758 : vector<1x256xi32>
    %c0_i32_252 = arith.constant 0 : i32
    %760 = vector.broadcast %c0_i32_252 : i32 to vector<1x256xi32>
    %761 = arith.addi %33, %760 : vector<1x256xi32>
    %c16_i32_253 = arith.constant 16 : i32
    %762 = vector.broadcast %c16_i32_253 : i32 to vector<1x256xi32>
    %763 = arith.cmpi slt, %761, %762 : vector<1x256xi32>
    %764 = arith.andi %759, %763 : vector<1x256xi1>
    %c-3_i32_254 = arith.constant -3 : i32
    %765 = vector.broadcast %c-3_i32_254 : i32 to vector<1x256xi32>
    %766 = arith.addi %36, %765 : vector<1x256xi32>
    %c0_i32_255 = arith.constant 0 : i32
    %767 = vector.broadcast %c0_i32_255 : i32 to vector<1x256xi32>
    %768 = arith.cmpi sge, %766, %767 : vector<1x256xi32>
    %769 = arith.andi %764, %768 : vector<1x256xi1>
    %c-3_i32_256 = arith.constant -3 : i32
    %770 = vector.broadcast %c-3_i32_256 : i32 to vector<1x256xi32>
    %771 = arith.addi %36, %770 : vector<1x256xi32>
    %c16_i32_257 = arith.constant 16 : i32
    %772 = vector.broadcast %c16_i32_257 : i32 to vector<1x256xi32>
    %773 = arith.cmpi slt, %771, %772 : vector<1x256xi32>
    %774 = arith.andi %769, %773 : vector<1x256xi1>
    %c3_i32_258 = arith.constant 3 : i32
    %775 = tpu.dynamic_rotate %59 by %c3_i32_258 dim 1 : vector<1x256xf32>, i32 -> vector<1x256xf32>
    %c3_i32_259 = arith.constant 3 : i32
    %776 = tpu.dynamic_rotate %61 by %c3_i32_259 dim 1 : vector<1x256xf32>, i32 -> vector<1x256xf32>
    %cst_260 = arith.constant 0.000000e+00 : f32
    %777 = vector.broadcast %cst_260 : f32 to vector<1x256xf32>
    %778 = arith.select %774, %775, %777 : vector<1x256xi1>, vector<1x256xf32>
    %cst_261 = arith.constant 0.000000e+00 : f32
    %779 = vector.broadcast %cst_261 : f32 to vector<1x256xf32>
    %780 = arith.select %774, %776, %779 : vector<1x256xi1>, vector<1x256xf32>
    %c21 = arith.constant 21 : index
    %781 = memref.load %arg2[%c21] : memref<98xf32, #tpu.memory_space<smem>>
    %782 = vector.broadcast %781 : f32 to vector<1x256xf32>
    %783 = arith.mulf %782, %778 : vector<1x256xf32>
    %784 = arith.addf %755, %783 : vector<1x256xf32>
    %c70 = arith.constant 70 : index
    %785 = memref.load %arg2[%c70] : memref<98xf32, #tpu.memory_space<smem>>
    %786 = vector.broadcast %785 : f32 to vector<1x256xf32>
    %787 = arith.mulf %786, %780 : vector<1x256xf32>
    %788 = arith.addf %784, %787 : vector<1x256xf32>
    %c0_i32_262 = arith.constant 0 : i32
    %789 = vector.broadcast %c0_i32_262 : i32 to vector<1x256xi32>
    %790 = arith.addi %33, %789 : vector<1x256xi32>
    %c0_i32_263 = arith.constant 0 : i32
    %791 = vector.broadcast %c0_i32_263 : i32 to vector<1x256xi32>
    %792 = arith.cmpi sge, %790, %791 : vector<1x256xi32>
    %c0_i32_264 = arith.constant 0 : i32
    %793 = vector.broadcast %c0_i32_264 : i32 to vector<1x256xi32>
    %794 = arith.addi %33, %793 : vector<1x256xi32>
    %c16_i32_265 = arith.constant 16 : i32
    %795 = vector.broadcast %c16_i32_265 : i32 to vector<1x256xi32>
    %796 = arith.cmpi slt, %794, %795 : vector<1x256xi32>
    %797 = arith.andi %792, %796 : vector<1x256xi1>
    %c-2_i32_266 = arith.constant -2 : i32
    %798 = vector.broadcast %c-2_i32_266 : i32 to vector<1x256xi32>
    %799 = arith.addi %36, %798 : vector<1x256xi32>
    %c0_i32_267 = arith.constant 0 : i32
    %800 = vector.broadcast %c0_i32_267 : i32 to vector<1x256xi32>
    %801 = arith.cmpi sge, %799, %800 : vector<1x256xi32>
    %802 = arith.andi %797, %801 : vector<1x256xi1>
    %c-2_i32_268 = arith.constant -2 : i32
    %803 = vector.broadcast %c-2_i32_268 : i32 to vector<1x256xi32>
    %804 = arith.addi %36, %803 : vector<1x256xi32>
    %c16_i32_269 = arith.constant 16 : i32
    %805 = vector.broadcast %c16_i32_269 : i32 to vector<1x256xi32>
    %806 = arith.cmpi slt, %804, %805 : vector<1x256xi32>
    %807 = arith.andi %802, %806 : vector<1x256xi1>
    %c2_i32_270 = arith.constant 2 : i32
    %808 = tpu.dynamic_rotate %59 by %c2_i32_270 dim 1 : vector<1x256xf32>, i32 -> vector<1x256xf32>
    %c2_i32_271 = arith.constant 2 : i32
    %809 = tpu.dynamic_rotate %61 by %c2_i32_271 dim 1 : vector<1x256xf32>, i32 -> vector<1x256xf32>
    %cst_272 = arith.constant 0.000000e+00 : f32
    %810 = vector.broadcast %cst_272 : f32 to vector<1x256xf32>
    %811 = arith.select %807, %808, %810 : vector<1x256xi1>, vector<1x256xf32>
    %cst_273 = arith.constant 0.000000e+00 : f32
    %812 = vector.broadcast %cst_273 : f32 to vector<1x256xf32>
    %813 = arith.select %807, %809, %812 : vector<1x256xi1>, vector<1x256xf32>
    %c22 = arith.constant 22 : index
    %814 = memref.load %arg2[%c22] : memref<98xf32, #tpu.memory_space<smem>>
    %815 = vector.broadcast %814 : f32 to vector<1x256xf32>
    %816 = arith.mulf %815, %811 : vector<1x256xf32>
    %817 = arith.addf %788, %816 : vector<1x256xf32>
    %c71 = arith.constant 71 : index
    %818 = memref.load %arg2[%c71] : memref<98xf32, #tpu.memory_space<smem>>
    %819 = vector.broadcast %818 : f32 to vector<1x256xf32>
    %820 = arith.mulf %819, %813 : vector<1x256xf32>
    %821 = arith.addf %817, %820 : vector<1x256xf32>
    %c0_i32_274 = arith.constant 0 : i32
    %822 = vector.broadcast %c0_i32_274 : i32 to vector<1x256xi32>
    %823 = arith.addi %33, %822 : vector<1x256xi32>
    %c0_i32_275 = arith.constant 0 : i32
    %824 = vector.broadcast %c0_i32_275 : i32 to vector<1x256xi32>
    %825 = arith.cmpi sge, %823, %824 : vector<1x256xi32>
    %c0_i32_276 = arith.constant 0 : i32
    %826 = vector.broadcast %c0_i32_276 : i32 to vector<1x256xi32>
    %827 = arith.addi %33, %826 : vector<1x256xi32>
    %c16_i32_277 = arith.constant 16 : i32
    %828 = vector.broadcast %c16_i32_277 : i32 to vector<1x256xi32>
    %829 = arith.cmpi slt, %827, %828 : vector<1x256xi32>
    %830 = arith.andi %825, %829 : vector<1x256xi1>
    %c-1_i32_278 = arith.constant -1 : i32
    %831 = vector.broadcast %c-1_i32_278 : i32 to vector<1x256xi32>
    %832 = arith.addi %36, %831 : vector<1x256xi32>
    %c0_i32_279 = arith.constant 0 : i32
    %833 = vector.broadcast %c0_i32_279 : i32 to vector<1x256xi32>
    %834 = arith.cmpi sge, %832, %833 : vector<1x256xi32>
    %835 = arith.andi %830, %834 : vector<1x256xi1>
    %c-1_i32_280 = arith.constant -1 : i32
    %836 = vector.broadcast %c-1_i32_280 : i32 to vector<1x256xi32>
    %837 = arith.addi %36, %836 : vector<1x256xi32>
    %c16_i32_281 = arith.constant 16 : i32
    %838 = vector.broadcast %c16_i32_281 : i32 to vector<1x256xi32>
    %839 = arith.cmpi slt, %837, %838 : vector<1x256xi32>
    %840 = arith.andi %835, %839 : vector<1x256xi1>
    %c1_i32_282 = arith.constant 1 : i32
    %841 = tpu.dynamic_rotate %59 by %c1_i32_282 dim 1 : vector<1x256xf32>, i32 -> vector<1x256xf32>
    %c1_i32_283 = arith.constant 1 : i32
    %842 = tpu.dynamic_rotate %61 by %c1_i32_283 dim 1 : vector<1x256xf32>, i32 -> vector<1x256xf32>
    %cst_284 = arith.constant 0.000000e+00 : f32
    %843 = vector.broadcast %cst_284 : f32 to vector<1x256xf32>
    %844 = arith.select %840, %841, %843 : vector<1x256xi1>, vector<1x256xf32>
    %cst_285 = arith.constant 0.000000e+00 : f32
    %845 = vector.broadcast %cst_285 : f32 to vector<1x256xf32>
    %846 = arith.select %840, %842, %845 : vector<1x256xi1>, vector<1x256xf32>
    %c23 = arith.constant 23 : index
    %847 = memref.load %arg2[%c23] : memref<98xf32, #tpu.memory_space<smem>>
    %848 = vector.broadcast %847 : f32 to vector<1x256xf32>
    %849 = arith.mulf %848, %844 : vector<1x256xf32>
    %850 = arith.addf %821, %849 : vector<1x256xf32>
    %c72 = arith.constant 72 : index
    %851 = memref.load %arg2[%c72] : memref<98xf32, #tpu.memory_space<smem>>
    %852 = vector.broadcast %851 : f32 to vector<1x256xf32>
    %853 = arith.mulf %852, %846 : vector<1x256xf32>
    %854 = arith.addf %850, %853 : vector<1x256xf32>
    %c0_i32_286 = arith.constant 0 : i32
    %855 = vector.broadcast %c0_i32_286 : i32 to vector<1x256xi32>
    %856 = arith.addi %33, %855 : vector<1x256xi32>
    %c0_i32_287 = arith.constant 0 : i32
    %857 = vector.broadcast %c0_i32_287 : i32 to vector<1x256xi32>
    %858 = arith.cmpi sge, %856, %857 : vector<1x256xi32>
    %c0_i32_288 = arith.constant 0 : i32
    %859 = vector.broadcast %c0_i32_288 : i32 to vector<1x256xi32>
    %860 = arith.addi %33, %859 : vector<1x256xi32>
    %c16_i32_289 = arith.constant 16 : i32
    %861 = vector.broadcast %c16_i32_289 : i32 to vector<1x256xi32>
    %862 = arith.cmpi slt, %860, %861 : vector<1x256xi32>
    %863 = arith.andi %858, %862 : vector<1x256xi1>
    %c0_i32_290 = arith.constant 0 : i32
    %864 = vector.broadcast %c0_i32_290 : i32 to vector<1x256xi32>
    %865 = arith.addi %36, %864 : vector<1x256xi32>
    %c0_i32_291 = arith.constant 0 : i32
    %866 = vector.broadcast %c0_i32_291 : i32 to vector<1x256xi32>
    %867 = arith.cmpi sge, %865, %866 : vector<1x256xi32>
    %868 = arith.andi %863, %867 : vector<1x256xi1>
    %c0_i32_292 = arith.constant 0 : i32
    %869 = vector.broadcast %c0_i32_292 : i32 to vector<1x256xi32>
    %870 = arith.addi %36, %869 : vector<1x256xi32>
    %c16_i32_293 = arith.constant 16 : i32
    %871 = vector.broadcast %c16_i32_293 : i32 to vector<1x256xi32>
    %872 = arith.cmpi slt, %870, %871 : vector<1x256xi32>
    %873 = arith.andi %868, %872 : vector<1x256xi1>
    %cst_294 = arith.constant 0.000000e+00 : f32
    %874 = vector.broadcast %cst_294 : f32 to vector<1x256xf32>
    %875 = arith.select %873, %59, %874 : vector<1x256xi1>, vector<1x256xf32>
    %cst_295 = arith.constant 0.000000e+00 : f32
    %876 = vector.broadcast %cst_295 : f32 to vector<1x256xf32>
    %877 = arith.select %873, %61, %876 : vector<1x256xi1>, vector<1x256xf32>
    %c24 = arith.constant 24 : index
    %878 = memref.load %arg2[%c24] : memref<98xf32, #tpu.memory_space<smem>>
    %879 = vector.broadcast %878 : f32 to vector<1x256xf32>
    %880 = arith.mulf %879, %875 : vector<1x256xf32>
    %881 = arith.addf %854, %880 : vector<1x256xf32>
    %c73 = arith.constant 73 : index
    %882 = memref.load %arg2[%c73] : memref<98xf32, #tpu.memory_space<smem>>
    %883 = vector.broadcast %882 : f32 to vector<1x256xf32>
    %884 = arith.mulf %883, %877 : vector<1x256xf32>
    %885 = arith.addf %881, %884 : vector<1x256xf32>
    %c0_i32_296 = arith.constant 0 : i32
    %886 = vector.broadcast %c0_i32_296 : i32 to vector<1x256xi32>
    %887 = arith.addi %33, %886 : vector<1x256xi32>
    %c0_i32_297 = arith.constant 0 : i32
    %888 = vector.broadcast %c0_i32_297 : i32 to vector<1x256xi32>
    %889 = arith.cmpi sge, %887, %888 : vector<1x256xi32>
    %c0_i32_298 = arith.constant 0 : i32
    %890 = vector.broadcast %c0_i32_298 : i32 to vector<1x256xi32>
    %891 = arith.addi %33, %890 : vector<1x256xi32>
    %c16_i32_299 = arith.constant 16 : i32
    %892 = vector.broadcast %c16_i32_299 : i32 to vector<1x256xi32>
    %893 = arith.cmpi slt, %891, %892 : vector<1x256xi32>
    %894 = arith.andi %889, %893 : vector<1x256xi1>
    %c1_i32_300 = arith.constant 1 : i32
    %895 = vector.broadcast %c1_i32_300 : i32 to vector<1x256xi32>
    %896 = arith.addi %36, %895 : vector<1x256xi32>
    %c0_i32_301 = arith.constant 0 : i32
    %897 = vector.broadcast %c0_i32_301 : i32 to vector<1x256xi32>
    %898 = arith.cmpi sge, %896, %897 : vector<1x256xi32>
    %899 = arith.andi %894, %898 : vector<1x256xi1>
    %c1_i32_302 = arith.constant 1 : i32
    %900 = vector.broadcast %c1_i32_302 : i32 to vector<1x256xi32>
    %901 = arith.addi %36, %900 : vector<1x256xi32>
    %c16_i32_303 = arith.constant 16 : i32
    %902 = vector.broadcast %c16_i32_303 : i32 to vector<1x256xi32>
    %903 = arith.cmpi slt, %901, %902 : vector<1x256xi32>
    %904 = arith.andi %899, %903 : vector<1x256xi1>
    %c255_i32 = arith.constant 255 : i32
    %905 = tpu.dynamic_rotate %59 by %c255_i32 dim 1 : vector<1x256xf32>, i32 -> vector<1x256xf32>
    %c255_i32_304 = arith.constant 255 : i32
    %906 = tpu.dynamic_rotate %61 by %c255_i32_304 dim 1 : vector<1x256xf32>, i32 -> vector<1x256xf32>
    %cst_305 = arith.constant 0.000000e+00 : f32
    %907 = vector.broadcast %cst_305 : f32 to vector<1x256xf32>
    %908 = arith.select %904, %905, %907 : vector<1x256xi1>, vector<1x256xf32>
    %cst_306 = arith.constant 0.000000e+00 : f32
    %909 = vector.broadcast %cst_306 : f32 to vector<1x256xf32>
    %910 = arith.select %904, %906, %909 : vector<1x256xi1>, vector<1x256xf32>
    %c25 = arith.constant 25 : index
    %911 = memref.load %arg2[%c25] : memref<98xf32, #tpu.memory_space<smem>>
    %912 = vector.broadcast %911 : f32 to vector<1x256xf32>
    %913 = arith.mulf %912, %908 : vector<1x256xf32>
    %914 = arith.addf %885, %913 : vector<1x256xf32>
    %c74 = arith.constant 74 : index
    %915 = memref.load %arg2[%c74] : memref<98xf32, #tpu.memory_space<smem>>
    %916 = vector.broadcast %915 : f32 to vector<1x256xf32>
    %917 = arith.mulf %916, %910 : vector<1x256xf32>
    %918 = arith.addf %914, %917 : vector<1x256xf32>
    %c0_i32_307 = arith.constant 0 : i32
    %919 = vector.broadcast %c0_i32_307 : i32 to vector<1x256xi32>
    %920 = arith.addi %33, %919 : vector<1x256xi32>
    %c0_i32_308 = arith.constant 0 : i32
    %921 = vector.broadcast %c0_i32_308 : i32 to vector<1x256xi32>
    %922 = arith.cmpi sge, %920, %921 : vector<1x256xi32>
    %c0_i32_309 = arith.constant 0 : i32
    %923 = vector.broadcast %c0_i32_309 : i32 to vector<1x256xi32>
    %924 = arith.addi %33, %923 : vector<1x256xi32>
    %c16_i32_310 = arith.constant 16 : i32
    %925 = vector.broadcast %c16_i32_310 : i32 to vector<1x256xi32>
    %926 = arith.cmpi slt, %924, %925 : vector<1x256xi32>
    %927 = arith.andi %922, %926 : vector<1x256xi1>
    %c2_i32_311 = arith.constant 2 : i32
    %928 = vector.broadcast %c2_i32_311 : i32 to vector<1x256xi32>
    %929 = arith.addi %36, %928 : vector<1x256xi32>
    %c0_i32_312 = arith.constant 0 : i32
    %930 = vector.broadcast %c0_i32_312 : i32 to vector<1x256xi32>
    %931 = arith.cmpi sge, %929, %930 : vector<1x256xi32>
    %932 = arith.andi %927, %931 : vector<1x256xi1>
    %c2_i32_313 = arith.constant 2 : i32
    %933 = vector.broadcast %c2_i32_313 : i32 to vector<1x256xi32>
    %934 = arith.addi %36, %933 : vector<1x256xi32>
    %c16_i32_314 = arith.constant 16 : i32
    %935 = vector.broadcast %c16_i32_314 : i32 to vector<1x256xi32>
    %936 = arith.cmpi slt, %934, %935 : vector<1x256xi32>
    %937 = arith.andi %932, %936 : vector<1x256xi1>
    %c254_i32 = arith.constant 254 : i32
    %938 = tpu.dynamic_rotate %59 by %c254_i32 dim 1 : vector<1x256xf32>, i32 -> vector<1x256xf32>
    %c254_i32_315 = arith.constant 254 : i32
    %939 = tpu.dynamic_rotate %61 by %c254_i32_315 dim 1 : vector<1x256xf32>, i32 -> vector<1x256xf32>
    %cst_316 = arith.constant 0.000000e+00 : f32
    %940 = vector.broadcast %cst_316 : f32 to vector<1x256xf32>
    %941 = arith.select %937, %938, %940 : vector<1x256xi1>, vector<1x256xf32>
    %cst_317 = arith.constant 0.000000e+00 : f32
    %942 = vector.broadcast %cst_317 : f32 to vector<1x256xf32>
    %943 = arith.select %937, %939, %942 : vector<1x256xi1>, vector<1x256xf32>
    %c26 = arith.constant 26 : index
    %944 = memref.load %arg2[%c26] : memref<98xf32, #tpu.memory_space<smem>>
    %945 = vector.broadcast %944 : f32 to vector<1x256xf32>
    %946 = arith.mulf %945, %941 : vector<1x256xf32>
    %947 = arith.addf %918, %946 : vector<1x256xf32>
    %c75 = arith.constant 75 : index
    %948 = memref.load %arg2[%c75] : memref<98xf32, #tpu.memory_space<smem>>
    %949 = vector.broadcast %948 : f32 to vector<1x256xf32>
    %950 = arith.mulf %949, %943 : vector<1x256xf32>
    %951 = arith.addf %947, %950 : vector<1x256xf32>
    %c0_i32_318 = arith.constant 0 : i32
    %952 = vector.broadcast %c0_i32_318 : i32 to vector<1x256xi32>
    %953 = arith.addi %33, %952 : vector<1x256xi32>
    %c0_i32_319 = arith.constant 0 : i32
    %954 = vector.broadcast %c0_i32_319 : i32 to vector<1x256xi32>
    %955 = arith.cmpi sge, %953, %954 : vector<1x256xi32>
    %c0_i32_320 = arith.constant 0 : i32
    %956 = vector.broadcast %c0_i32_320 : i32 to vector<1x256xi32>
    %957 = arith.addi %33, %956 : vector<1x256xi32>
    %c16_i32_321 = arith.constant 16 : i32
    %958 = vector.broadcast %c16_i32_321 : i32 to vector<1x256xi32>
    %959 = arith.cmpi slt, %957, %958 : vector<1x256xi32>
    %960 = arith.andi %955, %959 : vector<1x256xi1>
    %c3_i32_322 = arith.constant 3 : i32
    %961 = vector.broadcast %c3_i32_322 : i32 to vector<1x256xi32>
    %962 = arith.addi %36, %961 : vector<1x256xi32>
    %c0_i32_323 = arith.constant 0 : i32
    %963 = vector.broadcast %c0_i32_323 : i32 to vector<1x256xi32>
    %964 = arith.cmpi sge, %962, %963 : vector<1x256xi32>
    %965 = arith.andi %960, %964 : vector<1x256xi1>
    %c3_i32_324 = arith.constant 3 : i32
    %966 = vector.broadcast %c3_i32_324 : i32 to vector<1x256xi32>
    %967 = arith.addi %36, %966 : vector<1x256xi32>
    %c16_i32_325 = arith.constant 16 : i32
    %968 = vector.broadcast %c16_i32_325 : i32 to vector<1x256xi32>
    %969 = arith.cmpi slt, %967, %968 : vector<1x256xi32>
    %970 = arith.andi %965, %969 : vector<1x256xi1>
    %c253_i32 = arith.constant 253 : i32
    %971 = tpu.dynamic_rotate %59 by %c253_i32 dim 1 : vector<1x256xf32>, i32 -> vector<1x256xf32>
    %c253_i32_326 = arith.constant 253 : i32
    %972 = tpu.dynamic_rotate %61 by %c253_i32_326 dim 1 : vector<1x256xf32>, i32 -> vector<1x256xf32>
    %cst_327 = arith.constant 0.000000e+00 : f32
    %973 = vector.broadcast %cst_327 : f32 to vector<1x256xf32>
    %974 = arith.select %970, %971, %973 : vector<1x256xi1>, vector<1x256xf32>
    %cst_328 = arith.constant 0.000000e+00 : f32
    %975 = vector.broadcast %cst_328 : f32 to vector<1x256xf32>
    %976 = arith.select %970, %972, %975 : vector<1x256xi1>, vector<1x256xf32>
    %c27 = arith.constant 27 : index
    %977 = memref.load %arg2[%c27] : memref<98xf32, #tpu.memory_space<smem>>
    %978 = vector.broadcast %977 : f32 to vector<1x256xf32>
    %979 = arith.mulf %978, %974 : vector<1x256xf32>
    %980 = arith.addf %951, %979 : vector<1x256xf32>
    %c76 = arith.constant 76 : index
    %981 = memref.load %arg2[%c76] : memref<98xf32, #tpu.memory_space<smem>>
    %982 = vector.broadcast %981 : f32 to vector<1x256xf32>
    %983 = arith.mulf %982, %976 : vector<1x256xf32>
    %984 = arith.addf %980, %983 : vector<1x256xf32>
    %c1_i32_329 = arith.constant 1 : i32
    %985 = vector.broadcast %c1_i32_329 : i32 to vector<1x256xi32>
    %986 = arith.addi %33, %985 : vector<1x256xi32>
    %c0_i32_330 = arith.constant 0 : i32
    %987 = vector.broadcast %c0_i32_330 : i32 to vector<1x256xi32>
    %988 = arith.cmpi sge, %986, %987 : vector<1x256xi32>
    %c1_i32_331 = arith.constant 1 : i32
    %989 = vector.broadcast %c1_i32_331 : i32 to vector<1x256xi32>
    %990 = arith.addi %33, %989 : vector<1x256xi32>
    %c16_i32_332 = arith.constant 16 : i32
    %991 = vector.broadcast %c16_i32_332 : i32 to vector<1x256xi32>
    %992 = arith.cmpi slt, %990, %991 : vector<1x256xi32>
    %993 = arith.andi %988, %992 : vector<1x256xi1>
    %c-3_i32_333 = arith.constant -3 : i32
    %994 = vector.broadcast %c-3_i32_333 : i32 to vector<1x256xi32>
    %995 = arith.addi %36, %994 : vector<1x256xi32>
    %c0_i32_334 = arith.constant 0 : i32
    %996 = vector.broadcast %c0_i32_334 : i32 to vector<1x256xi32>
    %997 = arith.cmpi sge, %995, %996 : vector<1x256xi32>
    %998 = arith.andi %993, %997 : vector<1x256xi1>
    %c-3_i32_335 = arith.constant -3 : i32
    %999 = vector.broadcast %c-3_i32_335 : i32 to vector<1x256xi32>
    %1000 = arith.addi %36, %999 : vector<1x256xi32>
    %c16_i32_336 = arith.constant 16 : i32
    %1001 = vector.broadcast %c16_i32_336 : i32 to vector<1x256xi32>
    %1002 = arith.cmpi slt, %1000, %1001 : vector<1x256xi32>
    %1003 = arith.andi %998, %1002 : vector<1x256xi1>
    %c243_i32 = arith.constant 243 : i32
    %1004 = tpu.dynamic_rotate %59 by %c243_i32 dim 1 : vector<1x256xf32>, i32 -> vector<1x256xf32>
    %c243_i32_337 = arith.constant 243 : i32
    %1005 = tpu.dynamic_rotate %61 by %c243_i32_337 dim 1 : vector<1x256xf32>, i32 -> vector<1x256xf32>
    %cst_338 = arith.constant 0.000000e+00 : f32
    %1006 = vector.broadcast %cst_338 : f32 to vector<1x256xf32>
    %1007 = arith.select %1003, %1004, %1006 : vector<1x256xi1>, vector<1x256xf32>
    %cst_339 = arith.constant 0.000000e+00 : f32
    %1008 = vector.broadcast %cst_339 : f32 to vector<1x256xf32>
    %1009 = arith.select %1003, %1005, %1008 : vector<1x256xi1>, vector<1x256xf32>
    %c28 = arith.constant 28 : index
    %1010 = memref.load %arg2[%c28] : memref<98xf32, #tpu.memory_space<smem>>
    %1011 = vector.broadcast %1010 : f32 to vector<1x256xf32>
    %1012 = arith.mulf %1011, %1007 : vector<1x256xf32>
    %1013 = arith.addf %984, %1012 : vector<1x256xf32>
    %c77 = arith.constant 77 : index
    %1014 = memref.load %arg2[%c77] : memref<98xf32, #tpu.memory_space<smem>>
    %1015 = vector.broadcast %1014 : f32 to vector<1x256xf32>
    %1016 = arith.mulf %1015, %1009 : vector<1x256xf32>
    %1017 = arith.addf %1013, %1016 : vector<1x256xf32>
    %c1_i32_340 = arith.constant 1 : i32
    %1018 = vector.broadcast %c1_i32_340 : i32 to vector<1x256xi32>
    %1019 = arith.addi %33, %1018 : vector<1x256xi32>
    %c0_i32_341 = arith.constant 0 : i32
    %1020 = vector.broadcast %c0_i32_341 : i32 to vector<1x256xi32>
    %1021 = arith.cmpi sge, %1019, %1020 : vector<1x256xi32>
    %c1_i32_342 = arith.constant 1 : i32
    %1022 = vector.broadcast %c1_i32_342 : i32 to vector<1x256xi32>
    %1023 = arith.addi %33, %1022 : vector<1x256xi32>
    %c16_i32_343 = arith.constant 16 : i32
    %1024 = vector.broadcast %c16_i32_343 : i32 to vector<1x256xi32>
    %1025 = arith.cmpi slt, %1023, %1024 : vector<1x256xi32>
    %1026 = arith.andi %1021, %1025 : vector<1x256xi1>
    %c-2_i32_344 = arith.constant -2 : i32
    %1027 = vector.broadcast %c-2_i32_344 : i32 to vector<1x256xi32>
    %1028 = arith.addi %36, %1027 : vector<1x256xi32>
    %c0_i32_345 = arith.constant 0 : i32
    %1029 = vector.broadcast %c0_i32_345 : i32 to vector<1x256xi32>
    %1030 = arith.cmpi sge, %1028, %1029 : vector<1x256xi32>
    %1031 = arith.andi %1026, %1030 : vector<1x256xi1>
    %c-2_i32_346 = arith.constant -2 : i32
    %1032 = vector.broadcast %c-2_i32_346 : i32 to vector<1x256xi32>
    %1033 = arith.addi %36, %1032 : vector<1x256xi32>
    %c16_i32_347 = arith.constant 16 : i32
    %1034 = vector.broadcast %c16_i32_347 : i32 to vector<1x256xi32>
    %1035 = arith.cmpi slt, %1033, %1034 : vector<1x256xi32>
    %1036 = arith.andi %1031, %1035 : vector<1x256xi1>
    %c242_i32 = arith.constant 242 : i32
    %1037 = tpu.dynamic_rotate %59 by %c242_i32 dim 1 : vector<1x256xf32>, i32 -> vector<1x256xf32>
    %c242_i32_348 = arith.constant 242 : i32
    %1038 = tpu.dynamic_rotate %61 by %c242_i32_348 dim 1 : vector<1x256xf32>, i32 -> vector<1x256xf32>
    %cst_349 = arith.constant 0.000000e+00 : f32
    %1039 = vector.broadcast %cst_349 : f32 to vector<1x256xf32>
    %1040 = arith.select %1036, %1037, %1039 : vector<1x256xi1>, vector<1x256xf32>
    %cst_350 = arith.constant 0.000000e+00 : f32
    %1041 = vector.broadcast %cst_350 : f32 to vector<1x256xf32>
    %1042 = arith.select %1036, %1038, %1041 : vector<1x256xi1>, vector<1x256xf32>
    %c29 = arith.constant 29 : index
    %1043 = memref.load %arg2[%c29] : memref<98xf32, #tpu.memory_space<smem>>
    %1044 = vector.broadcast %1043 : f32 to vector<1x256xf32>
    %1045 = arith.mulf %1044, %1040 : vector<1x256xf32>
    %1046 = arith.addf %1017, %1045 : vector<1x256xf32>
    %c78 = arith.constant 78 : index
    %1047 = memref.load %arg2[%c78] : memref<98xf32, #tpu.memory_space<smem>>
    %1048 = vector.broadcast %1047 : f32 to vector<1x256xf32>
    %1049 = arith.mulf %1048, %1042 : vector<1x256xf32>
    %1050 = arith.addf %1046, %1049 : vector<1x256xf32>
    %c1_i32_351 = arith.constant 1 : i32
    %1051 = vector.broadcast %c1_i32_351 : i32 to vector<1x256xi32>
    %1052 = arith.addi %33, %1051 : vector<1x256xi32>
    %c0_i32_352 = arith.constant 0 : i32
    %1053 = vector.broadcast %c0_i32_352 : i32 to vector<1x256xi32>
    %1054 = arith.cmpi sge, %1052, %1053 : vector<1x256xi32>
    %c1_i32_353 = arith.constant 1 : i32
    %1055 = vector.broadcast %c1_i32_353 : i32 to vector<1x256xi32>
    %1056 = arith.addi %33, %1055 : vector<1x256xi32>
    %c16_i32_354 = arith.constant 16 : i32
    %1057 = vector.broadcast %c16_i32_354 : i32 to vector<1x256xi32>
    %1058 = arith.cmpi slt, %1056, %1057 : vector<1x256xi32>
    %1059 = arith.andi %1054, %1058 : vector<1x256xi1>
    %c-1_i32_355 = arith.constant -1 : i32
    %1060 = vector.broadcast %c-1_i32_355 : i32 to vector<1x256xi32>
    %1061 = arith.addi %36, %1060 : vector<1x256xi32>
    %c0_i32_356 = arith.constant 0 : i32
    %1062 = vector.broadcast %c0_i32_356 : i32 to vector<1x256xi32>
    %1063 = arith.cmpi sge, %1061, %1062 : vector<1x256xi32>
    %1064 = arith.andi %1059, %1063 : vector<1x256xi1>
    %c-1_i32_357 = arith.constant -1 : i32
    %1065 = vector.broadcast %c-1_i32_357 : i32 to vector<1x256xi32>
    %1066 = arith.addi %36, %1065 : vector<1x256xi32>
    %c16_i32_358 = arith.constant 16 : i32
    %1067 = vector.broadcast %c16_i32_358 : i32 to vector<1x256xi32>
    %1068 = arith.cmpi slt, %1066, %1067 : vector<1x256xi32>
    %1069 = arith.andi %1064, %1068 : vector<1x256xi1>
    %c241_i32 = arith.constant 241 : i32
    %1070 = tpu.dynamic_rotate %59 by %c241_i32 dim 1 : vector<1x256xf32>, i32 -> vector<1x256xf32>
    %c241_i32_359 = arith.constant 241 : i32
    %1071 = tpu.dynamic_rotate %61 by %c241_i32_359 dim 1 : vector<1x256xf32>, i32 -> vector<1x256xf32>
    %cst_360 = arith.constant 0.000000e+00 : f32
    %1072 = vector.broadcast %cst_360 : f32 to vector<1x256xf32>
    %1073 = arith.select %1069, %1070, %1072 : vector<1x256xi1>, vector<1x256xf32>
    %cst_361 = arith.constant 0.000000e+00 : f32
    %1074 = vector.broadcast %cst_361 : f32 to vector<1x256xf32>
    %1075 = arith.select %1069, %1071, %1074 : vector<1x256xi1>, vector<1x256xf32>
    %c30 = arith.constant 30 : index
    %1076 = memref.load %arg2[%c30] : memref<98xf32, #tpu.memory_space<smem>>
    %1077 = vector.broadcast %1076 : f32 to vector<1x256xf32>
    %1078 = arith.mulf %1077, %1073 : vector<1x256xf32>
    %1079 = arith.addf %1050, %1078 : vector<1x256xf32>
    %c79 = arith.constant 79 : index
    %1080 = memref.load %arg2[%c79] : memref<98xf32, #tpu.memory_space<smem>>
    %1081 = vector.broadcast %1080 : f32 to vector<1x256xf32>
    %1082 = arith.mulf %1081, %1075 : vector<1x256xf32>
    %1083 = arith.addf %1079, %1082 : vector<1x256xf32>
    %c1_i32_362 = arith.constant 1 : i32
    %1084 = vector.broadcast %c1_i32_362 : i32 to vector<1x256xi32>
    %1085 = arith.addi %33, %1084 : vector<1x256xi32>
    %c0_i32_363 = arith.constant 0 : i32
    %1086 = vector.broadcast %c0_i32_363 : i32 to vector<1x256xi32>
    %1087 = arith.cmpi sge, %1085, %1086 : vector<1x256xi32>
    %c1_i32_364 = arith.constant 1 : i32
    %1088 = vector.broadcast %c1_i32_364 : i32 to vector<1x256xi32>
    %1089 = arith.addi %33, %1088 : vector<1x256xi32>
    %c16_i32_365 = arith.constant 16 : i32
    %1090 = vector.broadcast %c16_i32_365 : i32 to vector<1x256xi32>
    %1091 = arith.cmpi slt, %1089, %1090 : vector<1x256xi32>
    %1092 = arith.andi %1087, %1091 : vector<1x256xi1>
    %c0_i32_366 = arith.constant 0 : i32
    %1093 = vector.broadcast %c0_i32_366 : i32 to vector<1x256xi32>
    %1094 = arith.addi %36, %1093 : vector<1x256xi32>
    %c0_i32_367 = arith.constant 0 : i32
    %1095 = vector.broadcast %c0_i32_367 : i32 to vector<1x256xi32>
    %1096 = arith.cmpi sge, %1094, %1095 : vector<1x256xi32>
    %1097 = arith.andi %1092, %1096 : vector<1x256xi1>
    %c0_i32_368 = arith.constant 0 : i32
    %1098 = vector.broadcast %c0_i32_368 : i32 to vector<1x256xi32>
    %1099 = arith.addi %36, %1098 : vector<1x256xi32>
    %c16_i32_369 = arith.constant 16 : i32
    %1100 = vector.broadcast %c16_i32_369 : i32 to vector<1x256xi32>
    %1101 = arith.cmpi slt, %1099, %1100 : vector<1x256xi32>
    %1102 = arith.andi %1097, %1101 : vector<1x256xi1>
    %c240_i32 = arith.constant 240 : i32
    %1103 = tpu.dynamic_rotate %59 by %c240_i32 dim 1 : vector<1x256xf32>, i32 -> vector<1x256xf32>
    %c240_i32_370 = arith.constant 240 : i32
    %1104 = tpu.dynamic_rotate %61 by %c240_i32_370 dim 1 : vector<1x256xf32>, i32 -> vector<1x256xf32>
    %cst_371 = arith.constant 0.000000e+00 : f32
    %1105 = vector.broadcast %cst_371 : f32 to vector<1x256xf32>
    %1106 = arith.select %1102, %1103, %1105 : vector<1x256xi1>, vector<1x256xf32>
    %cst_372 = arith.constant 0.000000e+00 : f32
    %1107 = vector.broadcast %cst_372 : f32 to vector<1x256xf32>
    %1108 = arith.select %1102, %1104, %1107 : vector<1x256xi1>, vector<1x256xf32>
    %c31 = arith.constant 31 : index
    %1109 = memref.load %arg2[%c31] : memref<98xf32, #tpu.memory_space<smem>>
    %1110 = vector.broadcast %1109 : f32 to vector<1x256xf32>
    %1111 = arith.mulf %1110, %1106 : vector<1x256xf32>
    %1112 = arith.addf %1083, %1111 : vector<1x256xf32>
    %c80 = arith.constant 80 : index
    %1113 = memref.load %arg2[%c80] : memref<98xf32, #tpu.memory_space<smem>>
    %1114 = vector.broadcast %1113 : f32 to vector<1x256xf32>
    %1115 = arith.mulf %1114, %1108 : vector<1x256xf32>
    %1116 = arith.addf %1112, %1115 : vector<1x256xf32>
    %c1_i32_373 = arith.constant 1 : i32
    %1117 = vector.broadcast %c1_i32_373 : i32 to vector<1x256xi32>
    %1118 = arith.addi %33, %1117 : vector<1x256xi32>
    %c0_i32_374 = arith.constant 0 : i32
    %1119 = vector.broadcast %c0_i32_374 : i32 to vector<1x256xi32>
    %1120 = arith.cmpi sge, %1118, %1119 : vector<1x256xi32>
    %c1_i32_375 = arith.constant 1 : i32
    %1121 = vector.broadcast %c1_i32_375 : i32 to vector<1x256xi32>
    %1122 = arith.addi %33, %1121 : vector<1x256xi32>
    %c16_i32_376 = arith.constant 16 : i32
    %1123 = vector.broadcast %c16_i32_376 : i32 to vector<1x256xi32>
    %1124 = arith.cmpi slt, %1122, %1123 : vector<1x256xi32>
    %1125 = arith.andi %1120, %1124 : vector<1x256xi1>
    %c1_i32_377 = arith.constant 1 : i32
    %1126 = vector.broadcast %c1_i32_377 : i32 to vector<1x256xi32>
    %1127 = arith.addi %36, %1126 : vector<1x256xi32>
    %c0_i32_378 = arith.constant 0 : i32
    %1128 = vector.broadcast %c0_i32_378 : i32 to vector<1x256xi32>
    %1129 = arith.cmpi sge, %1127, %1128 : vector<1x256xi32>
    %1130 = arith.andi %1125, %1129 : vector<1x256xi1>
    %c1_i32_379 = arith.constant 1 : i32
    %1131 = vector.broadcast %c1_i32_379 : i32 to vector<1x256xi32>
    %1132 = arith.addi %36, %1131 : vector<1x256xi32>
    %c16_i32_380 = arith.constant 16 : i32
    %1133 = vector.broadcast %c16_i32_380 : i32 to vector<1x256xi32>
    %1134 = arith.cmpi slt, %1132, %1133 : vector<1x256xi32>
    %1135 = arith.andi %1130, %1134 : vector<1x256xi1>
    %c239_i32 = arith.constant 239 : i32
    %1136 = tpu.dynamic_rotate %59 by %c239_i32 dim 1 : vector<1x256xf32>, i32 -> vector<1x256xf32>
    %c239_i32_381 = arith.constant 239 : i32
    %1137 = tpu.dynamic_rotate %61 by %c239_i32_381 dim 1 : vector<1x256xf32>, i32 -> vector<1x256xf32>
    %cst_382 = arith.constant 0.000000e+00 : f32
    %1138 = vector.broadcast %cst_382 : f32 to vector<1x256xf32>
    %1139 = arith.select %1135, %1136, %1138 : vector<1x256xi1>, vector<1x256xf32>
    %cst_383 = arith.constant 0.000000e+00 : f32
    %1140 = vector.broadcast %cst_383 : f32 to vector<1x256xf32>
    %1141 = arith.select %1135, %1137, %1140 : vector<1x256xi1>, vector<1x256xf32>
    %c32 = arith.constant 32 : index
    %1142 = memref.load %arg2[%c32] : memref<98xf32, #tpu.memory_space<smem>>
    %1143 = vector.broadcast %1142 : f32 to vector<1x256xf32>
    %1144 = arith.mulf %1143, %1139 : vector<1x256xf32>
    %1145 = arith.addf %1116, %1144 : vector<1x256xf32>
    %c81 = arith.constant 81 : index
    %1146 = memref.load %arg2[%c81] : memref<98xf32, #tpu.memory_space<smem>>
    %1147 = vector.broadcast %1146 : f32 to vector<1x256xf32>
    %1148 = arith.mulf %1147, %1141 : vector<1x256xf32>
    %1149 = arith.addf %1145, %1148 : vector<1x256xf32>
    %c1_i32_384 = arith.constant 1 : i32
    %1150 = vector.broadcast %c1_i32_384 : i32 to vector<1x256xi32>
    %1151 = arith.addi %33, %1150 : vector<1x256xi32>
    %c0_i32_385 = arith.constant 0 : i32
    %1152 = vector.broadcast %c0_i32_385 : i32 to vector<1x256xi32>
    %1153 = arith.cmpi sge, %1151, %1152 : vector<1x256xi32>
    %c1_i32_386 = arith.constant 1 : i32
    %1154 = vector.broadcast %c1_i32_386 : i32 to vector<1x256xi32>
    %1155 = arith.addi %33, %1154 : vector<1x256xi32>
    %c16_i32_387 = arith.constant 16 : i32
    %1156 = vector.broadcast %c16_i32_387 : i32 to vector<1x256xi32>
    %1157 = arith.cmpi slt, %1155, %1156 : vector<1x256xi32>
    %1158 = arith.andi %1153, %1157 : vector<1x256xi1>
    %c2_i32_388 = arith.constant 2 : i32
    %1159 = vector.broadcast %c2_i32_388 : i32 to vector<1x256xi32>
    %1160 = arith.addi %36, %1159 : vector<1x256xi32>
    %c0_i32_389 = arith.constant 0 : i32
    %1161 = vector.broadcast %c0_i32_389 : i32 to vector<1x256xi32>
    %1162 = arith.cmpi sge, %1160, %1161 : vector<1x256xi32>
    %1163 = arith.andi %1158, %1162 : vector<1x256xi1>
    %c2_i32_390 = arith.constant 2 : i32
    %1164 = vector.broadcast %c2_i32_390 : i32 to vector<1x256xi32>
    %1165 = arith.addi %36, %1164 : vector<1x256xi32>
    %c16_i32_391 = arith.constant 16 : i32
    %1166 = vector.broadcast %c16_i32_391 : i32 to vector<1x256xi32>
    %1167 = arith.cmpi slt, %1165, %1166 : vector<1x256xi32>
    %1168 = arith.andi %1163, %1167 : vector<1x256xi1>
    %c238_i32 = arith.constant 238 : i32
    %1169 = tpu.dynamic_rotate %59 by %c238_i32 dim 1 : vector<1x256xf32>, i32 -> vector<1x256xf32>
    %c238_i32_392 = arith.constant 238 : i32
    %1170 = tpu.dynamic_rotate %61 by %c238_i32_392 dim 1 : vector<1x256xf32>, i32 -> vector<1x256xf32>
    %cst_393 = arith.constant 0.000000e+00 : f32
    %1171 = vector.broadcast %cst_393 : f32 to vector<1x256xf32>
    %1172 = arith.select %1168, %1169, %1171 : vector<1x256xi1>, vector<1x256xf32>
    %cst_394 = arith.constant 0.000000e+00 : f32
    %1173 = vector.broadcast %cst_394 : f32 to vector<1x256xf32>
    %1174 = arith.select %1168, %1170, %1173 : vector<1x256xi1>, vector<1x256xf32>
    %c33 = arith.constant 33 : index
    %1175 = memref.load %arg2[%c33] : memref<98xf32, #tpu.memory_space<smem>>
    %1176 = vector.broadcast %1175 : f32 to vector<1x256xf32>
    %1177 = arith.mulf %1176, %1172 : vector<1x256xf32>
    %1178 = arith.addf %1149, %1177 : vector<1x256xf32>
    %c82 = arith.constant 82 : index
    %1179 = memref.load %arg2[%c82] : memref<98xf32, #tpu.memory_space<smem>>
    %1180 = vector.broadcast %1179 : f32 to vector<1x256xf32>
    %1181 = arith.mulf %1180, %1174 : vector<1x256xf32>
    %1182 = arith.addf %1178, %1181 : vector<1x256xf32>
    %c1_i32_395 = arith.constant 1 : i32
    %1183 = vector.broadcast %c1_i32_395 : i32 to vector<1x256xi32>
    %1184 = arith.addi %33, %1183 : vector<1x256xi32>
    %c0_i32_396 = arith.constant 0 : i32
    %1185 = vector.broadcast %c0_i32_396 : i32 to vector<1x256xi32>
    %1186 = arith.cmpi sge, %1184, %1185 : vector<1x256xi32>
    %c1_i32_397 = arith.constant 1 : i32
    %1187 = vector.broadcast %c1_i32_397 : i32 to vector<1x256xi32>
    %1188 = arith.addi %33, %1187 : vector<1x256xi32>
    %c16_i32_398 = arith.constant 16 : i32
    %1189 = vector.broadcast %c16_i32_398 : i32 to vector<1x256xi32>
    %1190 = arith.cmpi slt, %1188, %1189 : vector<1x256xi32>
    %1191 = arith.andi %1186, %1190 : vector<1x256xi1>
    %c3_i32_399 = arith.constant 3 : i32
    %1192 = vector.broadcast %c3_i32_399 : i32 to vector<1x256xi32>
    %1193 = arith.addi %36, %1192 : vector<1x256xi32>
    %c0_i32_400 = arith.constant 0 : i32
    %1194 = vector.broadcast %c0_i32_400 : i32 to vector<1x256xi32>
    %1195 = arith.cmpi sge, %1193, %1194 : vector<1x256xi32>
    %1196 = arith.andi %1191, %1195 : vector<1x256xi1>
    %c3_i32_401 = arith.constant 3 : i32
    %1197 = vector.broadcast %c3_i32_401 : i32 to vector<1x256xi32>
    %1198 = arith.addi %36, %1197 : vector<1x256xi32>
    %c16_i32_402 = arith.constant 16 : i32
    %1199 = vector.broadcast %c16_i32_402 : i32 to vector<1x256xi32>
    %1200 = arith.cmpi slt, %1198, %1199 : vector<1x256xi32>
    %1201 = arith.andi %1196, %1200 : vector<1x256xi1>
    %c237_i32 = arith.constant 237 : i32
    %1202 = tpu.dynamic_rotate %59 by %c237_i32 dim 1 : vector<1x256xf32>, i32 -> vector<1x256xf32>
    %c237_i32_403 = arith.constant 237 : i32
    %1203 = tpu.dynamic_rotate %61 by %c237_i32_403 dim 1 : vector<1x256xf32>, i32 -> vector<1x256xf32>
    %cst_404 = arith.constant 0.000000e+00 : f32
    %1204 = vector.broadcast %cst_404 : f32 to vector<1x256xf32>
    %1205 = arith.select %1201, %1202, %1204 : vector<1x256xi1>, vector<1x256xf32>
    %cst_405 = arith.constant 0.000000e+00 : f32
    %1206 = vector.broadcast %cst_405 : f32 to vector<1x256xf32>
    %1207 = arith.select %1201, %1203, %1206 : vector<1x256xi1>, vector<1x256xf32>
    %c34 = arith.constant 34 : index
    %1208 = memref.load %arg2[%c34] : memref<98xf32, #tpu.memory_space<smem>>
    %1209 = vector.broadcast %1208 : f32 to vector<1x256xf32>
    %1210 = arith.mulf %1209, %1205 : vector<1x256xf32>
    %1211 = arith.addf %1182, %1210 : vector<1x256xf32>
    %c83 = arith.constant 83 : index
    %1212 = memref.load %arg2[%c83] : memref<98xf32, #tpu.memory_space<smem>>
    %1213 = vector.broadcast %1212 : f32 to vector<1x256xf32>
    %1214 = arith.mulf %1213, %1207 : vector<1x256xf32>
    %1215 = arith.addf %1211, %1214 : vector<1x256xf32>
    %c2_i32_406 = arith.constant 2 : i32
    %1216 = vector.broadcast %c2_i32_406 : i32 to vector<1x256xi32>
    %1217 = arith.addi %33, %1216 : vector<1x256xi32>
    %c0_i32_407 = arith.constant 0 : i32
    %1218 = vector.broadcast %c0_i32_407 : i32 to vector<1x256xi32>
    %1219 = arith.cmpi sge, %1217, %1218 : vector<1x256xi32>
    %c2_i32_408 = arith.constant 2 : i32
    %1220 = vector.broadcast %c2_i32_408 : i32 to vector<1x256xi32>
    %1221 = arith.addi %33, %1220 : vector<1x256xi32>
    %c16_i32_409 = arith.constant 16 : i32
    %1222 = vector.broadcast %c16_i32_409 : i32 to vector<1x256xi32>
    %1223 = arith.cmpi slt, %1221, %1222 : vector<1x256xi32>
    %1224 = arith.andi %1219, %1223 : vector<1x256xi1>
    %c-3_i32_410 = arith.constant -3 : i32
    %1225 = vector.broadcast %c-3_i32_410 : i32 to vector<1x256xi32>
    %1226 = arith.addi %36, %1225 : vector<1x256xi32>
    %c0_i32_411 = arith.constant 0 : i32
    %1227 = vector.broadcast %c0_i32_411 : i32 to vector<1x256xi32>
    %1228 = arith.cmpi sge, %1226, %1227 : vector<1x256xi32>
    %1229 = arith.andi %1224, %1228 : vector<1x256xi1>
    %c-3_i32_412 = arith.constant -3 : i32
    %1230 = vector.broadcast %c-3_i32_412 : i32 to vector<1x256xi32>
    %1231 = arith.addi %36, %1230 : vector<1x256xi32>
    %c16_i32_413 = arith.constant 16 : i32
    %1232 = vector.broadcast %c16_i32_413 : i32 to vector<1x256xi32>
    %1233 = arith.cmpi slt, %1231, %1232 : vector<1x256xi32>
    %1234 = arith.andi %1229, %1233 : vector<1x256xi1>
    %c227_i32 = arith.constant 227 : i32
    %1235 = tpu.dynamic_rotate %59 by %c227_i32 dim 1 : vector<1x256xf32>, i32 -> vector<1x256xf32>
    %c227_i32_414 = arith.constant 227 : i32
    %1236 = tpu.dynamic_rotate %61 by %c227_i32_414 dim 1 : vector<1x256xf32>, i32 -> vector<1x256xf32>
    %cst_415 = arith.constant 0.000000e+00 : f32
    %1237 = vector.broadcast %cst_415 : f32 to vector<1x256xf32>
    %1238 = arith.select %1234, %1235, %1237 : vector<1x256xi1>, vector<1x256xf32>
    %cst_416 = arith.constant 0.000000e+00 : f32
    %1239 = vector.broadcast %cst_416 : f32 to vector<1x256xf32>
    %1240 = arith.select %1234, %1236, %1239 : vector<1x256xi1>, vector<1x256xf32>
    %c35 = arith.constant 35 : index
    %1241 = memref.load %arg2[%c35] : memref<98xf32, #tpu.memory_space<smem>>
    %1242 = vector.broadcast %1241 : f32 to vector<1x256xf32>
    %1243 = arith.mulf %1242, %1238 : vector<1x256xf32>
    %1244 = arith.addf %1215, %1243 : vector<1x256xf32>
    %c84 = arith.constant 84 : index
    %1245 = memref.load %arg2[%c84] : memref<98xf32, #tpu.memory_space<smem>>
    %1246 = vector.broadcast %1245 : f32 to vector<1x256xf32>
    %1247 = arith.mulf %1246, %1240 : vector<1x256xf32>
    %1248 = arith.addf %1244, %1247 : vector<1x256xf32>
    %c2_i32_417 = arith.constant 2 : i32
    %1249 = vector.broadcast %c2_i32_417 : i32 to vector<1x256xi32>
    %1250 = arith.addi %33, %1249 : vector<1x256xi32>
    %c0_i32_418 = arith.constant 0 : i32
    %1251 = vector.broadcast %c0_i32_418 : i32 to vector<1x256xi32>
    %1252 = arith.cmpi sge, %1250, %1251 : vector<1x256xi32>
    %c2_i32_419 = arith.constant 2 : i32
    %1253 = vector.broadcast %c2_i32_419 : i32 to vector<1x256xi32>
    %1254 = arith.addi %33, %1253 : vector<1x256xi32>
    %c16_i32_420 = arith.constant 16 : i32
    %1255 = vector.broadcast %c16_i32_420 : i32 to vector<1x256xi32>
    %1256 = arith.cmpi slt, %1254, %1255 : vector<1x256xi32>
    %1257 = arith.andi %1252, %1256 : vector<1x256xi1>
    %c-2_i32_421 = arith.constant -2 : i32
    %1258 = vector.broadcast %c-2_i32_421 : i32 to vector<1x256xi32>
    %1259 = arith.addi %36, %1258 : vector<1x256xi32>
    %c0_i32_422 = arith.constant 0 : i32
    %1260 = vector.broadcast %c0_i32_422 : i32 to vector<1x256xi32>
    %1261 = arith.cmpi sge, %1259, %1260 : vector<1x256xi32>
    %1262 = arith.andi %1257, %1261 : vector<1x256xi1>
    %c-2_i32_423 = arith.constant -2 : i32
    %1263 = vector.broadcast %c-2_i32_423 : i32 to vector<1x256xi32>
    %1264 = arith.addi %36, %1263 : vector<1x256xi32>
    %c16_i32_424 = arith.constant 16 : i32
    %1265 = vector.broadcast %c16_i32_424 : i32 to vector<1x256xi32>
    %1266 = arith.cmpi slt, %1264, %1265 : vector<1x256xi32>
    %1267 = arith.andi %1262, %1266 : vector<1x256xi1>
    %c226_i32 = arith.constant 226 : i32
    %1268 = tpu.dynamic_rotate %59 by %c226_i32 dim 1 : vector<1x256xf32>, i32 -> vector<1x256xf32>
    %c226_i32_425 = arith.constant 226 : i32
    %1269 = tpu.dynamic_rotate %61 by %c226_i32_425 dim 1 : vector<1x256xf32>, i32 -> vector<1x256xf32>
    %cst_426 = arith.constant 0.000000e+00 : f32
    %1270 = vector.broadcast %cst_426 : f32 to vector<1x256xf32>
    %1271 = arith.select %1267, %1268, %1270 : vector<1x256xi1>, vector<1x256xf32>
    %cst_427 = arith.constant 0.000000e+00 : f32
    %1272 = vector.broadcast %cst_427 : f32 to vector<1x256xf32>
    %1273 = arith.select %1267, %1269, %1272 : vector<1x256xi1>, vector<1x256xf32>
    %c36 = arith.constant 36 : index
    %1274 = memref.load %arg2[%c36] : memref<98xf32, #tpu.memory_space<smem>>
    %1275 = vector.broadcast %1274 : f32 to vector<1x256xf32>
    %1276 = arith.mulf %1275, %1271 : vector<1x256xf32>
    %1277 = arith.addf %1248, %1276 : vector<1x256xf32>
    %c85 = arith.constant 85 : index
    %1278 = memref.load %arg2[%c85] : memref<98xf32, #tpu.memory_space<smem>>
    %1279 = vector.broadcast %1278 : f32 to vector<1x256xf32>
    %1280 = arith.mulf %1279, %1273 : vector<1x256xf32>
    %1281 = arith.addf %1277, %1280 : vector<1x256xf32>
    %c2_i32_428 = arith.constant 2 : i32
    %1282 = vector.broadcast %c2_i32_428 : i32 to vector<1x256xi32>
    %1283 = arith.addi %33, %1282 : vector<1x256xi32>
    %c0_i32_429 = arith.constant 0 : i32
    %1284 = vector.broadcast %c0_i32_429 : i32 to vector<1x256xi32>
    %1285 = arith.cmpi sge, %1283, %1284 : vector<1x256xi32>
    %c2_i32_430 = arith.constant 2 : i32
    %1286 = vector.broadcast %c2_i32_430 : i32 to vector<1x256xi32>
    %1287 = arith.addi %33, %1286 : vector<1x256xi32>
    %c16_i32_431 = arith.constant 16 : i32
    %1288 = vector.broadcast %c16_i32_431 : i32 to vector<1x256xi32>
    %1289 = arith.cmpi slt, %1287, %1288 : vector<1x256xi32>
    %1290 = arith.andi %1285, %1289 : vector<1x256xi1>
    %c-1_i32_432 = arith.constant -1 : i32
    %1291 = vector.broadcast %c-1_i32_432 : i32 to vector<1x256xi32>
    %1292 = arith.addi %36, %1291 : vector<1x256xi32>
    %c0_i32_433 = arith.constant 0 : i32
    %1293 = vector.broadcast %c0_i32_433 : i32 to vector<1x256xi32>
    %1294 = arith.cmpi sge, %1292, %1293 : vector<1x256xi32>
    %1295 = arith.andi %1290, %1294 : vector<1x256xi1>
    %c-1_i32_434 = arith.constant -1 : i32
    %1296 = vector.broadcast %c-1_i32_434 : i32 to vector<1x256xi32>
    %1297 = arith.addi %36, %1296 : vector<1x256xi32>
    %c16_i32_435 = arith.constant 16 : i32
    %1298 = vector.broadcast %c16_i32_435 : i32 to vector<1x256xi32>
    %1299 = arith.cmpi slt, %1297, %1298 : vector<1x256xi32>
    %1300 = arith.andi %1295, %1299 : vector<1x256xi1>
    %c225_i32 = arith.constant 225 : i32
    %1301 = tpu.dynamic_rotate %59 by %c225_i32 dim 1 : vector<1x256xf32>, i32 -> vector<1x256xf32>
    %c225_i32_436 = arith.constant 225 : i32
    %1302 = tpu.dynamic_rotate %61 by %c225_i32_436 dim 1 : vector<1x256xf32>, i32 -> vector<1x256xf32>
    %cst_437 = arith.constant 0.000000e+00 : f32
    %1303 = vector.broadcast %cst_437 : f32 to vector<1x256xf32>
    %1304 = arith.select %1300, %1301, %1303 : vector<1x256xi1>, vector<1x256xf32>
    %cst_438 = arith.constant 0.000000e+00 : f32
    %1305 = vector.broadcast %cst_438 : f32 to vector<1x256xf32>
    %1306 = arith.select %1300, %1302, %1305 : vector<1x256xi1>, vector<1x256xf32>
    %c37 = arith.constant 37 : index
    %1307 = memref.load %arg2[%c37] : memref<98xf32, #tpu.memory_space<smem>>
    %1308 = vector.broadcast %1307 : f32 to vector<1x256xf32>
    %1309 = arith.mulf %1308, %1304 : vector<1x256xf32>
    %1310 = arith.addf %1281, %1309 : vector<1x256xf32>
    %c86 = arith.constant 86 : index
    %1311 = memref.load %arg2[%c86] : memref<98xf32, #tpu.memory_space<smem>>
    %1312 = vector.broadcast %1311 : f32 to vector<1x256xf32>
    %1313 = arith.mulf %1312, %1306 : vector<1x256xf32>
    %1314 = arith.addf %1310, %1313 : vector<1x256xf32>
    %c2_i32_439 = arith.constant 2 : i32
    %1315 = vector.broadcast %c2_i32_439 : i32 to vector<1x256xi32>
    %1316 = arith.addi %33, %1315 : vector<1x256xi32>
    %c0_i32_440 = arith.constant 0 : i32
    %1317 = vector.broadcast %c0_i32_440 : i32 to vector<1x256xi32>
    %1318 = arith.cmpi sge, %1316, %1317 : vector<1x256xi32>
    %c2_i32_441 = arith.constant 2 : i32
    %1319 = vector.broadcast %c2_i32_441 : i32 to vector<1x256xi32>
    %1320 = arith.addi %33, %1319 : vector<1x256xi32>
    %c16_i32_442 = arith.constant 16 : i32
    %1321 = vector.broadcast %c16_i32_442 : i32 to vector<1x256xi32>
    %1322 = arith.cmpi slt, %1320, %1321 : vector<1x256xi32>
    %1323 = arith.andi %1318, %1322 : vector<1x256xi1>
    %c0_i32_443 = arith.constant 0 : i32
    %1324 = vector.broadcast %c0_i32_443 : i32 to vector<1x256xi32>
    %1325 = arith.addi %36, %1324 : vector<1x256xi32>
    %c0_i32_444 = arith.constant 0 : i32
    %1326 = vector.broadcast %c0_i32_444 : i32 to vector<1x256xi32>
    %1327 = arith.cmpi sge, %1325, %1326 : vector<1x256xi32>
    %1328 = arith.andi %1323, %1327 : vector<1x256xi1>
    %c0_i32_445 = arith.constant 0 : i32
    %1329 = vector.broadcast %c0_i32_445 : i32 to vector<1x256xi32>
    %1330 = arith.addi %36, %1329 : vector<1x256xi32>
    %c16_i32_446 = arith.constant 16 : i32
    %1331 = vector.broadcast %c16_i32_446 : i32 to vector<1x256xi32>
    %1332 = arith.cmpi slt, %1330, %1331 : vector<1x256xi32>
    %1333 = arith.andi %1328, %1332 : vector<1x256xi1>
    %c224_i32 = arith.constant 224 : i32
    %1334 = tpu.dynamic_rotate %59 by %c224_i32 dim 1 : vector<1x256xf32>, i32 -> vector<1x256xf32>
    %c224_i32_447 = arith.constant 224 : i32
    %1335 = tpu.dynamic_rotate %61 by %c224_i32_447 dim 1 : vector<1x256xf32>, i32 -> vector<1x256xf32>
    %cst_448 = arith.constant 0.000000e+00 : f32
    %1336 = vector.broadcast %cst_448 : f32 to vector<1x256xf32>
    %1337 = arith.select %1333, %1334, %1336 : vector<1x256xi1>, vector<1x256xf32>
    %cst_449 = arith.constant 0.000000e+00 : f32
    %1338 = vector.broadcast %cst_449 : f32 to vector<1x256xf32>
    %1339 = arith.select %1333, %1335, %1338 : vector<1x256xi1>, vector<1x256xf32>
    %c38 = arith.constant 38 : index
    %1340 = memref.load %arg2[%c38] : memref<98xf32, #tpu.memory_space<smem>>
    %1341 = vector.broadcast %1340 : f32 to vector<1x256xf32>
    %1342 = arith.mulf %1341, %1337 : vector<1x256xf32>
    %1343 = arith.addf %1314, %1342 : vector<1x256xf32>
    %c87 = arith.constant 87 : index
    %1344 = memref.load %arg2[%c87] : memref<98xf32, #tpu.memory_space<smem>>
    %1345 = vector.broadcast %1344 : f32 to vector<1x256xf32>
    %1346 = arith.mulf %1345, %1339 : vector<1x256xf32>
    %1347 = arith.addf %1343, %1346 : vector<1x256xf32>
    %c2_i32_450 = arith.constant 2 : i32
    %1348 = vector.broadcast %c2_i32_450 : i32 to vector<1x256xi32>
    %1349 = arith.addi %33, %1348 : vector<1x256xi32>
    %c0_i32_451 = arith.constant 0 : i32
    %1350 = vector.broadcast %c0_i32_451 : i32 to vector<1x256xi32>
    %1351 = arith.cmpi sge, %1349, %1350 : vector<1x256xi32>
    %c2_i32_452 = arith.constant 2 : i32
    %1352 = vector.broadcast %c2_i32_452 : i32 to vector<1x256xi32>
    %1353 = arith.addi %33, %1352 : vector<1x256xi32>
    %c16_i32_453 = arith.constant 16 : i32
    %1354 = vector.broadcast %c16_i32_453 : i32 to vector<1x256xi32>
    %1355 = arith.cmpi slt, %1353, %1354 : vector<1x256xi32>
    %1356 = arith.andi %1351, %1355 : vector<1x256xi1>
    %c1_i32_454 = arith.constant 1 : i32
    %1357 = vector.broadcast %c1_i32_454 : i32 to vector<1x256xi32>
    %1358 = arith.addi %36, %1357 : vector<1x256xi32>
    %c0_i32_455 = arith.constant 0 : i32
    %1359 = vector.broadcast %c0_i32_455 : i32 to vector<1x256xi32>
    %1360 = arith.cmpi sge, %1358, %1359 : vector<1x256xi32>
    %1361 = arith.andi %1356, %1360 : vector<1x256xi1>
    %c1_i32_456 = arith.constant 1 : i32
    %1362 = vector.broadcast %c1_i32_456 : i32 to vector<1x256xi32>
    %1363 = arith.addi %36, %1362 : vector<1x256xi32>
    %c16_i32_457 = arith.constant 16 : i32
    %1364 = vector.broadcast %c16_i32_457 : i32 to vector<1x256xi32>
    %1365 = arith.cmpi slt, %1363, %1364 : vector<1x256xi32>
    %1366 = arith.andi %1361, %1365 : vector<1x256xi1>
    %c223_i32 = arith.constant 223 : i32
    %1367 = tpu.dynamic_rotate %59 by %c223_i32 dim 1 : vector<1x256xf32>, i32 -> vector<1x256xf32>
    %c223_i32_458 = arith.constant 223 : i32
    %1368 = tpu.dynamic_rotate %61 by %c223_i32_458 dim 1 : vector<1x256xf32>, i32 -> vector<1x256xf32>
    %cst_459 = arith.constant 0.000000e+00 : f32
    %1369 = vector.broadcast %cst_459 : f32 to vector<1x256xf32>
    %1370 = arith.select %1366, %1367, %1369 : vector<1x256xi1>, vector<1x256xf32>
    %cst_460 = arith.constant 0.000000e+00 : f32
    %1371 = vector.broadcast %cst_460 : f32 to vector<1x256xf32>
    %1372 = arith.select %1366, %1368, %1371 : vector<1x256xi1>, vector<1x256xf32>
    %c39 = arith.constant 39 : index
    %1373 = memref.load %arg2[%c39] : memref<98xf32, #tpu.memory_space<smem>>
    %1374 = vector.broadcast %1373 : f32 to vector<1x256xf32>
    %1375 = arith.mulf %1374, %1370 : vector<1x256xf32>
    %1376 = arith.addf %1347, %1375 : vector<1x256xf32>
    %c88 = arith.constant 88 : index
    %1377 = memref.load %arg2[%c88] : memref<98xf32, #tpu.memory_space<smem>>
    %1378 = vector.broadcast %1377 : f32 to vector<1x256xf32>
    %1379 = arith.mulf %1378, %1372 : vector<1x256xf32>
    %1380 = arith.addf %1376, %1379 : vector<1x256xf32>
    %c2_i32_461 = arith.constant 2 : i32
    %1381 = vector.broadcast %c2_i32_461 : i32 to vector<1x256xi32>
    %1382 = arith.addi %33, %1381 : vector<1x256xi32>
    %c0_i32_462 = arith.constant 0 : i32
    %1383 = vector.broadcast %c0_i32_462 : i32 to vector<1x256xi32>
    %1384 = arith.cmpi sge, %1382, %1383 : vector<1x256xi32>
    %c2_i32_463 = arith.constant 2 : i32
    %1385 = vector.broadcast %c2_i32_463 : i32 to vector<1x256xi32>
    %1386 = arith.addi %33, %1385 : vector<1x256xi32>
    %c16_i32_464 = arith.constant 16 : i32
    %1387 = vector.broadcast %c16_i32_464 : i32 to vector<1x256xi32>
    %1388 = arith.cmpi slt, %1386, %1387 : vector<1x256xi32>
    %1389 = arith.andi %1384, %1388 : vector<1x256xi1>
    %c2_i32_465 = arith.constant 2 : i32
    %1390 = vector.broadcast %c2_i32_465 : i32 to vector<1x256xi32>
    %1391 = arith.addi %36, %1390 : vector<1x256xi32>
    %c0_i32_466 = arith.constant 0 : i32
    %1392 = vector.broadcast %c0_i32_466 : i32 to vector<1x256xi32>
    %1393 = arith.cmpi sge, %1391, %1392 : vector<1x256xi32>
    %1394 = arith.andi %1389, %1393 : vector<1x256xi1>
    %c2_i32_467 = arith.constant 2 : i32
    %1395 = vector.broadcast %c2_i32_467 : i32 to vector<1x256xi32>
    %1396 = arith.addi %36, %1395 : vector<1x256xi32>
    %c16_i32_468 = arith.constant 16 : i32
    %1397 = vector.broadcast %c16_i32_468 : i32 to vector<1x256xi32>
    %1398 = arith.cmpi slt, %1396, %1397 : vector<1x256xi32>
    %1399 = arith.andi %1394, %1398 : vector<1x256xi1>
    %c222_i32 = arith.constant 222 : i32
    %1400 = tpu.dynamic_rotate %59 by %c222_i32 dim 1 : vector<1x256xf32>, i32 -> vector<1x256xf32>
    %c222_i32_469 = arith.constant 222 : i32
    %1401 = tpu.dynamic_rotate %61 by %c222_i32_469 dim 1 : vector<1x256xf32>, i32 -> vector<1x256xf32>
    %cst_470 = arith.constant 0.000000e+00 : f32
    %1402 = vector.broadcast %cst_470 : f32 to vector<1x256xf32>
    %1403 = arith.select %1399, %1400, %1402 : vector<1x256xi1>, vector<1x256xf32>
    %cst_471 = arith.constant 0.000000e+00 : f32
    %1404 = vector.broadcast %cst_471 : f32 to vector<1x256xf32>
    %1405 = arith.select %1399, %1401, %1404 : vector<1x256xi1>, vector<1x256xf32>
    %c40 = arith.constant 40 : index
    %1406 = memref.load %arg2[%c40] : memref<98xf32, #tpu.memory_space<smem>>
    %1407 = vector.broadcast %1406 : f32 to vector<1x256xf32>
    %1408 = arith.mulf %1407, %1403 : vector<1x256xf32>
    %1409 = arith.addf %1380, %1408 : vector<1x256xf32>
    %c89 = arith.constant 89 : index
    %1410 = memref.load %arg2[%c89] : memref<98xf32, #tpu.memory_space<smem>>
    %1411 = vector.broadcast %1410 : f32 to vector<1x256xf32>
    %1412 = arith.mulf %1411, %1405 : vector<1x256xf32>
    %1413 = arith.addf %1409, %1412 : vector<1x256xf32>
    %c2_i32_472 = arith.constant 2 : i32
    %1414 = vector.broadcast %c2_i32_472 : i32 to vector<1x256xi32>
    %1415 = arith.addi %33, %1414 : vector<1x256xi32>
    %c0_i32_473 = arith.constant 0 : i32
    %1416 = vector.broadcast %c0_i32_473 : i32 to vector<1x256xi32>
    %1417 = arith.cmpi sge, %1415, %1416 : vector<1x256xi32>
    %c2_i32_474 = arith.constant 2 : i32
    %1418 = vector.broadcast %c2_i32_474 : i32 to vector<1x256xi32>
    %1419 = arith.addi %33, %1418 : vector<1x256xi32>
    %c16_i32_475 = arith.constant 16 : i32
    %1420 = vector.broadcast %c16_i32_475 : i32 to vector<1x256xi32>
    %1421 = arith.cmpi slt, %1419, %1420 : vector<1x256xi32>
    %1422 = arith.andi %1417, %1421 : vector<1x256xi1>
    %c3_i32_476 = arith.constant 3 : i32
    %1423 = vector.broadcast %c3_i32_476 : i32 to vector<1x256xi32>
    %1424 = arith.addi %36, %1423 : vector<1x256xi32>
    %c0_i32_477 = arith.constant 0 : i32
    %1425 = vector.broadcast %c0_i32_477 : i32 to vector<1x256xi32>
    %1426 = arith.cmpi sge, %1424, %1425 : vector<1x256xi32>
    %1427 = arith.andi %1422, %1426 : vector<1x256xi1>
    %c3_i32_478 = arith.constant 3 : i32
    %1428 = vector.broadcast %c3_i32_478 : i32 to vector<1x256xi32>
    %1429 = arith.addi %36, %1428 : vector<1x256xi32>
    %c16_i32_479 = arith.constant 16 : i32
    %1430 = vector.broadcast %c16_i32_479 : i32 to vector<1x256xi32>
    %1431 = arith.cmpi slt, %1429, %1430 : vector<1x256xi32>
    %1432 = arith.andi %1427, %1431 : vector<1x256xi1>
    %c221_i32 = arith.constant 221 : i32
    %1433 = tpu.dynamic_rotate %59 by %c221_i32 dim 1 : vector<1x256xf32>, i32 -> vector<1x256xf32>
    %c221_i32_480 = arith.constant 221 : i32
    %1434 = tpu.dynamic_rotate %61 by %c221_i32_480 dim 1 : vector<1x256xf32>, i32 -> vector<1x256xf32>
    %cst_481 = arith.constant 0.000000e+00 : f32
    %1435 = vector.broadcast %cst_481 : f32 to vector<1x256xf32>
    %1436 = arith.select %1432, %1433, %1435 : vector<1x256xi1>, vector<1x256xf32>
    %cst_482 = arith.constant 0.000000e+00 : f32
    %1437 = vector.broadcast %cst_482 : f32 to vector<1x256xf32>
    %1438 = arith.select %1432, %1434, %1437 : vector<1x256xi1>, vector<1x256xf32>
    %c41 = arith.constant 41 : index
    %1439 = memref.load %arg2[%c41] : memref<98xf32, #tpu.memory_space<smem>>
    %1440 = vector.broadcast %1439 : f32 to vector<1x256xf32>
    %1441 = arith.mulf %1440, %1436 : vector<1x256xf32>
    %1442 = arith.addf %1413, %1441 : vector<1x256xf32>
    %c90 = arith.constant 90 : index
    %1443 = memref.load %arg2[%c90] : memref<98xf32, #tpu.memory_space<smem>>
    %1444 = vector.broadcast %1443 : f32 to vector<1x256xf32>
    %1445 = arith.mulf %1444, %1438 : vector<1x256xf32>
    %1446 = arith.addf %1442, %1445 : vector<1x256xf32>
    %c3_i32_483 = arith.constant 3 : i32
    %1447 = vector.broadcast %c3_i32_483 : i32 to vector<1x256xi32>
    %1448 = arith.addi %33, %1447 : vector<1x256xi32>
    %c0_i32_484 = arith.constant 0 : i32
    %1449 = vector.broadcast %c0_i32_484 : i32 to vector<1x256xi32>
    %1450 = arith.cmpi sge, %1448, %1449 : vector<1x256xi32>
    %c3_i32_485 = arith.constant 3 : i32
    %1451 = vector.broadcast %c3_i32_485 : i32 to vector<1x256xi32>
    %1452 = arith.addi %33, %1451 : vector<1x256xi32>
    %c16_i32_486 = arith.constant 16 : i32
    %1453 = vector.broadcast %c16_i32_486 : i32 to vector<1x256xi32>
    %1454 = arith.cmpi slt, %1452, %1453 : vector<1x256xi32>
    %1455 = arith.andi %1450, %1454 : vector<1x256xi1>
    %c-3_i32_487 = arith.constant -3 : i32
    %1456 = vector.broadcast %c-3_i32_487 : i32 to vector<1x256xi32>
    %1457 = arith.addi %36, %1456 : vector<1x256xi32>
    %c0_i32_488 = arith.constant 0 : i32
    %1458 = vector.broadcast %c0_i32_488 : i32 to vector<1x256xi32>
    %1459 = arith.cmpi sge, %1457, %1458 : vector<1x256xi32>
    %1460 = arith.andi %1455, %1459 : vector<1x256xi1>
    %c-3_i32_489 = arith.constant -3 : i32
    %1461 = vector.broadcast %c-3_i32_489 : i32 to vector<1x256xi32>
    %1462 = arith.addi %36, %1461 : vector<1x256xi32>
    %c16_i32_490 = arith.constant 16 : i32
    %1463 = vector.broadcast %c16_i32_490 : i32 to vector<1x256xi32>
    %1464 = arith.cmpi slt, %1462, %1463 : vector<1x256xi32>
    %1465 = arith.andi %1460, %1464 : vector<1x256xi1>
    %c211_i32 = arith.constant 211 : i32
    %1466 = tpu.dynamic_rotate %59 by %c211_i32 dim 1 : vector<1x256xf32>, i32 -> vector<1x256xf32>
    %c211_i32_491 = arith.constant 211 : i32
    %1467 = tpu.dynamic_rotate %61 by %c211_i32_491 dim 1 : vector<1x256xf32>, i32 -> vector<1x256xf32>
    %cst_492 = arith.constant 0.000000e+00 : f32
    %1468 = vector.broadcast %cst_492 : f32 to vector<1x256xf32>
    %1469 = arith.select %1465, %1466, %1468 : vector<1x256xi1>, vector<1x256xf32>
    %cst_493 = arith.constant 0.000000e+00 : f32
    %1470 = vector.broadcast %cst_493 : f32 to vector<1x256xf32>
    %1471 = arith.select %1465, %1467, %1470 : vector<1x256xi1>, vector<1x256xf32>
    %c42 = arith.constant 42 : index
    %1472 = memref.load %arg2[%c42] : memref<98xf32, #tpu.memory_space<smem>>
    %1473 = vector.broadcast %1472 : f32 to vector<1x256xf32>
    %1474 = arith.mulf %1473, %1469 : vector<1x256xf32>
    %1475 = arith.addf %1446, %1474 : vector<1x256xf32>
    %c91 = arith.constant 91 : index
    %1476 = memref.load %arg2[%c91] : memref<98xf32, #tpu.memory_space<smem>>
    %1477 = vector.broadcast %1476 : f32 to vector<1x256xf32>
    %1478 = arith.mulf %1477, %1471 : vector<1x256xf32>
    %1479 = arith.addf %1475, %1478 : vector<1x256xf32>
    %c3_i32_494 = arith.constant 3 : i32
    %1480 = vector.broadcast %c3_i32_494 : i32 to vector<1x256xi32>
    %1481 = arith.addi %33, %1480 : vector<1x256xi32>
    %c0_i32_495 = arith.constant 0 : i32
    %1482 = vector.broadcast %c0_i32_495 : i32 to vector<1x256xi32>
    %1483 = arith.cmpi sge, %1481, %1482 : vector<1x256xi32>
    %c3_i32_496 = arith.constant 3 : i32
    %1484 = vector.broadcast %c3_i32_496 : i32 to vector<1x256xi32>
    %1485 = arith.addi %33, %1484 : vector<1x256xi32>
    %c16_i32_497 = arith.constant 16 : i32
    %1486 = vector.broadcast %c16_i32_497 : i32 to vector<1x256xi32>
    %1487 = arith.cmpi slt, %1485, %1486 : vector<1x256xi32>
    %1488 = arith.andi %1483, %1487 : vector<1x256xi1>
    %c-2_i32_498 = arith.constant -2 : i32
    %1489 = vector.broadcast %c-2_i32_498 : i32 to vector<1x256xi32>
    %1490 = arith.addi %36, %1489 : vector<1x256xi32>
    %c0_i32_499 = arith.constant 0 : i32
    %1491 = vector.broadcast %c0_i32_499 : i32 to vector<1x256xi32>
    %1492 = arith.cmpi sge, %1490, %1491 : vector<1x256xi32>
    %1493 = arith.andi %1488, %1492 : vector<1x256xi1>
    %c-2_i32_500 = arith.constant -2 : i32
    %1494 = vector.broadcast %c-2_i32_500 : i32 to vector<1x256xi32>
    %1495 = arith.addi %36, %1494 : vector<1x256xi32>
    %c16_i32_501 = arith.constant 16 : i32
    %1496 = vector.broadcast %c16_i32_501 : i32 to vector<1x256xi32>
    %1497 = arith.cmpi slt, %1495, %1496 : vector<1x256xi32>
    %1498 = arith.andi %1493, %1497 : vector<1x256xi1>
    %c210_i32 = arith.constant 210 : i32
    %1499 = tpu.dynamic_rotate %59 by %c210_i32 dim 1 : vector<1x256xf32>, i32 -> vector<1x256xf32>
    %c210_i32_502 = arith.constant 210 : i32
    %1500 = tpu.dynamic_rotate %61 by %c210_i32_502 dim 1 : vector<1x256xf32>, i32 -> vector<1x256xf32>
    %cst_503 = arith.constant 0.000000e+00 : f32
    %1501 = vector.broadcast %cst_503 : f32 to vector<1x256xf32>
    %1502 = arith.select %1498, %1499, %1501 : vector<1x256xi1>, vector<1x256xf32>
    %cst_504 = arith.constant 0.000000e+00 : f32
    %1503 = vector.broadcast %cst_504 : f32 to vector<1x256xf32>
    %1504 = arith.select %1498, %1500, %1503 : vector<1x256xi1>, vector<1x256xf32>
    %c43 = arith.constant 43 : index
    %1505 = memref.load %arg2[%c43] : memref<98xf32, #tpu.memory_space<smem>>
    %1506 = vector.broadcast %1505 : f32 to vector<1x256xf32>
    %1507 = arith.mulf %1506, %1502 : vector<1x256xf32>
    %1508 = arith.addf %1479, %1507 : vector<1x256xf32>
    %c92 = arith.constant 92 : index
    %1509 = memref.load %arg2[%c92] : memref<98xf32, #tpu.memory_space<smem>>
    %1510 = vector.broadcast %1509 : f32 to vector<1x256xf32>
    %1511 = arith.mulf %1510, %1504 : vector<1x256xf32>
    %1512 = arith.addf %1508, %1511 : vector<1x256xf32>
    %c3_i32_505 = arith.constant 3 : i32
    %1513 = vector.broadcast %c3_i32_505 : i32 to vector<1x256xi32>
    %1514 = arith.addi %33, %1513 : vector<1x256xi32>
    %c0_i32_506 = arith.constant 0 : i32
    %1515 = vector.broadcast %c0_i32_506 : i32 to vector<1x256xi32>
    %1516 = arith.cmpi sge, %1514, %1515 : vector<1x256xi32>
    %c3_i32_507 = arith.constant 3 : i32
    %1517 = vector.broadcast %c3_i32_507 : i32 to vector<1x256xi32>
    %1518 = arith.addi %33, %1517 : vector<1x256xi32>
    %c16_i32_508 = arith.constant 16 : i32
    %1519 = vector.broadcast %c16_i32_508 : i32 to vector<1x256xi32>
    %1520 = arith.cmpi slt, %1518, %1519 : vector<1x256xi32>
    %1521 = arith.andi %1516, %1520 : vector<1x256xi1>
    %c-1_i32_509 = arith.constant -1 : i32
    %1522 = vector.broadcast %c-1_i32_509 : i32 to vector<1x256xi32>
    %1523 = arith.addi %36, %1522 : vector<1x256xi32>
    %c0_i32_510 = arith.constant 0 : i32
    %1524 = vector.broadcast %c0_i32_510 : i32 to vector<1x256xi32>
    %1525 = arith.cmpi sge, %1523, %1524 : vector<1x256xi32>
    %1526 = arith.andi %1521, %1525 : vector<1x256xi1>
    %c-1_i32_511 = arith.constant -1 : i32
    %1527 = vector.broadcast %c-1_i32_511 : i32 to vector<1x256xi32>
    %1528 = arith.addi %36, %1527 : vector<1x256xi32>
    %c16_i32_512 = arith.constant 16 : i32
    %1529 = vector.broadcast %c16_i32_512 : i32 to vector<1x256xi32>
    %1530 = arith.cmpi slt, %1528, %1529 : vector<1x256xi32>
    %1531 = arith.andi %1526, %1530 : vector<1x256xi1>
    %c209_i32 = arith.constant 209 : i32
    %1532 = tpu.dynamic_rotate %59 by %c209_i32 dim 1 : vector<1x256xf32>, i32 -> vector<1x256xf32>
    %c209_i32_513 = arith.constant 209 : i32
    %1533 = tpu.dynamic_rotate %61 by %c209_i32_513 dim 1 : vector<1x256xf32>, i32 -> vector<1x256xf32>
    %cst_514 = arith.constant 0.000000e+00 : f32
    %1534 = vector.broadcast %cst_514 : f32 to vector<1x256xf32>
    %1535 = arith.select %1531, %1532, %1534 : vector<1x256xi1>, vector<1x256xf32>
    %cst_515 = arith.constant 0.000000e+00 : f32
    %1536 = vector.broadcast %cst_515 : f32 to vector<1x256xf32>
    %1537 = arith.select %1531, %1533, %1536 : vector<1x256xi1>, vector<1x256xf32>
    %c44 = arith.constant 44 : index
    %1538 = memref.load %arg2[%c44] : memref<98xf32, #tpu.memory_space<smem>>
    %1539 = vector.broadcast %1538 : f32 to vector<1x256xf32>
    %1540 = arith.mulf %1539, %1535 : vector<1x256xf32>
    %1541 = arith.addf %1512, %1540 : vector<1x256xf32>
    %c93 = arith.constant 93 : index
    %1542 = memref.load %arg2[%c93] : memref<98xf32, #tpu.memory_space<smem>>
    %1543 = vector.broadcast %1542 : f32 to vector<1x256xf32>
    %1544 = arith.mulf %1543, %1537 : vector<1x256xf32>
    %1545 = arith.addf %1541, %1544 : vector<1x256xf32>
    %c3_i32_516 = arith.constant 3 : i32
    %1546 = vector.broadcast %c3_i32_516 : i32 to vector<1x256xi32>
    %1547 = arith.addi %33, %1546 : vector<1x256xi32>
    %c0_i32_517 = arith.constant 0 : i32
    %1548 = vector.broadcast %c0_i32_517 : i32 to vector<1x256xi32>
    %1549 = arith.cmpi sge, %1547, %1548 : vector<1x256xi32>
    %c3_i32_518 = arith.constant 3 : i32
    %1550 = vector.broadcast %c3_i32_518 : i32 to vector<1x256xi32>
    %1551 = arith.addi %33, %1550 : vector<1x256xi32>
    %c16_i32_519 = arith.constant 16 : i32
    %1552 = vector.broadcast %c16_i32_519 : i32 to vector<1x256xi32>
    %1553 = arith.cmpi slt, %1551, %1552 : vector<1x256xi32>
    %1554 = arith.andi %1549, %1553 : vector<1x256xi1>
    %c0_i32_520 = arith.constant 0 : i32
    %1555 = vector.broadcast %c0_i32_520 : i32 to vector<1x256xi32>
    %1556 = arith.addi %36, %1555 : vector<1x256xi32>
    %c0_i32_521 = arith.constant 0 : i32
    %1557 = vector.broadcast %c0_i32_521 : i32 to vector<1x256xi32>
    %1558 = arith.cmpi sge, %1556, %1557 : vector<1x256xi32>
    %1559 = arith.andi %1554, %1558 : vector<1x256xi1>
    %c0_i32_522 = arith.constant 0 : i32
    %1560 = vector.broadcast %c0_i32_522 : i32 to vector<1x256xi32>
    %1561 = arith.addi %36, %1560 : vector<1x256xi32>
    %c16_i32_523 = arith.constant 16 : i32
    %1562 = vector.broadcast %c16_i32_523 : i32 to vector<1x256xi32>
    %1563 = arith.cmpi slt, %1561, %1562 : vector<1x256xi32>
    %1564 = arith.andi %1559, %1563 : vector<1x256xi1>
    %c208_i32 = arith.constant 208 : i32
    %1565 = tpu.dynamic_rotate %59 by %c208_i32 dim 1 : vector<1x256xf32>, i32 -> vector<1x256xf32>
    %c208_i32_524 = arith.constant 208 : i32
    %1566 = tpu.dynamic_rotate %61 by %c208_i32_524 dim 1 : vector<1x256xf32>, i32 -> vector<1x256xf32>
    %cst_525 = arith.constant 0.000000e+00 : f32
    %1567 = vector.broadcast %cst_525 : f32 to vector<1x256xf32>
    %1568 = arith.select %1564, %1565, %1567 : vector<1x256xi1>, vector<1x256xf32>
    %cst_526 = arith.constant 0.000000e+00 : f32
    %1569 = vector.broadcast %cst_526 : f32 to vector<1x256xf32>
    %1570 = arith.select %1564, %1566, %1569 : vector<1x256xi1>, vector<1x256xf32>
    %c45 = arith.constant 45 : index
    %1571 = memref.load %arg2[%c45] : memref<98xf32, #tpu.memory_space<smem>>
    %1572 = vector.broadcast %1571 : f32 to vector<1x256xf32>
    %1573 = arith.mulf %1572, %1568 : vector<1x256xf32>
    %1574 = arith.addf %1545, %1573 : vector<1x256xf32>
    %c94 = arith.constant 94 : index
    %1575 = memref.load %arg2[%c94] : memref<98xf32, #tpu.memory_space<smem>>
    %1576 = vector.broadcast %1575 : f32 to vector<1x256xf32>
    %1577 = arith.mulf %1576, %1570 : vector<1x256xf32>
    %1578 = arith.addf %1574, %1577 : vector<1x256xf32>
    %c3_i32_527 = arith.constant 3 : i32
    %1579 = vector.broadcast %c3_i32_527 : i32 to vector<1x256xi32>
    %1580 = arith.addi %33, %1579 : vector<1x256xi32>
    %c0_i32_528 = arith.constant 0 : i32
    %1581 = vector.broadcast %c0_i32_528 : i32 to vector<1x256xi32>
    %1582 = arith.cmpi sge, %1580, %1581 : vector<1x256xi32>
    %c3_i32_529 = arith.constant 3 : i32
    %1583 = vector.broadcast %c3_i32_529 : i32 to vector<1x256xi32>
    %1584 = arith.addi %33, %1583 : vector<1x256xi32>
    %c16_i32_530 = arith.constant 16 : i32
    %1585 = vector.broadcast %c16_i32_530 : i32 to vector<1x256xi32>
    %1586 = arith.cmpi slt, %1584, %1585 : vector<1x256xi32>
    %1587 = arith.andi %1582, %1586 : vector<1x256xi1>
    %c1_i32_531 = arith.constant 1 : i32
    %1588 = vector.broadcast %c1_i32_531 : i32 to vector<1x256xi32>
    %1589 = arith.addi %36, %1588 : vector<1x256xi32>
    %c0_i32_532 = arith.constant 0 : i32
    %1590 = vector.broadcast %c0_i32_532 : i32 to vector<1x256xi32>
    %1591 = arith.cmpi sge, %1589, %1590 : vector<1x256xi32>
    %1592 = arith.andi %1587, %1591 : vector<1x256xi1>
    %c1_i32_533 = arith.constant 1 : i32
    %1593 = vector.broadcast %c1_i32_533 : i32 to vector<1x256xi32>
    %1594 = arith.addi %36, %1593 : vector<1x256xi32>
    %c16_i32_534 = arith.constant 16 : i32
    %1595 = vector.broadcast %c16_i32_534 : i32 to vector<1x256xi32>
    %1596 = arith.cmpi slt, %1594, %1595 : vector<1x256xi32>
    %1597 = arith.andi %1592, %1596 : vector<1x256xi1>
    %c207_i32 = arith.constant 207 : i32
    %1598 = tpu.dynamic_rotate %59 by %c207_i32 dim 1 : vector<1x256xf32>, i32 -> vector<1x256xf32>
    %c207_i32_535 = arith.constant 207 : i32
    %1599 = tpu.dynamic_rotate %61 by %c207_i32_535 dim 1 : vector<1x256xf32>, i32 -> vector<1x256xf32>
    %cst_536 = arith.constant 0.000000e+00 : f32
    %1600 = vector.broadcast %cst_536 : f32 to vector<1x256xf32>
    %1601 = arith.select %1597, %1598, %1600 : vector<1x256xi1>, vector<1x256xf32>
    %cst_537 = arith.constant 0.000000e+00 : f32
    %1602 = vector.broadcast %cst_537 : f32 to vector<1x256xf32>
    %1603 = arith.select %1597, %1599, %1602 : vector<1x256xi1>, vector<1x256xf32>
    %c46 = arith.constant 46 : index
    %1604 = memref.load %arg2[%c46] : memref<98xf32, #tpu.memory_space<smem>>
    %1605 = vector.broadcast %1604 : f32 to vector<1x256xf32>
    %1606 = arith.mulf %1605, %1601 : vector<1x256xf32>
    %1607 = arith.addf %1578, %1606 : vector<1x256xf32>
    %c95 = arith.constant 95 : index
    %1608 = memref.load %arg2[%c95] : memref<98xf32, #tpu.memory_space<smem>>
    %1609 = vector.broadcast %1608 : f32 to vector<1x256xf32>
    %1610 = arith.mulf %1609, %1603 : vector<1x256xf32>
    %1611 = arith.addf %1607, %1610 : vector<1x256xf32>
    %c3_i32_538 = arith.constant 3 : i32
    %1612 = vector.broadcast %c3_i32_538 : i32 to vector<1x256xi32>
    %1613 = arith.addi %33, %1612 : vector<1x256xi32>
    %c0_i32_539 = arith.constant 0 : i32
    %1614 = vector.broadcast %c0_i32_539 : i32 to vector<1x256xi32>
    %1615 = arith.cmpi sge, %1613, %1614 : vector<1x256xi32>
    %c3_i32_540 = arith.constant 3 : i32
    %1616 = vector.broadcast %c3_i32_540 : i32 to vector<1x256xi32>
    %1617 = arith.addi %33, %1616 : vector<1x256xi32>
    %c16_i32_541 = arith.constant 16 : i32
    %1618 = vector.broadcast %c16_i32_541 : i32 to vector<1x256xi32>
    %1619 = arith.cmpi slt, %1617, %1618 : vector<1x256xi32>
    %1620 = arith.andi %1615, %1619 : vector<1x256xi1>
    %c2_i32_542 = arith.constant 2 : i32
    %1621 = vector.broadcast %c2_i32_542 : i32 to vector<1x256xi32>
    %1622 = arith.addi %36, %1621 : vector<1x256xi32>
    %c0_i32_543 = arith.constant 0 : i32
    %1623 = vector.broadcast %c0_i32_543 : i32 to vector<1x256xi32>
    %1624 = arith.cmpi sge, %1622, %1623 : vector<1x256xi32>
    %1625 = arith.andi %1620, %1624 : vector<1x256xi1>
    %c2_i32_544 = arith.constant 2 : i32
    %1626 = vector.broadcast %c2_i32_544 : i32 to vector<1x256xi32>
    %1627 = arith.addi %36, %1626 : vector<1x256xi32>
    %c16_i32_545 = arith.constant 16 : i32
    %1628 = vector.broadcast %c16_i32_545 : i32 to vector<1x256xi32>
    %1629 = arith.cmpi slt, %1627, %1628 : vector<1x256xi32>
    %1630 = arith.andi %1625, %1629 : vector<1x256xi1>
    %c206_i32 = arith.constant 206 : i32
    %1631 = tpu.dynamic_rotate %59 by %c206_i32 dim 1 : vector<1x256xf32>, i32 -> vector<1x256xf32>
    %c206_i32_546 = arith.constant 206 : i32
    %1632 = tpu.dynamic_rotate %61 by %c206_i32_546 dim 1 : vector<1x256xf32>, i32 -> vector<1x256xf32>
    %cst_547 = arith.constant 0.000000e+00 : f32
    %1633 = vector.broadcast %cst_547 : f32 to vector<1x256xf32>
    %1634 = arith.select %1630, %1631, %1633 : vector<1x256xi1>, vector<1x256xf32>
    %cst_548 = arith.constant 0.000000e+00 : f32
    %1635 = vector.broadcast %cst_548 : f32 to vector<1x256xf32>
    %1636 = arith.select %1630, %1632, %1635 : vector<1x256xi1>, vector<1x256xf32>
    %c47 = arith.constant 47 : index
    %1637 = memref.load %arg2[%c47] : memref<98xf32, #tpu.memory_space<smem>>
    %1638 = vector.broadcast %1637 : f32 to vector<1x256xf32>
    %1639 = arith.mulf %1638, %1634 : vector<1x256xf32>
    %1640 = arith.addf %1611, %1639 : vector<1x256xf32>
    %c96 = arith.constant 96 : index
    %1641 = memref.load %arg2[%c96] : memref<98xf32, #tpu.memory_space<smem>>
    %1642 = vector.broadcast %1641 : f32 to vector<1x256xf32>
    %1643 = arith.mulf %1642, %1636 : vector<1x256xf32>
    %1644 = arith.addf %1640, %1643 : vector<1x256xf32>
    %c3_i32_549 = arith.constant 3 : i32
    %1645 = vector.broadcast %c3_i32_549 : i32 to vector<1x256xi32>
    %1646 = arith.addi %33, %1645 : vector<1x256xi32>
    %c0_i32_550 = arith.constant 0 : i32
    %1647 = vector.broadcast %c0_i32_550 : i32 to vector<1x256xi32>
    %1648 = arith.cmpi sge, %1646, %1647 : vector<1x256xi32>
    %c3_i32_551 = arith.constant 3 : i32
    %1649 = vector.broadcast %c3_i32_551 : i32 to vector<1x256xi32>
    %1650 = arith.addi %33, %1649 : vector<1x256xi32>
    %c16_i32_552 = arith.constant 16 : i32
    %1651 = vector.broadcast %c16_i32_552 : i32 to vector<1x256xi32>
    %1652 = arith.cmpi slt, %1650, %1651 : vector<1x256xi32>
    %1653 = arith.andi %1648, %1652 : vector<1x256xi1>
    %c3_i32_553 = arith.constant 3 : i32
    %1654 = vector.broadcast %c3_i32_553 : i32 to vector<1x256xi32>
    %1655 = arith.addi %36, %1654 : vector<1x256xi32>
    %c0_i32_554 = arith.constant 0 : i32
    %1656 = vector.broadcast %c0_i32_554 : i32 to vector<1x256xi32>
    %1657 = arith.cmpi sge, %1655, %1656 : vector<1x256xi32>
    %1658 = arith.andi %1653, %1657 : vector<1x256xi1>
    %c3_i32_555 = arith.constant 3 : i32
    %1659 = vector.broadcast %c3_i32_555 : i32 to vector<1x256xi32>
    %1660 = arith.addi %36, %1659 : vector<1x256xi32>
    %c16_i32_556 = arith.constant 16 : i32
    %1661 = vector.broadcast %c16_i32_556 : i32 to vector<1x256xi32>
    %1662 = arith.cmpi slt, %1660, %1661 : vector<1x256xi32>
    %1663 = arith.andi %1658, %1662 : vector<1x256xi1>
    %c205_i32 = arith.constant 205 : i32
    %1664 = tpu.dynamic_rotate %59 by %c205_i32 dim 1 : vector<1x256xf32>, i32 -> vector<1x256xf32>
    %c205_i32_557 = arith.constant 205 : i32
    %1665 = tpu.dynamic_rotate %61 by %c205_i32_557 dim 1 : vector<1x256xf32>, i32 -> vector<1x256xf32>
    %cst_558 = arith.constant 0.000000e+00 : f32
    %1666 = vector.broadcast %cst_558 : f32 to vector<1x256xf32>
    %1667 = arith.select %1663, %1664, %1666 : vector<1x256xi1>, vector<1x256xf32>
    %cst_559 = arith.constant 0.000000e+00 : f32
    %1668 = vector.broadcast %cst_559 : f32 to vector<1x256xf32>
    %1669 = arith.select %1663, %1665, %1668 : vector<1x256xi1>, vector<1x256xf32>
    %c48 = arith.constant 48 : index
    %1670 = memref.load %arg2[%c48] : memref<98xf32, #tpu.memory_space<smem>>
    %1671 = vector.broadcast %1670 : f32 to vector<1x256xf32>
    %1672 = arith.mulf %1671, %1667 : vector<1x256xf32>
    %1673 = arith.addf %1644, %1672 : vector<1x256xf32>
    %c97 = arith.constant 97 : index
    %1674 = memref.load %arg2[%c97] : memref<98xf32, #tpu.memory_space<smem>>
    %1675 = vector.broadcast %1674 : f32 to vector<1x256xf32>
    %1676 = arith.mulf %1675, %1669 : vector<1x256xf32>
    %1677 = arith.addf %1673, %1676 : vector<1x256xf32>
    %1678 = arith.negf %1677 : vector<1x256xf32>
    %1679 = math.exp %1678 : vector<1x256xf32>
    %cst_560 = arith.constant 1.000000e+00 : f32
    %1680 = vector.broadcast %cst_560 : f32 to vector<1x256xf32>
    %1681 = arith.addf %1680, %1679 : vector<1x256xf32>
    %1682 = arith.divf %1680, %1681 : vector<1x256xf32>
    %1683 = vector.broadcast %1682 : vector<1x256xf32> to vector<4x256xf32>
    %1684 = arith.mulf %55, %1683 : vector<4x256xf32>
    %c0_561 = arith.constant 0 : index
    %c0_562 = arith.constant 0 : index
    %c0_563 = arith.constant 0 : index
    %1685 = vector.load %arg4[%c0_561, %c0_562, %c0_563] : memref<1x4x256xf32, #tpu.memory_space<vmem>>, vector<1x4x256xf32>
    %1686 = vector.shape_cast %1685 : vector<1x4x256xf32> to vector<4x256xf32>
    %1687 = vector.shape_cast %1684 : vector<4x256xf32> to vector<1x4x256xf32>
    tpu.vector_store %arg4[%c0_561, %c0_562, %c0_563], %1687 {strides = array<i32>} : memref<1x4x256xf32, #tpu.memory_space<vmem>>, vector<1x4x256xf32>,
    return
  }
  func.func @transform_0(%arg0: i32) -> i32 {
    %c0_i32 = arith.constant 0 : i32
    %c0_i32_0 = arith.constant 0 : i32
    return %c0_i32 : i32
  }
  func.func @transform_1(%arg0: i32) -> i32 {
    %c0_i32 = arith.constant 0 : i32
    %c0_i32_0 = arith.constant 0 : i32
    return %c0_i32 : i32
  }
  func.func @transform_2(%arg0: i32) -> (i32, i32, i32) {
    %c0_i32 = arith.constant 0 : i32
    %c0_i32_0 = arith.constant 0 : i32
    %c0_i32_1 = arith.constant 0 : i32
    return %arg0, %c0_i32, %c0_i32_0 : i32, i32, i32
  }
  func.func @transform_3(%arg0: i32) -> (i32, i32, i32) {
    %c0_i32 = arith.constant 0 : i32
    %c0_i32_0 = arith.constant 0 : i32
    %c0_i32_1 = arith.constant 0 : i32
    return %arg0, %c0_i32, %c0_i32_0 : i32, i32, i32
  }
}

</mosaic_0001>

<llo_original>
// kernel: tpu_custom_call.1
$region0: #{tpu_custom_call.1}
  #allocation0 [shape = 'u32[]', space=smem, size = 0x4, offset = 0x4, fixed_abs, tag = 'smem constant byte address 0x4 - core index']
  #allocation1 [shape = 'u32[144,128]{1,0:T(1,128)}', space=vmem, size = 0x12000, scoped, tag = 'internal scratch']
  %s0 = inlined_call_operand.hbm [shape: f32[3], index: 0, kind: input, shape index: {}]
  %s1 = inlined_call_operand.vmem [shape: f32[98], index: 1, kind: input, shape index: {}]
  %s2 = inlined_call_operand.hbm [shape: f32[2,4,256], index: 2, kind: input, shape index: {}]
  %s3 = inlined_call_operand.hbm [shape: f32[2,4,256], index: 3, kind: output, shape index: {}]
  %s4 = sld [smem:[#allocation0]]
  $region57: #{tpu_custom_call.1} parent=0
    _
  %s6 = ssub.s32 1, %s4
  %s7 = scalar_select 0, %s6, %s4
  $region1: #{tpu_custom_call.1} parent=0
    #allocation2 [shape = 'u8[512]{0}', space=smem, size = 0x200, scoped, tag = 'input window, operand 0, single buffered']
    #allocation3 [shape = 's32[2]{0}', space=sflag, size = 0x8, scoped, tag = 'scoped memory for tpu_custom_call.1']
    #allocation4 [shape = 's32[2]{0}', space=sflag, size = 0x8, scoped, tag = 'scoped memory for tpu_custom_call.1']
    #allocation5 [shape = 's32[2]{0}', space=sflag, size = 0x8, scoped, tag = 'scoped memory for tpu_custom_call.1']
    #allocation6 [shape = 's32[2]{0}', space=sflag, size = 0x8, scoped, tag = 'scoped memory for tpu_custom_call.1']
    #allocation7 [shape = 'u8[512]{0}', space=smem, size = 0x200, scoped, tag = 'input window, operand 1, single buffered']
    #allocation8 [shape = 'u8[8192]{0}', space=vmem, size = 0x2000, scoped, tag = 'input window, operand 2']
    #allocation9 [shape = 'u8[8192]{0}', space=vmem, size = 0x2000, scoped, tag = 'output window, operand 0']
    %8 = vsyncpa [#allocation5], 0
    %9 = vsyncpa [#allocation6], 0
    %10 = vsyncpa [#allocation3], 0
    %s11 = scalar_lea.sflag [#allocation3], 1
    %12 = vsyncpa %s11, 0
    %13 = vsyncpa [#allocation4], 0
    %s14 = scalar_lea.sflag [#allocation4], 1
    %15 = vsyncpa %s14, 0
    loop: start=0, step=1, limit=4
    $region2: #{tpu_custom_call.1} parent=1 // loop_pre_header
      _
    $region3: #{tpu_custom_call.1} parent=1 // loop_header
      %s17 = sphi 0, %s21
      %p18 = scmp.ge.s32.totalorder %s17, 4
      %s25 = sphi 0, %s25
      %s27 = sphi 0, %s25
      %s28 = sphi 0, %s27
      %s42 = sphi 0, %s28
      %s46 = sphi 0, %s46
      %s48 = sphi 0, %s46
      %s49 = sphi 0, %s48
      %s63 = sphi 0, %s49
      %s69 = sphi 0, %s71
      %s72 = sphi 0, %s69
      %s73 = sphi 0, %s72
      %s89 = sphi 0, %s73
      %s95 = sphi 0, %s97
      %s98 = sphi 0, %s95
      %s99 = sphi 0, %s98
      %s115 = sphi 0, %s99
    $region4: #{tpu_custom_call.1} parent=1 // loop_header_branch
      %20 = sbr.rel (%p18) target = $region8
    $region5: #{tpu_custom_call.1} parent=1 // loop_body
      %s22 = ssub.s32 %s17, 1
      %s23 = ssub.s32 %s17, 2
      %s24 = sadd.s32 %s17, 1
      %s26 = sadd.s32 %s25, 1
      %p29 = scmp.eq.s32.totalorder %s17, 1
      %p30 = scmp.ne.s32.totalorder %s25, %s27
      %p31 = scmp.eq.s32.totalorder %s17, 0
      %p32 = por %p30, %p31
      %p33 = scmp.ne.s32.totalorder %s25, %s27
      %p34 = scmp.eq.s32.totalorder %s22, 1
      %p35 = por %p33, %p34
      %p36 = scmp.ne.s32.totalorder %s27, %s28
      %p37 = scmp.eq.s32.totalorder %s22, 0
      %p38 = por %p36, %p37
      %p39 = scmp.ne.s32.totalorder %s27, %s28
      %p40 = scmp.eq.s32.totalorder %s23, 1
      %p41 = por %p39, %p40
      %p43 = scmp.ne.s32.totalorder %s28, %s42
      %p44 = scmp.eq.s32.totalorder %s23, 0
      %p45 = por %p43, %p44
      %s47 = sadd.s32 %s46, 1
      %p50 = scmp.eq.s32.totalorder %s17, 1
      %p51 = scmp.ne.s32.totalorder %s46, %s48
      %p52 = scmp.eq.s32.totalorder %s17, 0
      %p53 = por %p51, %p52
      %p54 = scmp.ne.s32.totalorder %s46, %s48
      %p55 = scmp.eq.s32.totalorder %s22, 1
      %p56 = por %p54, %p55
      %p57 = scmp.ne.s32.totalorder %s48, %s49
      %p58 = scmp.eq.s32.totalorder %s22, 0
      %p59 = por %p57, %p58
      %p60 = scmp.ne.s32.totalorder %s48, %s49
      %p61 = scmp.eq.s32.totalorder %s23, 1
      %p62 = por %p60, %p61
      %p64 = scmp.ne.s32.totalorder %s49, %s63
      %p65 = scmp.eq.s32.totalorder %s23, 0
      %p66 = por %p64, %p65
      %s67 = ssub.s32 %s17, %s24
      %p68 = scmp.eq.s32.totalorder %s67, 0
      %s70 = sadd.s32 %s69, 1
      %s71 = scalar_select %p68, %s69, %s70
      %p74 = pneg %p68
      %p75 = scmp.eq.s32.totalorder %s17, 1
      %p76 = por %p74, %p75
      %p77 = scmp.ne.s32.totalorder %s69, %s72
      %p78 = scmp.eq.s32.totalorder %s17, 0
      %p79 = por %p77, %p78
      %p80 = scmp.ne.s32.totalorder %s69, %s72
      %p81 = scmp.eq.s32.totalorder %s22, 1
      %p82 = por %p80, %p81
      %p83 = scmp.ne.s32.totalorder %s72, %s73
      %p84 = scmp.eq.s32.totalorder %s22, 0
      %p85 = por %p83, %p84
      %p86 = scmp.ne.s32.totalorder %s72, %s73
      %p87 = scmp.eq.s32.totalorder %s23, 1
      %p88 = por %p86, %p87
      %p90 = scmp.ne.s32.totalorder %s73, %s89
      %p91 = scmp.eq.s32.totalorder %s23, 0
      %p92 = por %p90, %p91
      %s93 = ssub.s32 %s17, %s24
      %p94 = scmp.eq.s32.totalorder %s93, 0
      %s96 = sadd.s32 %s95, 1
      %s97 = scalar_select %p94, %s95, %s96
      %p100 = pneg %p94
      %p101 = scmp.eq.s32.totalorder %s17, 1
      %p102 = por %p100, %p101
      %p103 = scmp.ne.s32.totalorder %s95, %s98
      %p104 = scmp.eq.s32.totalorder %s17, 0
      %p105 = por %p103, %p104
      %p106 = scmp.ne.s32.totalorder %s95, %s98
      %p107 = scmp.eq.s32.totalorder %s22, 1
      %p108 = por %p106, %p107
      %p109 = scmp.ne.s32.totalorder %s98, %s99
      %p110 = scmp.eq.s32.totalorder %s22, 0
      %p111 = por %p109, %p110
      %p112 = scmp.ne.s32.totalorder %s98, %s99
      %p113 = scmp.eq.s32.totalorder %s23, 1
      %p114 = por %p112, %p113
      %p116 = scmp.ne.s32.totalorder %s99, %s115
      %p117 = scmp.eq.s32.totalorder %s23, 0
      %p118 = por %p116, %p117
      %p119 = scmp.le.s32.totalorder 1, %s17
      %p120 = scmp.lt.s32.totalorder %s17, 3
      %p121 = pnand %p119, %p120
      %p122 = pneg %p121
      // Predicated region
      $region9: #{tpu_custom_call.1} parent=5 // pred_check
        _
      $region10: #{tpu_custom_call.1} parent=5 // pred_check_branch
        %124 = sbr.rel (%p121) target = $region12
      $region11: #{tpu_custom_call.1} parent=5 // pred_region
        %s125 = ssub.s32 %s17, 1
        // Predicated region
        $region13: #{tpu_custom_call.1} parent=11 // pred_check
          %p126 = pneg %p38
        $region14: #{tpu_custom_call.1} parent=11 // pred_check_branch
          %128 = sbr.rel (%p126) target = $region16
        $region15: #{tpu_custom_call.1} parent=11 // pred_region
          %s130 = ssub.s32 16, 16
          %131 = vsyncadd [#allocation5], %s130
          %134 = dma.hbm_to_smem %s0, 16, [#allocation2], [#allocation5]
        $region16: #{tpu_custom_call.1} parent=11 // pred_fallthru
          _
        // Predicated region
        $region17: #{tpu_custom_call.1} parent=11 // pred_check
          %p135 = pneg %p59
        $region18: #{tpu_custom_call.1} parent=11 // pred_check_branch
          %137 = sbr.rel (%p135) target = $region20
        $region19: #{tpu_custom_call.1} parent=11 // pred_region
          %s139 = ssub.s32 16, 16
          %140 = vsyncadd [#allocation6], %s139
          %s142 = sshll.u32 %s1, 4
          %s143 = int_to_ptr.vmem [resolvable:$true] %s142
          %145 = dma.vmem_to_smem %s143, 16, [#allocation7], [#allocation6]
        $region20: #{tpu_custom_call.1} parent=11 // pred_fallthru
          _
      $region12: #{tpu_custom_call.1} parent=5 // pred_fallthru
        _
      %p146 = scmp.lt.s32.totalorder %s17, 2
      // Predicated region
      $region21: #{tpu_custom_call.1} parent=5 // pred_check
        %p147 = pneg %p146
      $region22: #{tpu_custom_call.1} parent=5 // pred_check_branch
        %149 = sbr.rel (%p147) target = $region24
      $region23: #{tpu_custom_call.1} parent=5 // pred_region
        // Predicated region
        $region25: #{tpu_custom_call.1} parent=23 // pred_check
          %p150 = pneg %p79
        $region26: #{tpu_custom_call.1} parent=23 // pred_check_branch
          %152 = sbr.rel (%p150) target = $region28
        $region27: #{tpu_custom_call.1} parent=23 // pred_region
          %s153 = sand.u32 %s69, 1
          %s154 = scalar_lea.sflag [#allocation3], %s153
          %s155 = sand.u32 %s69, 1
          %s156 = smul.addr %s155, 8
          %s157 = scalar_lea.vmem [#allocation8], %s156
          %s159 = ssub.s32 128, 128
          %160 = vsyncadd %s154, %s159
          %s161 = smul.addr %s17, 2
          %s162 = smul.addr %s161, 64
          %s163 = scalar_lea.hbm %s2, %s162
          %s165 = sshll.u32 %s157, 4
          %s166 = int_to_ptr.vmem [resolvable:$true] %s165
          %168 = dma.hbm_to_vmem [thread:$0]  %s163, 128, %s166, %s154
        $region28: #{tpu_custom_call.1} parent=23 // pred_fallthru
          _
      $region24: #{tpu_custom_call.1} parent=5 // pred_fallthru
        _
      %p169 = scmp.le.s32.totalorder 1, %s17
      %p170 = scmp.lt.s32.totalorder %s17, 3
      %p171 = pnand %p169, %p170
      %p172 = pneg %p171
      // Predicated region
      $region29: #{tpu_custom_call.1} parent=5 // pred_check
        _
      $region30: #{tpu_custom_call.1} parent=5 // pred_check_branch
        %174 = sbr.rel (%p171) target = $region32
      $region31: #{tpu_custom_call.1} parent=5 // pred_region
        %s175 = ssub.s32 %s17, 1
        // Predicated region
        $region33: #{tpu_custom_call.1} parent=31 // pred_check
          %p176 = pneg %p38
        $region34: #{tpu_custom_call.1} parent=31 // pred_check_branch
          %178 = sbr.rel (%p176) target = $region36
        $region35: #{tpu_custom_call.1} parent=31 // pred_region
          %179 = dma.done [#allocation5], 16
        $region36: #{tpu_custom_call.1} parent=31 // pred_fallthru
          _
        // Predicated region
        $region37: #{tpu_custom_call.1} parent=31 // pred_check
          %p180 = pneg %p59
        $region38: #{tpu_custom_call.1} parent=31 // pred_check_branch
          %182 = sbr.rel (%p180) target = $region40
        $region39: #{tpu_custom_call.1} parent=31 // pred_region
          %183 = dma.done [#allocation6], 16
        $region40: #{tpu_custom_call.1} parent=31 // pred_fallthru
          _
        %s184 = sand.u32 %s72, 1
        %s185 = scalar_lea.sflag [#allocation3], %s184
        %s186 = sand.u32 %s72, 1
        %s187 = smul.addr %s186, 8
        %s188 = scalar_lea.vmem [#allocation8], %s187
        // Predicated region
        $region41: #{tpu_custom_call.1} parent=31 // pred_check
          %p189 = pneg %p85
        $region42: #{tpu_custom_call.1} parent=31 // pred_check_branch
          %191 = sbr.rel (%p189) target = $region44
        $region43: #{tpu_custom_call.1} parent=31 // pred_region
          %192 = dma.done %s185, 128
        $region44: #{tpu_custom_call.1} parent=31 // pred_fallthru
          _
        %193 = sfence
        %p194 = pneg %p38
        %p195 = pneg %p35
        %p196 = pneg %p59
        %p197 = pneg %p56
        %s198 = sand.u32 %s72, 1
        %s199 = scalar_lea.sflag [#allocation3], %s198
        %s200 = sand.u32 %s72, 1
        %s201 = smul.addr %s200, 8
        %s202 = scalar_lea.vmem [#allocation8], %s201
        %p203 = pneg %p85
        %p204 = pneg %p82
        %p205 = pneg %p111
        %p206 = pneg %p108
        %s207 = sand.u32 %s98, 1
        %s208 = scalar_lea.sflag [#allocation4], %s207
        %s209 = sand.u32 %s98, 1
        %s210 = smul.addr %s209, 8
        %s211 = scalar_lea.vmem [#allocation9], %s210
        %v212 = vlaneseq
        %v213 = vshrl.u32 %v212, 7
        %v214 = vlaneseq
        %v215 = vand.u32 %v214, 127
        %v216 = vsub.s32 %v215, %v213
        %v217 = vadd.s32 %v216, 1
        %vm218 = vcmp.eq.s32.totalorder %v217, 0
        %s219 = sld [smem:[#allocation2]]
        %v220 = vstv %s219
        %v221 = vsel %vm218, %v220, 0.0
        %v222 = vadd.f32 %v221, 0.0
        %vm223 = vcmp.eq.s32.totalorder %v217, 1
        %s224 = sld [smem:[#allocation2 + $0x1]]
        %v225 = vstv %s224
        %v226 = vsel %vm223, %v225, 0.0
        %v227 = vadd.f32 %v222, %v226
        %vm228 = vcmp.eq.s32.totalorder %v217, 2
        %s229 = sld [smem:[#allocation2 + $0x2]]
        %v230 = vstv %s229
        %v231 = vsel %vm228, %v230, 0.0
        %v232 = vadd.f32 %v227, %v231
        %v233 = vadd.s32 %v215, 128
        %v234 = vcvt.s32.f32 %v215
        %v235 = vcvt.s32.f32 %v233
        %v236 = vadd.f32 %v234, 0.5
        %v237 = vadd.f32 %v235, 0.5
        %v238 = vmul.f32 %v236, 0.0625
        %v239 = vmul.f32 %v237, 0.0625
        %v240 = vcvt.f32.s32.to.zero.pseudo %v238
        %v241 = vcvt.f32.s32.to.zero.pseudo %v239
        %v242 = vmul.u32 %v240, 16
        %v243 = vmul.u32 %v241, 16
        %v244 = vsub.s32 %v215, %v242
        %v245 = vsub.s32 %v233, %v243
        %v246 = vld [vmem:[%s188] sm:$0xff]
        %v248 = vcombine.high %v246, %v246
        %vm250 = vcmask 1043456
        %v251 = vsel %vm250, %v246, 0.0
        %v252 = vsel %vm250, %v248, 0.0
        %v253 = vadd.f32 %v251, %v252
        %254 = vadd.xlane.f32.xlu0 %v253
        %v255 = vpop.xlane.xlu0 %254
        %v256 = vmul.f32 %v255, 0.00390625
        %v257 = vsel %vm250, %v246, -inf
        %v258 = vsel %vm250, %v248, -inf
        %v259 = vmax.f32 %v257, %v258
        %260 = vmax.xlane.f32.xlu0 %v259
        %v261 = vpop.xlane.xlu0 %260
        %vm262 = vcmask 7168
        %v263 = vsel %vm262, %v256, %v261
        %vm264 = vcmask 31744
        %v266 = vsel %vm264, %v232, 0
        %v269 = vsel %vm250, %v263, 0
        %271 = vmatprep.subr.mxu0 0.0
        %272 = vmatpush1.msra.mxu0 %v269
        %273 = vmatprep.subr.mxu0 0.0
        %274 = vmatpush1.msra.mxu0 0.0
        %275 = vmatprep.subr.mxu0 0.0
        %276 = vmatpush1.msra.mxu0 0.0
        %277 = vmatprep.subr.mxu0 0.0
        %278 = vmatpush1.msra.mxu0 0.0
        %279 = vmatprep.subr.mxu0 0.0
        %280 = vmatpush1.msra.mxu0 0.0
        %281 = vmatprep.subr.mxu0 0.0
        %282 = vmatpush1.msra.mxu0 0.0
        %283 = vmatprep.subr.mxu0 0.0
        %284 = vmatpush1.msra.mxu0 0.0
        %285 = vmatprep.subr.mxu0 0.0
        %286 = vmatpush1.msra.mxu0 0.0
        %287 = vmatprep.subr.mxu0 0.0
        %288 = vmatpush1.msra.mxu0 0.0
        %289 = vmatprep.subr.mxu0 0.0
        %290 = vmatpush1.msra.mxu0 0.0
        %291 = vmatprep.subr.mxu0 0.0
        %292 = vmatpush1.msra.mxu0 0.0
        %293 = vmatprep.subr.mxu0 0.0
        %294 = vmatpush1.msra.mxu0 0.0
        %295 = vmatprep.subr.mxu0 0.0
        %296 = vmatpush1.msra.mxu0 0.0
        %297 = vmatprep.subr.mxu0 0.0
        %298 = vmatpush1.msra.mxu0 0.0
        %299 = vmatprep.subr.mxu0 0.0
        %300 = vmatpush1.msra.mxu0 0.0
        %301 = vmatprep.subr.mxu0 0.0
        %302 = vmatpush1.msra.mxu0 0.0
        %303 = vmatprep.subr.mxu0 0.0
        %304 = vmatpush1.msra.mxu0 0.0
        %305 = vmatprep.subr.mxu0 0.0
        %306 = vmatpush1.msra.mxu0 0.0
        %307 = vmatprep.subr.mxu0 0.0
        %308 = vmatpush1.msra.mxu0 0.0
        %309 = vmatprep.subr.mxu0 0.0
        %310 = vmatpush1.msra.mxu0 0.0
        %311 = vmatprep.subr.mxu0 0.0
        %312 = vmatpush1.msra.mxu0 0.0
        %313 = vmatprep.subr.mxu0 0.0
        %314 = vmatpush1.msra.mxu0 0.0
        %315 = vmatprep.subr.mxu0 0.0
        %316 = vmatpush1.msra.mxu0 0.0
        %317 = vmatprep.subr.mxu0 0.0
        %318 = vmatpush1.msra.mxu0 0.0
        %319 = vmatprep.subr.mxu0 0.0
        %320 = vmatpush1.msra.mxu0 0.0
        %321 = vmatprep.subr.mxu0 0.0
        %322 = vmatpush1.msra.mxu0 0.0
        %323 = vmatprep.subr.mxu0 0.0
        %324 = vmatpush1.msra.mxu0 0.0
        %325 = vmatprep.subr.mxu0 0.0
        %326 = vmatpush1.msra.mxu0 0.0
        %327 = vmatprep.subr.mxu0 0.0
        %328 = vmatpush1.msra.mxu0 0.0
        %329 = vmatprep.subr.mxu0 0.0
        %330 = vmatpush1.msra.mxu0 0.0
        %331 = vmatprep.subr.mxu0 0.0
        %332 = vmatpush1.msra.mxu0 0.0
        %333 = vmatprep.subr.mxu0 0.0
        %334 = vmatpush1.msra.mxu0 0.0
        %335 = vmatprep.mubr.f32.mxu0 0.0
        %336 = vmatmul.mubr.f32.gmra.mrb[0].mxu0 %v266
        %v337 = vpop.f32.mrb[0].mxu0
        %v338 = vadd.f32 0.0, %v337
        %v339 = vpop.f32.mrb[0].mxu0
        %340 = vdwg.mxu0
        %vm341 = vcmask 11264
        %v342 = vsel %vm341, %v338, 0.0
        %343 = vadd.xlane.f32.xlu0 %v342
        %v344 = vpop.xlane.xlu0 %343
        %v345 = vxor.u32 %v344, 2147483648
        %v346 = vmul.f32 %v345, 1.442695
        %v347 = vpow.pop %v346
        %v348 = vadd.f32 %v347, 1.0
        %v349 = vrcp.pop %v348
        %v350 = vmul.f32 1.0, %v349
        %v353 = vunpack.c.l.s4 839922192
        %v354 = vunpack.c.0.s8 %v353
        %v355 = vlaneseq
        %v356 = vshrl.u32 %v355, 7
        %v357 = vsub.s32 %v354, %v356
        %v358 = vrot.slane %v350, %v357
        %v360 = vmul.f32 %v246, %v358
        %v362 = vcombine.high %v360, %v360
        %v364 = vsel %vm250, %v360, 0.0
        %v365 = vrot.slane %v364, 4
        %v366 = vadd.f32 %v364, %v365
        %v367 = vrot.slane %v366, 2
        %v368 = vadd.f32 %v366, %v367
        %v369 = vrot.slane %v368, 1
        %v370 = vadd.f32 %v368, %v369
        %v371 = vsel %vm250, %v362, 0.0
        %v372 = vrot.slane %v371, 4
        %v373 = vadd.f32 %v371, %v372
        %v374 = vrot.slane %v373, 2
        %v375 = vadd.f32 %v373, %v374
        %v376 = vrot.slane %v375, 1
        %v377 = vadd.f32 %v375, %v376
        %v378 = vmul.f32 %v370, 0.25
        %v379 = vmul.f32 %v377, 0.25
        %v380 = vsel %vm250, %v360, -inf
        %v381 = vrot.slane %v380, 4
        %v382 = vmax.f32 %v380, %v381
        %v383 = vrot.slane %v382, 2
        %v384 = vmax.f32 %v382, %v383
        %v385 = vrot.slane %v384, 1
        %v386 = vmax.f32 %v384, %v385
        %v387 = vsel %vm250, %v362, -inf
        %v388 = vrot.slane %v387, 4
        %v389 = vmax.f32 %v387, %v388
        %v390 = vrot.slane %v389, 2
        %v391 = vmax.f32 %v389, %v390
        %v392 = vrot.slane %v391, 1
        %v393 = vmax.f32 %v391, %v392
        %v394 = vadd.s32 %v240, 4294967293
        %v395 = vadd.s32 %v241, 4294967293
        %vm396 = vcmp.ge.s32.totalorder %v394, 0
        %vm397 = vcmp.ge.s32.totalorder %v395, 0
        %vm398 = vcmp.lt.s32.totalorder %v394, 16
        %vm399 = vcmp.lt.s32.totalorder %v395, 16
        %vm400 = vmand %vm396, %vm398
        %vm401 = vmand %vm397, %vm399
        %v402 = vadd.s32 %v244, 4294967293
        %v403 = vadd.s32 %v245, 4294967293
        %vm404 = vcmp.ge.s32.totalorder %v402, 0
        %vm405 = vcmp.ge.s32.totalorder %v403, 0
        %vm406 = vmand %vm400, %vm404
        %vm407 = vmand %vm401, %vm405
        %vm408 = vcmp.lt.s32.totalorder %v402, 16
        %vm409 = vcmp.lt.s32.totalorder %v403, 16
        %vm410 = vmand %vm406, %vm408
        %vm411 = vmand %vm407, %vm409
        %412 = vrot.lane.b32.xlu0 %v378, 51
        %v413 = vpop.permute.xlu0 %412
        %414 = vrot.lane.b32.xlu0 %v379, 51
        %v415 = vpop.permute.xlu0 %414
        %vm416 = vcmp.lt.s32.totalorder %v215, 51
        %v417 = vsel %vm416, %v413, %v415
        %v418 = vsel %vm416, %v415, %v413
        %419 = vrot.lane.b32.xlu0 %v386, 51
        %v420 = vpop.permute.xlu0 %419
        %421 = vrot.lane.b32.xlu0 %v393, 51
        %v422 = vpop.permute.xlu0 %421
        %v423 = vsel %vm416, %v420, %v422
        %v424 = vsel %vm416, %v422, %v420
        %v425 = vsel %vm410, %v418, 0.0
        %v426 = vsel %vm411, %v417, 0.0
        %v427 = vsel %vm410, %v424, 0.0
        %v428 = vsel %vm411, %v423, 0.0
        %s429 = sld [smem:[#allocation7]]
        %v430 = vstv %s429
        %v431 = vmul.f32 %v430, %v425
        %v432 = vmul.f32 %v430, %v426
        %v433 = vadd.f32 %v431, 0.0
        %v434 = vadd.f32 %v432, 0.0
        %s435 = sld [smem:[#allocation7 + $0x31]]
        %v436 = vstv %s435
        %v437 = vmul.f32 %v436, %v427
        %v438 = vmul.f32 %v436, %v428
        %v439 = vadd.f32 %v433, %v437
        %v440 = vadd.f32 %v434, %v438
        %v441 = vadd.s32 %v244, 4294967294
        %v442 = vadd.s32 %v245, 4294967294
        %vm443 = vcmp.ge.s32.totalorder %v441, 0
        %vm444 = vcmp.ge.s32.totalorder %v442, 0
        %vm445 = vmand %vm400, %vm443
        %vm446 = vmand %vm401, %vm444
        %vm447 = vcmp.lt.s32.totalorder %v441, 16
        %vm448 = vcmp.lt.s32.totalorder %v442, 16
        %vm449 = vmand %vm445, %vm447
        %vm450 = vmand %vm446, %vm448
        %451 = vrot.lane.b32.xlu0 %v378, 50
        %v452 = vpop.permute.xlu0 %451
        %453 = vrot.lane.b32.xlu0 %v379, 50
        %v454 = vpop.permute.xlu0 %453
        %vm455 = vcmp.lt.s32.totalorder %v215, 50
        %v456 = vsel %vm455, %v452, %v454
        %v457 = vsel %vm455, %v454, %v452
        %458 = vrot.lane.b32.xlu0 %v386, 50
        %v459 = vpop.permute.xlu0 %458
        %460 = vrot.lane.b32.xlu0 %v393, 50
        %v461 = vpop.permute.xlu0 %460
        %v462 = vsel %vm455, %v459, %v461
        %v463 = vsel %vm455, %v461, %v459
        %v464 = vsel %vm449, %v457, 0.0
        %v465 = vsel %vm450, %v456, 0.0
        %v466 = vsel %vm449, %v463, 0.0
        %v467 = vsel %vm450, %v462, 0.0
        %s468 = sld [smem:[#allocation7 + $0x1]]
        %v469 = vstv %s468
        %v470 = vmul.f32 %v469, %v464
        %v471 = vmul.f32 %v469, %v465
        %v472 = vadd.f32 %v439, %v470
        %v473 = vadd.f32 %v440, %v471
        %s474 = sld [smem:[#allocation7 + $0x32]]
        %v475 = vstv %s474
        %v476 = vmul.f32 %v475, %v466
        %v477 = vmul.f32 %v475, %v467
        %v478 = vadd.f32 %v472, %v476
        %v479 = vadd.f32 %v473, %v477
        %v480 = vadd.s32 %v244, 4294967295
        %v481 = vadd.s32 %v245, 4294967295
        %vm482 = vcmp.ge.s32.totalorder %v480, 0
        %vm483 = vcmp.ge.s32.totalorder %v481, 0
        %vm484 = vmand %vm400, %vm482
        %vm485 = vmand %vm401, %vm483
        %vm486 = vcmp.lt.s32.totalorder %v480, 16
        %vm487 = vcmp.lt.s32.totalorder %v481, 16
        %vm488 = vmand %vm484, %vm486
        %vm489 = vmand %vm485, %vm487
        %490 = vrot.lane.b32.xlu0 %v378, 49
        %v491 = vpop.permute.xlu0 %490
        %492 = vrot.lane.b32.xlu0 %v379, 49
        %v493 = vpop.permute.xlu0 %492
        %vm494 = vcmp.lt.s32.totalorder %v215, 49
        %v495 = vsel %vm494, %v491, %v493
        %v496 = vsel %vm494, %v493, %v491
        %497 = vrot.lane.b32.xlu0 %v386, 49
        %v498 = vpop.permute.xlu0 %497
        %499 = vrot.lane.b32.xlu0 %v393, 49
        %v500 = vpop.permute.xlu0 %499
        %v501 = vsel %vm494, %v498, %v500
        %v502 = vsel %vm494, %v500, %v498
        %v503 = vsel %vm488, %v496, 0.0
        %v504 = vsel %vm489, %v495, 0.0
        %v505 = vsel %vm488, %v502, 0.0
        %v506 = vsel %vm489, %v501, 0.0
        %s507 = sld [smem:[#allocation7 + $0x2]]
        %v508 = vstv %s507
        %v509 = vmul.f32 %v508, %v503
        %v510 = vmul.f32 %v508, %v504
        %v511 = vadd.f32 %v478, %v509
        %v512 = vadd.f32 %v479, %v510
        %s513 = sld [smem:[#allocation7 + $0x33]]
        %v514 = vstv %s513
        %v515 = vmul.f32 %v514, %v505
        %v516 = vmul.f32 %v514, %v506
        %v517 = vadd.f32 %v511, %v515
        %v518 = vadd.f32 %v512, %v516
        %vm519 = vcmp.ge.s32.totalorder %v244, 0
        %vm520 = vcmp.ge.s32.totalorder %v245, 0
        %vm521 = vmand %vm400, %vm519
        %vm522 = vmand %vm401, %vm520
        %vm523 = vcmp.lt.s32.totalorder %v244, 16
        %vm524 = vcmp.lt.s32.totalorder %v245, 16
        %vm525 = vmand %vm521, %vm523
        %vm526 = vmand %vm522, %vm524
        %527 = vrot.lane.b32.xlu0 %v378, 48
        %v528 = vpop.permute.xlu0 %527
        %529 = vrot.lane.b32.xlu0 %v379, 48
        %v530 = vpop.permute.xlu0 %529
        %vm531 = vcmp.lt.s32.totalorder %v215, 48
        %v532 = vsel %vm531, %v528, %v530
        %v533 = vsel %vm531, %v530, %v528
        %534 = vrot.lane.b32.xlu0 %v386, 48
        %v535 = vpop.permute.xlu0 %534
        %536 = vrot.lane.b32.xlu0 %v393, 48
        %v537 = vpop.permute.xlu0 %536
        %v538 = vsel %vm531, %v535, %v537
        %v539 = vsel %vm531, %v537, %v535
        %v540 = vsel %vm525, %v533, 0.0
        %v541 = vsel %vm526, %v532, 0.0
        %v542 = vsel %vm525, %v539, 0.0
        %v543 = vsel %vm526, %v538, 0.0
        %s544 = sld [smem:[#allocation7 + $0x3]]
        %v545 = vstv %s544
        %v546 = vmul.f32 %v545, %v540
        %v547 = vmul.f32 %v545, %v541
        %v548 = vadd.f32 %v517, %v546
        %v549 = vadd.f32 %v518, %v547
        %s550 = sld [smem:[#allocation7 + $0x34]]
        %v551 = vstv %s550
        %v552 = vmul.f32 %v551, %v542
        %v553 = vmul.f32 %v551, %v543
        %v554 = vadd.f32 %v548, %v552
        %v555 = vadd.f32 %v549, %v553
        %v556 = vadd.s32 %v244, 1
        %v557 = vadd.s32 %v245, 1
        %vm558 = vcmp.ge.s32.totalorder %v556, 0
        %vm559 = vcmp.ge.s32.totalorder %v557, 0
        %vm560 = vmand %vm400, %vm558
        %vm561 = vmand %vm401, %vm559
        %vm562 = vcmp.lt.s32.totalorder %v556, 16
        %vm563 = vcmp.lt.s32.totalorder %v557, 16
        %vm564 = vmand %vm560, %vm562
        %vm565 = vmand %vm561, %vm563
        %566 = vrot.lane.b32.xlu0 %v378, 47
        %v567 = vpop.permute.xlu0 %566
        %568 = vrot.lane.b32.xlu0 %v379, 47
        %v569 = vpop.permute.xlu0 %568
        %vm570 = vcmp.lt.s32.totalorder %v215, 47
        %v571 = vsel %vm570, %v567, %v569
        %v572 = vsel %vm570, %v569, %v567
        %573 = vrot.lane.b32.xlu0 %v386, 47
        %v574 = vpop.permute.xlu0 %573
        %575 = vrot.lane.b32.xlu0 %v393, 47
        %v576 = vpop.permute.xlu0 %575
        %v577 = vsel %vm570, %v574, %v576
        %v578 = vsel %vm570, %v576, %v574
        %v579 = vsel %vm564, %v572, 0.0
        %v580 = vsel %vm565, %v571, 0.0
        %v581 = vsel %vm564, %v578, 0.0
        %v582 = vsel %vm565, %v577, 0.0
        %s583 = sld [smem:[#allocation7 + $0x4]]
        %v584 = vstv %s583
        %v585 = vmul.f32 %v584, %v579
        %v586 = vmul.f32 %v584, %v580
        %v587 = vadd.f32 %v554, %v585
        %v588 = vadd.f32 %v555, %v586
        %s589 = sld [smem:[#allocation7 + $0x35]]
        %v590 = vstv %s589
        %v591 = vmul.f32 %v590, %v581
        %v592 = vmul.f32 %v590, %v582
        %v593 = vadd.f32 %v587, %v591
        %v594 = vadd.f32 %v588, %v592
        %v595 = vadd.s32 %v244, 2
        %v596 = vadd.s32 %v245, 2
        %vm597 = vcmp.ge.s32.totalorder %v595, 0
        %vm598 = vcmp.ge.s32.totalorder %v596, 0
        %vm599 = vmand %vm400, %vm597
        %vm600 = vmand %vm401, %vm598
        %vm601 = vcmp.lt.s32.totalorder %v595, 16
        %vm602 = vcmp.lt.s32.totalorder %v596, 16
        %vm603 = vmand %vm599, %vm601
        %vm604 = vmand %vm600, %vm602
        %605 = vrot.lane.b32.xlu0 %v378, 46
        %v606 = vpop.permute.xlu0 %605
        %607 = vrot.lane.b32.xlu0 %v379, 46
        %v608 = vpop.permute.xlu0 %607
        %vm609 = vcmp.lt.s32.totalorder %v215, 46
        %v610 = vsel %vm609, %v606, %v608
        %v611 = vsel %vm609, %v608, %v606
        %612 = vrot.lane.b32.xlu0 %v386, 46
        %v613 = vpop.permute.xlu0 %612
        %614 = vrot.lane.b32.xlu0 %v393, 46
        %v615 = vpop.permute.xlu0 %614
        %v616 = vsel %vm609, %v613, %v615
        %v617 = vsel %vm609, %v615, %v613
        %v618 = vsel %vm603, %v611, 0.0
        %v619 = vsel %vm604, %v610, 0.0
        %v620 = vsel %vm603, %v617, 0.0
        %v621 = vsel %vm604, %v616, 0.0
        %s622 = sld [smem:[#allocation7 + $0x5]]
        %v623 = vstv %s622
        %v624 = vmul.f32 %v623, %v618
        %v625 = vmul.f32 %v623, %v619
        %v626 = vadd.f32 %v593, %v624
        %v627 = vadd.f32 %v594, %v625
        %s628 = sld [smem:[#allocation7 + $0x36]]
        %v629 = vstv %s628
        %v630 = vmul.f32 %v629, %v620
        %v631 = vmul.f32 %v629, %v621
        %v632 = vadd.f32 %v626, %v630
        %v633 = vadd.f32 %v627, %v631
        %v634 = vadd.s32 %v244, 3
        %v635 = vadd.s32 %v245, 3
        %vm636 = vcmp.ge.s32.totalorder %v634, 0
        %vm637 = vcmp.ge.s32.totalorder %v635, 0
        %vm638 = vmand %vm400, %vm636
        %vm639 = vmand %vm401, %vm637
        %vm640 = vcmp.lt.s32.totalorder %v634, 16
        %vm641 = vcmp.lt.s32.totalorder %v635, 16
        %vm642 = vmand %vm638, %vm640
        %vm643 = vmand %vm639, %vm641
        %644 = vrot.lane.b32.xlu0 %v378, 45
        %v645 = vpop.permute.xlu0 %644
        %646 = vrot.lane.b32.xlu0 %v379, 45
        %v647 = vpop.permute.xlu0 %646
        %vm648 = vcmp.lt.s32.totalorder %v215, 45
        %v649 = vsel %vm648, %v645, %v647
        %v650 = vsel %vm648, %v647, %v645
        %651 = vrot.lane.b32.xlu0 %v386, 45
        %v652 = vpop.permute.xlu0 %651
        %653 = vrot.lane.b32.xlu0 %v393, 45
        %v654 = vpop.permute.xlu0 %653
        %v655 = vsel %vm648, %v652, %v654
        %v656 = vsel %vm648, %v654, %v652
        %v657 = vsel %vm642, %v650, 0.0
        %v658 = vsel %vm643, %v649, 0.0
        %v659 = vsel %vm642, %v656, 0.0
        %v660 = vsel %vm643, %v655, 0.0
        %s661 = sld [smem:[#allocation7 + $0x6]]
        %v662 = vstv %s661
        %v663 = vmul.f32 %v662, %v657
        %v664 = vmul.f32 %v662, %v658
        %v665 = vadd.f32 %v632, %v663
        %v666 = vadd.f32 %v633, %v664
        %s667 = sld [smem:[#allocation7 + $0x37]]
        %v668 = vstv %s667
        %v669 = vmul.f32 %v668, %v659
        %v670 = vmul.f32 %v668, %v660
        %v671 = vadd.f32 %v665, %v669
        %v672 = vadd.f32 %v666, %v670
        %v673 = vadd.s32 %v240, 4294967294
        %v674 = vadd.s32 %v241, 4294967294
        %vm675 = vcmp.ge.s32.totalorder %v673, 0
        %vm676 = vcmp.ge.s32.totalorder %v674, 0
        %vm677 = vcmp.lt.s32.totalorder %v673, 16
        %vm678 = vcmp.lt.s32.totalorder %v674, 16
        %vm679 = vmand %vm675, %vm677
        %vm680 = vmand %vm676, %vm678
        %vm681 = vmand %vm679, %vm404
        %vm682 = vmand %vm680, %vm405
        %vm683 = vmand %vm681, %vm408
        %vm684 = vmand %vm682, %vm409
        %685 = vrot.lane.b32.xlu0 %v378, 35
        %v686 = vpop.permute.xlu0 %685
        %687 = vrot.lane.b32.xlu0 %v379, 35
        %v688 = vpop.permute.xlu0 %687
        %vm689 = vcmp.lt.s32.totalorder %v215, 35
        %v690 = vsel %vm689, %v686, %v688
        %v691 = vsel %vm689, %v688, %v686
        %692 = vrot.lane.b32.xlu0 %v386, 35
        %v693 = vpop.permute.xlu0 %692
        %694 = vrot.lane.b32.xlu0 %v393, 35
        %v695 = vpop.permute.xlu0 %694
        %v696 = vsel %vm689, %v693, %v695
        %v697 = vsel %vm689, %v695, %v693
        %v698 = vsel %vm683, %v691, 0.0
        %v699 = vsel %vm684, %v690, 0.0
        %v700 = vsel %vm683, %v697, 0.0
        %v701 = vsel %vm684, %v696, 0.0
        %s702 = sld [smem:[#allocation7 + $0x7]]
        %v703 = vstv %s702
        %v704 = vmul.f32 %v703, %v698
        %v705 = vmul.f32 %v703, %v699
        %v706 = vadd.f32 %v671, %v704
        %v707 = vadd.f32 %v672, %v705
        %s708 = sld [smem:[#allocation7 + $0x38]]
        %v709 = vstv %s708
        %v710 = vmul.f32 %v709, %v700
        %v711 = vmul.f32 %v709, %v701
        %v712 = vadd.f32 %v706, %v710
        %v713 = vadd.f32 %v707, %v711
        %vm714 = vmand %vm679, %vm443
        %vm715 = vmand %vm680, %vm444
        %vm716 = vmand %vm714, %vm447
        %vm717 = vmand %vm715, %vm448
        %718 = vrot.lane.b32.xlu0 %v378, 34
        %v719 = vpop.permute.xlu0 %718
        %720 = vrot.lane.b32.xlu0 %v379, 34
        %v721 = vpop.permute.xlu0 %720
        %vm722 = vcmp.lt.s32.totalorder %v215, 34
        %v723 = vsel %vm722, %v719, %v721
        %v724 = vsel %vm722, %v721, %v719
        %725 = vrot.lane.b32.xlu0 %v386, 34
        %v726 = vpop.permute.xlu0 %725
        %727 = vrot.lane.b32.xlu0 %v393, 34
        %v728 = vpop.permute.xlu0 %727
        %v729 = vsel %vm722, %v726, %v728
        %v730 = vsel %vm722, %v728, %v726
        %v731 = vsel %vm716, %v724, 0.0
        %v732 = vsel %vm717, %v723, 0.0
        %v733 = vsel %vm716, %v730, 0.0
        %v734 = vsel %vm717, %v729, 0.0
        %s735 = sld [smem:[#allocation7 + $0x8]]
        %v736 = vstv %s735
        %v737 = vmul.f32 %v736, %v731
        %v738 = vmul.f32 %v736, %v732
        %v739 = vadd.f32 %v712, %v737
        %v740 = vadd.f32 %v713, %v738
        %s741 = sld [smem:[#allocation7 + $0x39]]
        %v742 = vstv %s741
        %v743 = vmul.f32 %v742, %v733
        %v744 = vmul.f32 %v742, %v734
        %v745 = vadd.f32 %v739, %v743
        %v746 = vadd.f32 %v740, %v744
        %vm747 = vmand %vm679, %vm482
        %vm748 = vmand %vm680, %vm483
        %vm749 = vmand %vm747, %vm486
        %vm750 = vmand %vm748, %vm487
        %751 = vrot.lane.b32.xlu0 %v378, 33
        %v752 = vpop.permute.xlu0 %751
        %753 = vrot.lane.b32.xlu0 %v379, 33
        %v754 = vpop.permute.xlu0 %753
        %vm755 = vcmp.lt.s32.totalorder %v215, 33
        %v756 = vsel %vm755, %v752, %v754
        %v757 = vsel %vm755, %v754, %v752
        %758 = vrot.lane.b32.xlu0 %v386, 33
        %v759 = vpop.permute.xlu0 %758
        %760 = vrot.lane.b32.xlu0 %v393, 33
        %v761 = vpop.permute.xlu0 %760
        %v762 = vsel %vm755, %v759, %v761
        %v763 = vsel %vm755, %v761, %v759
        %v764 = vsel %vm749, %v757, 0.0
        %v765 = vsel %vm750, %v756, 0.0
        %v766 = vsel %vm749, %v763, 0.0
        %v767 = vsel %vm750, %v762, 0.0
        %s768 = sld [smem:[#allocation7 + $0x9]]
        %v769 = vstv %s768
        %v770 = vmul.f32 %v769, %v764
        %v771 = vmul.f32 %v769, %v765
        %v772 = vadd.f32 %v745, %v770
        %v773 = vadd.f32 %v746, %v771
        %s774 = sld [smem:[#allocation7 + $0x3a]]
        %v775 = vstv %s774
        %v776 = vmul.f32 %v775, %v766
        %v777 = vmul.f32 %v775, %v767
        %v778 = vadd.f32 %v772, %v776
        %v779 = vadd.f32 %v773, %v777
        %vm780 = vmand %vm679, %vm519
        %vm781 = vmand %vm680, %vm520
        %vm782 = vmand %vm780, %vm523
        %vm783 = vmand %vm781, %vm524
        %784 = vrot.lane.b32.xlu0 %v378, 32
        %v785 = vpop.permute.xlu0 %784
        %786 = vrot.lane.b32.xlu0 %v379, 32
        %v787 = vpop.permute.xlu0 %786
        %vm788 = vcmp.lt.s32.totalorder %v215, 32
        %v789 = vsel %vm788, %v785, %v787
        %v790 = vsel %vm788, %v787, %v785
        %791 = vrot.lane.b32.xlu0 %v386, 32
        %v792 = vpop.permute.xlu0 %791
        %793 = vrot.lane.b32.xlu0 %v393, 32
        %v794 = vpop.permute.xlu0 %793
        %v795 = vsel %vm788, %v792, %v794
        %v796 = vsel %vm788, %v794, %v792
        %v797 = vsel %vm782, %v790, 0.0
        %v798 = vsel %vm783, %v789, 0.0
        %v799 = vsel %vm782, %v796, 0.0
        %v800 = vsel %vm783, %v795, 0.0
        %s801 = sld [smem:[#allocation7 + $0xa]]
        %v802 = vstv %s801
        %v803 = vmul.f32 %v802, %v797
        %v804 = vmul.f32 %v802, %v798
        %v805 = vadd.f32 %v778, %v803
        %v806 = vadd.f32 %v779, %v804
        %s807 = sld [smem:[#allocation7 + $0x3b]]
        %v808 = vstv %s807
        %v809 = vmul.f32 %v808, %v799
        %v810 = vmul.f32 %v808, %v800
        %v811 = vadd.f32 %v805, %v809
        %v812 = vadd.f32 %v806, %v810
        %vm813 = vmand %vm679, %vm558
        %vm814 = vmand %vm680, %vm559
        %vm815 = vmand %vm813, %vm562
        %vm816 = vmand %vm814, %vm563
        %817 = vrot.lane.b32.xlu0 %v378, 31
        %v818 = vpop.permute.xlu0 %817
        %819 = vrot.lane.b32.xlu0 %v379, 31
        %v820 = vpop.permute.xlu0 %819
        %vm821 = vcmp.lt.s32.totalorder %v215, 31
        %v822 = vsel %vm821, %v818, %v820
        %v823 = vsel %vm821, %v820, %v818
        %824 = vrot.lane.b32.xlu0 %v386, 31
        %v825 = vpop.permute.xlu0 %824
        %826 = vrot.lane.b32.xlu0 %v393, 31
        %v827 = vpop.permute.xlu0 %826
        %v828 = vsel %vm821, %v825, %v827
        %v829 = vsel %vm821, %v827, %v825
        %v830 = vsel %vm815, %v823, 0.0
        %v831 = vsel %vm816, %v822, 0.0
        %v832 = vsel %vm815, %v829, 0.0
        %v833 = vsel %vm816, %v828, 0.0
        %s834 = sld [smem:[#allocation7 + $0xb]]
        %v835 = vstv %s834
        %v836 = vmul.f32 %v835, %v830
        %v837 = vmul.f32 %v835, %v831
        %v838 = vadd.f32 %v811, %v836
        %v839 = vadd.f32 %v812, %v837
        %s840 = sld [smem:[#allocation7 + $0x3c]]
        %v841 = vstv %s840
        %v842 = vmul.f32 %v841, %v832
        %v843 = vmul.f32 %v841, %v833
        %v844 = vadd.f32 %v838, %v842
        %v845 = vadd.f32 %v839, %v843
        %vm846 = vmand %vm679, %vm597
        %vm847 = vmand %vm680, %vm598
        %vm848 = vmand %vm846, %vm601
        %vm849 = vmand %vm847, %vm602
        %850 = vrot.lane.b32.xlu0 %v378, 30
        %v851 = vpop.permute.xlu0 %850
        %852 = vrot.lane.b32.xlu0 %v379, 30
        %v853 = vpop.permute.xlu0 %852
        %vm854 = vcmp.lt.s32.totalorder %v215, 30
        %v855 = vsel %vm854, %v851, %v853
        %v856 = vsel %vm854, %v853, %v851
        %857 = vrot.lane.b32.xlu0 %v386, 30
        %v858 = vpop.permute.xlu0 %857
        %859 = vrot.lane.b32.xlu0 %v393, 30
        %v860 = vpop.permute.xlu0 %859
        %v861 = vsel %vm854, %v858, %v860
        %v862 = vsel %vm854, %v860, %v858
        %v863 = vsel %vm848, %v856, 0.0
        %v864 = vsel %vm849, %v855, 0.0
        %v865 = vsel %vm848, %v862, 0.0
        %v866 = vsel %vm849, %v861, 0.0
        %s867 = sld [smem:[#allocation7 + $0xc]]
        %v868 = vstv %s867
        %v869 = vmul.f32 %v868, %v863
        %v870 = vmul.f32 %v868, %v864
        %v871 = vadd.f32 %v844, %v869
        %v872 = vadd.f32 %v845, %v870
        %s873 = sld [smem:[#allocation7 + $0x3d]]
        %v874 = vstv %s873
        %v875 = vmul.f32 %v874, %v865
        %v876 = vmul.f32 %v874, %v866
        %v877 = vadd.f32 %v871, %v875
        %v878 = vadd.f32 %v872, %v876
        %vm879 = vmand %vm679, %vm636
        %vm880 = vmand %vm680, %vm637
        %vm881 = vmand %vm879, %vm640
        %vm882 = vmand %vm880, %vm641
        %883 = vrot.lane.b32.xlu0 %v378, 29
        %v884 = vpop.permute.xlu0 %883
        %885 = vrot.lane.b32.xlu0 %v379, 29
        %v886 = vpop.permute.xlu0 %885
        %vm887 = vcmp.lt.s32.totalorder %v215, 29
        %v888 = vsel %vm887, %v884, %v886
        %v889 = vsel %vm887, %v886, %v884
        %890 = vrot.lane.b32.xlu0 %v386, 29
        %v891 = vpop.permute.xlu0 %890
        %892 = vrot.lane.b32.xlu0 %v393, 29
        %v893 = vpop.permute.xlu0 %892
        %v894 = vsel %vm887, %v891, %v893
        %v895 = vsel %vm887, %v893, %v891
        %v896 = vsel %vm881, %v889, 0.0
        %v897 = vsel %vm882, %v888, 0.0
        %v898 = vsel %vm881, %v895, 0.0
        %v899 = vsel %vm882, %v894, 0.0
        %s900 = sld [smem:[#allocation7 + $0xd]]
        %v901 = vstv %s900
        %v902 = vmul.f32 %v901, %v896
        %v903 = vmul.f32 %v901, %v897
        %v904 = vadd.f32 %v877, %v902
        %v905 = vadd.f32 %v878, %v903
        %s906 = sld [smem:[#allocation7 + $0x3e]]
        %v907 = vstv %s906
        %v908 = vmul.f32 %v907, %v898
        %v909 = vmul.f32 %v907, %v899
        %v910 = vadd.f32 %v904, %v908
        %v911 = vadd.f32 %v905, %v909
        %v912 = vadd.s32 %v240, 4294967295
        %v913 = vadd.s32 %v241, 4294967295
        %vm914 = vcmp.ge.s32.totalorder %v912, 0
        %vm915 = vcmp.ge.s32.totalorder %v913, 0
        %vm916 = vcmp.lt.s32.totalorder %v912, 16
        %vm917 = vcmp.lt.s32.totalorder %v913, 16
        %vm918 = vmand %vm914, %vm916
        %vm919 = vmand %vm915, %vm917
        %vm920 = vmand %vm918, %vm404
        %vm921 = vmand %vm919, %vm405
        %vm922 = vmand %vm920, %vm408
        %vm923 = vmand %vm921, %vm409
        %924 = vrot.lane.b32.xlu0 %v378, 19
        %v925 = vpop.permute.xlu0 %924
        %926 = vrot.lane.b32.xlu0 %v379, 19
        %v927 = vpop.permute.xlu0 %926
        %vm928 = vcmp.lt.s32.totalorder %v215, 19
        %v929 = vsel %vm928, %v925, %v927
        %v930 = vsel %vm928, %v927, %v925
        %931 = vrot.lane.b32.xlu0 %v386, 19
        %v932 = vpop.permute.xlu0 %931
        %933 = vrot.lane.b32.xlu0 %v393, 19
        %v934 = vpop.permute.xlu0 %933
        %v935 = vsel %vm928, %v932, %v934
        %v936 = vsel %vm928, %v934, %v932
        %v937 = vsel %vm922, %v930, 0.0
        %v938 = vsel %vm923, %v929, 0.0
        %v939 = vsel %vm922, %v936, 0.0
        %v940 = vsel %vm923, %v935, 0.0
        %s941 = sld [smem:[#allocation7 + $0xe]]
        %v942 = vstv %s941
        %v943 = vmul.f32 %v942, %v937
        %v944 = vmul.f32 %v942, %v938
        %v945 = vadd.f32 %v910, %v943
        %v946 = vadd.f32 %v911, %v944
        %s947 = sld [smem:[#allocation7 + $0x3f]]
        %v948 = vstv %s947
        %v949 = vmul.f32 %v948, %v939
        %v950 = vmul.f32 %v948, %v940
        %v951 = vadd.f32 %v945, %v949
        %v952 = vadd.f32 %v946, %v950
        %vm953 = vmand %vm918, %vm443
        %vm954 = vmand %vm919, %vm444
        %vm955 = vmand %vm953, %vm447
        %vm956 = vmand %vm954, %vm448
        %957 = vrot.lane.b32.xlu0 %v378, 18
        %v958 = vpop.permute.xlu0 %957
        %959 = vrot.lane.b32.xlu0 %v379, 18
        %v960 = vpop.permute.xlu0 %959
        %vm961 = vcmp.lt.s32.totalorder %v215, 18
        %v962 = vsel %vm961, %v958, %v960
        %v963 = vsel %vm961, %v960, %v958
        %964 = vrot.lane.b32.xlu0 %v386, 18
        %v965 = vpop.permute.xlu0 %964
        %966 = vrot.lane.b32.xlu0 %v393, 18
        %v967 = vpop.permute.xlu0 %966
        %v968 = vsel %vm961, %v965, %v967
        %v969 = vsel %vm961, %v967, %v965
        %v970 = vsel %vm955, %v963, 0.0
        %v971 = vsel %vm956, %v962, 0.0
        %v972 = vsel %vm955, %v969, 0.0
        %v973 = vsel %vm956, %v968, 0.0
        %s974 = sld [smem:[#allocation7 + $0xf]]
        %v975 = vstv %s974
        %v976 = vmul.f32 %v975, %v970
        %v977 = vmul.f32 %v975, %v971
        %v978 = vadd.f32 %v951, %v976
        %v979 = vadd.f32 %v952, %v977
        %s980 = sld [smem:[#allocation7 + $0x40]]
        %v981 = vstv %s980
        %v982 = vmul.f32 %v981, %v972
        %v983 = vmul.f32 %v981, %v973
        %v984 = vadd.f32 %v978, %v982
        %v985 = vadd.f32 %v979, %v983
        %vm986 = vmand %vm918, %vm482
        %vm987 = vmand %vm919, %vm483
        %vm988 = vmand %vm986, %vm486
        %vm989 = vmand %vm987, %vm487
        %990 = vrot.lane.b32.xlu0 %v378, 17
        %v991 = vpop.permute.xlu0 %990
        %992 = vrot.lane.b32.xlu0 %v379, 17
        %v993 = vpop.permute.xlu0 %992
        %vm994 = vcmp.lt.s32.totalorder %v215, 17
        %v995 = vsel %vm994, %v991, %v993
        %v996 = vsel %vm994, %v993, %v991
        %997 = vrot.lane.b32.xlu0 %v386, 17
        %v998 = vpop.permute.xlu0 %997
        %999 = vrot.lane.b32.xlu0 %v393, 17
        %v1000 = vpop.permute.xlu0 %999
        %v1001 = vsel %vm994, %v998, %v1000
        %v1002 = vsel %vm994, %v1000, %v998
        %v1003 = vsel %vm988, %v996, 0.0
        %v1004 = vsel %vm989, %v995, 0.0
        %v1005 = vsel %vm988, %v1002, 0.0
        %v1006 = vsel %vm989, %v1001, 0.0
        %s1007 = sld [smem:[#allocation7 + $0x10]]
        %v1008 = vstv %s1007
        %v1009 = vmul.f32 %v1008, %v1003
        %v1010 = vmul.f32 %v1008, %v1004
        %v1011 = vadd.f32 %v984, %v1009
        %v1012 = vadd.f32 %v985, %v1010
        %s1013 = sld [smem:[#allocation7 + $0x41]]
        %v1014 = vstv %s1013
        %v1015 = vmul.f32 %v1014, %v1005
        %v1016 = vmul.f32 %v1014, %v1006
        %v1017 = vadd.f32 %v1011, %v1015
        %v1018 = vadd.f32 %v1012, %v1016
        %vm1019 = vmand %vm918, %vm519
        %vm1020 = vmand %vm919, %vm520
        %vm1021 = vmand %vm1019, %vm523
        %vm1022 = vmand %vm1020, %vm524
        %1023 = vrot.lane.b32.xlu0 %v378, 16
        %v1024 = vpop.permute.xlu0 %1023
        %1025 = vrot.lane.b32.xlu0 %v379, 16
        %v1026 = vpop.permute.xlu0 %1025
        %vm1027 = vcmp.lt.s32.totalorder %v215, 16
        %v1028 = vsel %vm1027, %v1024, %v1026
        %v1029 = vsel %vm1027, %v1026, %v1024
        %1030 = vrot.lane.b32.xlu0 %v386, 16
        %v1031 = vpop.permute.xlu0 %1030
        %1032 = vrot.lane.b32.xlu0 %v393, 16
        %v1033 = vpop.permute.xlu0 %1032
        %v1034 = vsel %vm1027, %v1031, %v1033
        %v1035 = vsel %vm1027, %v1033, %v1031
        %v1036 = vsel %vm1021, %v1029, 0.0
        %v1037 = vsel %vm1022, %v1028, 0.0
        %v1038 = vsel %vm1021, %v1035, 0.0
        %v1039 = vsel %vm1022, %v1034, 0.0
        %s1040 = sld [smem:[#allocation7 + $0x11]]
        %v1041 = vstv %s1040
        %v1042 = vmul.f32 %v1041, %v1036
        %v1043 = vmul.f32 %v1041, %v1037
        %v1044 = vadd.f32 %v1017, %v1042
        %v1045 = vadd.f32 %v1018, %v1043
        %s1046 = sld [smem:[#allocation7 + $0x42]]
        %v1047 = vstv %s1046
        %v1048 = vmul.f32 %v1047, %v1038
        %v1049 = vmul.f32 %v1047, %v1039
        %v1050 = vadd.f32 %v1044, %v1048
        %v1051 = vadd.f32 %v1045, %v1049
        %vm1052 = vmand %vm918, %vm558
        %vm1053 = vmand %vm919, %vm559
        %vm1054 = vmand %vm1052, %vm562
        %vm1055 = vmand %vm1053, %vm563
        %1056 = vrot.lane.b32.xlu0 %v378, 15
        %v1057 = vpop.permute.xlu0 %1056
        %1058 = vrot.lane.b32.xlu0 %v379, 15
        %v1059 = vpop.permute.xlu0 %1058
        %vm1060 = vcmp.lt.s32.totalorder %v215, 15
        %v1061 = vsel %vm1060, %v1057, %v1059
        %v1062 = vsel %vm1060, %v1059, %v1057
        %1063 = vrot.lane.b32.xlu0 %v386, 15
        %v1064 = vpop.permute.xlu0 %1063
        %1065 = vrot.lane.b32.xlu0 %v393, 15
        %v1066 = vpop.permute.xlu0 %1065
        %v1067 = vsel %vm1060, %v1064, %v1066
        %v1068 = vsel %vm1060, %v1066, %v1064
        %v1069 = vsel %vm1054, %v1062, 0.0
        %v1070 = vsel %vm1055, %v1061, 0.0
        %v1071 = vsel %vm1054, %v1068, 0.0
        %v1072 = vsel %vm1055, %v1067, 0.0
        %s1073 = sld [smem:[#allocation7 + $0x12]]
        %v1074 = vstv %s1073
        %v1075 = vmul.f32 %v1074, %v1069
        %v1076 = vmul.f32 %v1074, %v1070
        %v1077 = vadd.f32 %v1050, %v1075
        %v1078 = vadd.f32 %v1051, %v1076
        %s1079 = sld [smem:[#allocation7 + $0x43]]
        %v1080 = vstv %s1079
        %v1081 = vmul.f32 %v1080, %v1071
        %v1082 = vmul.f32 %v1080, %v1072
        %v1083 = vadd.f32 %v1077, %v1081
        %v1084 = vadd.f32 %v1078, %v1082
        %vm1085 = vmand %vm918, %vm597
        %vm1086 = vmand %vm919, %vm598
        %vm1087 = vmand %vm1085, %vm601
        %vm1088 = vmand %vm1086, %vm602
        %1089 = vrot.lane.b32.xlu0 %v378, 14
        %v1090 = vpop.permute.xlu0 %1089
        %1091 = vrot.lane.b32.xlu0 %v379, 14
        %v1092 = vpop.permute.xlu0 %1091
        %vm1093 = vcmp.lt.s32.totalorder %v215, 14
        %v1094 = vsel %vm1093, %v1090, %v1092
        %v1095 = vsel %vm1093, %v1092, %v1090
        %1096 = vrot.lane.b32.xlu0 %v386, 14
        %v1097 = vpop.permute.xlu0 %1096
        %1098 = vrot.lane.b32.xlu0 %v393, 14
        %v1099 = vpop.permute.xlu0 %1098
        %v1100 = vsel %vm1093, %v1097, %v1099
        %v1101 = vsel %vm1093, %v1099, %v1097
        %v1102 = vsel %vm1087, %v1095, 0.0
        %v1103 = vsel %vm1088, %v1094, 0.0
        %v1104 = vsel %vm1087, %v1101, 0.0
        %v1105 = vsel %vm1088, %v1100, 0.0
        %s1106 = sld [smem:[#allocation7 + $0x13]]
        %v1107 = vstv %s1106
        %v1108 = vmul.f32 %v1107, %v1102
        %v1109 = vmul.f32 %v1107, %v1103
        %v1110 = vadd.f32 %v1083, %v1108
        %v1111 = vadd.f32 %v1084, %v1109
        %s1112 = sld [smem:[#allocation7 + $0x44]]
        %v1113 = vstv %s1112
        %v1114 = vmul.f32 %v1113, %v1104
        %v1115 = vmul.f32 %v1113, %v1105
        %v1116 = vadd.f32 %v1110, %v1114
        %v1117 = vadd.f32 %v1111, %v1115
        %vm1118 = vmand %vm918, %vm636
        %vm1119 = vmand %vm919, %vm637
        %vm1120 = vmand %vm1118, %vm640
        %vm1121 = vmand %vm1119, %vm641
        %1122 = vrot.lane.b32.xlu0 %v378, 13
        %v1123 = vpop.permute.xlu0 %1122
        %1124 = vrot.lane.b32.xlu0 %v379, 13
        %v1125 = vpop.permute.xlu0 %1124
        %vm1126 = vcmp.lt.s32.totalorder %v215, 13
        %v1127 = vsel %vm1126, %v1123, %v1125
        %v1128 = vsel %vm1126, %v1125, %v1123
        %1129 = vrot.lane.b32.xlu0 %v386, 13
        %v1130 = vpop.permute.xlu0 %1129
        %1131 = vrot.lane.b32.xlu0 %v393, 13
        %v1132 = vpop.permute.xlu0 %1131
        %v1133 = vsel %vm1126, %v1130, %v1132
        %v1134 = vsel %vm1126, %v1132, %v1130
        %v1135 = vsel %vm1120, %v1128, 0.0
        %v1136 = vsel %vm1121, %v1127, 0.0
        %v1137 = vsel %vm1120, %v1134, 0.0
        %v1138 = vsel %vm1121, %v1133, 0.0
        %s1139 = sld [smem:[#allocation7 + $0x14]]
        %v1140 = vstv %s1139
        %v1141 = vmul.f32 %v1140, %v1135
        %v1142 = vmul.f32 %v1140, %v1136
        %v1143 = vadd.f32 %v1116, %v1141
        %v1144 = vadd.f32 %v1117, %v1142
        %s1145 = sld [smem:[#allocation7 + $0x45]]
        %v1146 = vstv %s1145
        %v1147 = vmul.f32 %v1146, %v1137
        %v1148 = vmul.f32 %v1146, %v1138
        %v1149 = vadd.f32 %v1143, %v1147
        %v1150 = vadd.f32 %v1144, %v1148
        %vm1151 = vcmp.ge.s32.totalorder %v240, 0
        %vm1152 = vcmp.ge.s32.totalorder %v241, 0
        %vm1153 = vcmp.lt.s32.totalorder %v240, 16
        %vm1154 = vcmp.lt.s32.totalorder %v241, 16
        %vm1155 = vmand %vm1151, %vm1153
        %vm1156 = vmand %vm1152, %vm1154
        %vm1157 = vmand %vm1155, %vm404
        %vm1158 = vmand %vm1156, %vm405
        %vm1159 = vmand %vm1157, %vm408
        %vm1160 = vmand %vm1158, %vm409
        %1161 = vrot.lane.b32.xlu0 %v378, 3
        %v1162 = vpop.permute.xlu0 %1161
        %1163 = vrot.lane.b32.xlu0 %v379, 3
        %v1164 = vpop.permute.xlu0 %1163
        %vm1165 = vcmp.lt.s32.totalorder %v215, 3
        %v1166 = vsel %vm1165, %v1162, %v1164
        %v1167 = vsel %vm1165, %v1164, %v1162
        %1168 = vrot.lane.b32.xlu0 %v386, 3
        %v1169 = vpop.permute.xlu0 %1168
        %1170 = vrot.lane.b32.xlu0 %v393, 3
        %v1171 = vpop.permute.xlu0 %1170
        %v1172 = vsel %vm1165, %v1169, %v1171
        %v1173 = vsel %vm1165, %v1171, %v1169
        %v1174 = vsel %vm1159, %v1167, 0.0
        %v1175 = vsel %vm1160, %v1166, 0.0
        %v1176 = vsel %vm1159, %v1173, 0.0
        %v1177 = vsel %vm1160, %v1172, 0.0
        %s1178 = sld [smem:[#allocation7 + $0x15]]
        %v1179 = vstv %s1178
        %v1180 = vmul.f32 %v1179, %v1174
        %v1181 = vmul.f32 %v1179, %v1175
        %v1182 = vadd.f32 %v1149, %v1180
        %v1183 = vadd.f32 %v1150, %v1181
        %s1184 = sld [smem:[#allocation7 + $0x46]]
        %v1185 = vstv %s1184
        %v1186 = vmul.f32 %v1185, %v1176
        %v1187 = vmul.f32 %v1185, %v1177
        %v1188 = vadd.f32 %v1182, %v1186
        %v1189 = vadd.f32 %v1183, %v1187
        %vm1190 = vmand %vm1155, %vm443
        %vm1191 = vmand %vm1156, %vm444
        %vm1192 = vmand %vm1190, %vm447
        %vm1193 = vmand %vm1191, %vm448
        %1194 = vrot.lane.b32.xlu0 %v378, 2
        %v1195 = vpop.permute.xlu0 %1194
        %1196 = vrot.lane.b32.xlu0 %v379, 2
        %v1197 = vpop.permute.xlu0 %1196
        %vm1198 = vcmp.lt.s32.totalorder %v215, 2
        %v1199 = vsel %vm1198, %v1195, %v1197
        %v1200 = vsel %vm1198, %v1197, %v1195
        %1201 = vrot.lane.b32.xlu0 %v386, 2
        %v1202 = vpop.permute.xlu0 %1201
        %1203 = vrot.lane.b32.xlu0 %v393, 2
        %v1204 = vpop.permute.xlu0 %1203
        %v1205 = vsel %vm1198, %v1202, %v1204
        %v1206 = vsel %vm1198, %v1204, %v1202
        %v1207 = vsel %vm1192, %v1200, 0.0
        %v1208 = vsel %vm1193, %v1199, 0.0
        %v1209 = vsel %vm1192, %v1206, 0.0
        %v1210 = vsel %vm1193, %v1205, 0.0
        %s1211 = sld [smem:[#allocation7 + $0x16]]
        %v1212 = vstv %s1211
        %v1213 = vmul.f32 %v1212, %v1207
        %v1214 = vmul.f32 %v1212, %v1208
        %v1215 = vadd.f32 %v1188, %v1213
        %v1216 = vadd.f32 %v1189, %v1214
        %s1217 = sld [smem:[#allocation7 + $0x47]]
        %v1218 = vstv %s1217
        %v1219 = vmul.f32 %v1218, %v1209
        %v1220 = vmul.f32 %v1218, %v1210
        %v1221 = vadd.f32 %v1215, %v1219
        %v1222 = vadd.f32 %v1216, %v1220
        %vm1223 = vmand %vm1155, %vm482
        %vm1224 = vmand %vm1156, %vm483
        %vm1225 = vmand %vm1223, %vm486
        %vm1226 = vmand %vm1224, %vm487
        %1227 = vrot.lane.b32.xlu0 %v378, 1
        %v1228 = vpop.permute.xlu0 %1227
        %1229 = vrot.lane.b32.xlu0 %v379, 1
        %v1230 = vpop.permute.xlu0 %1229
        %vm1231 = vcmp.lt.s32.totalorder %v215, 1
        %v1232 = vsel %vm1231, %v1228, %v1230
        %v1233 = vsel %vm1231, %v1230, %v1228
        %1234 = vrot.lane.b32.xlu0 %v386, 1
        %v1235 = vpop.permute.xlu0 %1234
        %1236 = vrot.lane.b32.xlu0 %v393, 1
        %v1237 = vpop.permute.xlu0 %1236
        %v1238 = vsel %vm1231, %v1235, %v1237
        %v1239 = vsel %vm1231, %v1237, %v1235
        %v1240 = vsel %vm1225, %v1233, 0.0
        %v1241 = vsel %vm1226, %v1232, 0.0
        %v1242 = vsel %vm1225, %v1239, 0.0
        %v1243 = vsel %vm1226, %v1238, 0.0
        %s1244 = sld [smem:[#allocation7 + $0x17]]
        %v1245 = vstv %s1244
        %v1246 = vmul.f32 %v1245, %v1240
        %v1247 = vmul.f32 %v1245, %v1241
        %v1248 = vadd.f32 %v1221, %v1246
        %v1249 = vadd.f32 %v1222, %v1247
        %s1250 = sld [smem:[#allocation7 + $0x48]]
        %v1251 = vstv %s1250
        %v1252 = vmul.f32 %v1251, %v1242
        %v1253 = vmul.f32 %v1251, %v1243
        %v1254 = vadd.f32 %v1248, %v1252
        %v1255 = vadd.f32 %v1249, %v1253
        %vm1256 = vmand %vm1155, %vm519
        %vm1257 = vmand %vm1156, %vm520
        %vm1258 = vmand %vm1256, %vm523
        %vm1259 = vmand %vm1257, %vm524
        %v1260 = vsel %vm1258, %v378, 0.0
        %v1261 = vsel %vm1259, %v379, 0.0
        %v1262 = vsel %vm1258, %v386, 0.0
        %v1263 = vsel %vm1259, %v393, 0.0
        %s1264 = sld [smem:[#allocation7 + $0x18]]
        %v1265 = vstv %s1264
        %v1266 = vmul.f32 %v1265, %v1260
        %v1267 = vmul.f32 %v1265, %v1261
        %v1268 = vadd.f32 %v1254, %v1266
        %v1269 = vadd.f32 %v1255, %v1267
        %s1270 = sld [smem:[#allocation7 + $0x49]]
        %v1271 = vstv %s1270
        %v1272 = vmul.f32 %v1271, %v1262
        %v1273 = vmul.f32 %v1271, %v1263
        %v1274 = vadd.f32 %v1268, %v1272
        %v1275 = vadd.f32 %v1269, %v1273
        %vm1276 = vmand %vm1155, %vm558
        %vm1277 = vmand %vm1156, %vm559
        %vm1278 = vmand %vm1276, %vm562
        %vm1279 = vmand %vm1277, %vm563
        %1280 = vrot.lane.b32.xlu0 %v378, 127
        %v1281 = vpop.permute.xlu0 %1280
        %1282 = vrot.lane.b32.xlu0 %v379, 127
        %v1283 = vpop.permute.xlu0 %1282
        %vm1284 = vcmp.lt.s32.totalorder %v215, 127
        %v1285 = vsel %vm1284, %v1281, %v1283
        %v1286 = vsel %vm1284, %v1283, %v1281
        %1287 = vrot.lane.b32.xlu0 %v386, 127
        %v1288 = vpop.permute.xlu0 %1287
        %1289 = vrot.lane.b32.xlu0 %v393, 127
        %v1290 = vpop.permute.xlu0 %1289
        %v1291 = vsel %vm1284, %v1288, %v1290
        %v1292 = vsel %vm1284, %v1290, %v1288
        %v1293 = vsel %vm1278, %v1285, 0.0
        %v1294 = vsel %vm1279, %v1286, 0.0
        %v1295 = vsel %vm1278, %v1291, 0.0
        %v1296 = vsel %vm1279, %v1292, 0.0
        %s1297 = sld [smem:[#allocation7 + $0x19]]
        %v1298 = vstv %s1297
        %v1299 = vmul.f32 %v1298, %v1293
        %v1300 = vmul.f32 %v1298, %v1294
        %v1301 = vadd.f32 %v1274, %v1299
        %v1302 = vadd.f32 %v1275, %v1300
        %s1303 = sld [smem:[#allocation7 + $0x4a]]
        %v1304 = vstv %s1303
        %v1305 = vmul.f32 %v1304, %v1295
        %v1306 = vmul.f32 %v1304, %v1296
        %v1307 = vadd.f32 %v1301, %v1305
        %v1308 = vadd.f32 %v1302, %v1306
        %vm1309 = vmand %vm1155, %vm597
        %vm1310 = vmand %vm1156, %vm598
        %vm1311 = vmand %vm1309, %vm601
        %vm1312 = vmand %vm1310, %vm602
        %1313 = vrot.lane.b32.xlu0 %v378, 126
        %v1314 = vpop.permute.xlu0 %1313
        %1315 = vrot.lane.b32.xlu0 %v379, 126
        %v1316 = vpop.permute.xlu0 %1315
        %vm1317 = vcmp.lt.s32.totalorder %v215, 126
        %v1318 = vsel %vm1317, %v1314, %v1316
        %v1319 = vsel %vm1317, %v1316, %v1314
        %1320 = vrot.lane.b32.xlu0 %v386, 126
        %v1321 = vpop.permute.xlu0 %1320
        %1322 = vrot.lane.b32.xlu0 %v393, 126
        %v1323 = vpop.permute.xlu0 %1322
        %v1324 = vsel %vm1317, %v1321, %v1323
        %v1325 = vsel %vm1317, %v1323, %v1321
        %v1326 = vsel %vm1311, %v1318, 0.0
        %v1327 = vsel %vm1312, %v1319, 0.0
        %v1328 = vsel %vm1311, %v1324, 0.0
        %v1329 = vsel %vm1312, %v1325, 0.0
        %s1330 = sld [smem:[#allocation7 + $0x1a]]
        %v1331 = vstv %s1330
        %v1332 = vmul.f32 %v1331, %v1326
        %v1333 = vmul.f32 %v1331, %v1327
        %v1334 = vadd.f32 %v1307, %v1332
        %v1335 = vadd.f32 %v1308, %v1333
        %s1336 = sld [smem:[#allocation7 + $0x4b]]
        %v1337 = vstv %s1336
        %v1338 = vmul.f32 %v1337, %v1328
        %v1339 = vmul.f32 %v1337, %v1329
        %v1340 = vadd.f32 %v1334, %v1338
        %v1341 = vadd.f32 %v1335, %v1339
        %vm1342 = vmand %vm1155, %vm636
        %vm1343 = vmand %vm1156, %vm637
        %vm1344 = vmand %vm1342, %vm640
        %vm1345 = vmand %vm1343, %vm641
        %1346 = vrot.lane.b32.xlu0 %v378, 125
        %v1347 = vpop.permute.xlu0 %1346
        %1348 = vrot.lane.b32.xlu0 %v379, 125
        %v1349 = vpop.permute.xlu0 %1348
        %vm1350 = vcmp.lt.s32.totalorder %v215, 125
        %v1351 = vsel %vm1350, %v1347, %v1349
        %v1352 = vsel %vm1350, %v1349, %v1347
        %1353 = vrot.lane.b32.xlu0 %v386, 125
        %v1354 = vpop.permute.xlu0 %1353
        %1355 = vrot.lane.b32.xlu0 %v393, 125
        %v1356 = vpop.permute.xlu0 %1355
        %v1357 = vsel %vm1350, %v1354, %v1356
        %v1358 = vsel %vm1350, %v1356, %v1354
        %v1359 = vsel %vm1344, %v1351, 0.0
        %v1360 = vsel %vm1345, %v1352, 0.0
        %v1361 = vsel %vm1344, %v1357, 0.0
        %v1362 = vsel %vm1345, %v1358, 0.0
        %s1363 = sld [smem:[#allocation7 + $0x1b]]
        %v1364 = vstv %s1363
        %v1365 = vmul.f32 %v1364, %v1359
        %v1366 = vmul.f32 %v1364, %v1360
        %v1367 = vadd.f32 %v1340, %v1365
        %v1368 = vadd.f32 %v1341, %v1366
        %s1369 = sld [smem:[#allocation7 + $0x4c]]
        %v1370 = vstv %s1369
        %v1371 = vmul.f32 %v1370, %v1361
        %v1372 = vmul.f32 %v1370, %v1362
        %v1373 = vadd.f32 %v1367, %v1371
        %v1374 = vadd.f32 %v1368, %v1372
        %v1375 = vadd.s32 %v240, 1
        %v1376 = vadd.s32 %v241, 1
        %vm1377 = vcmp.ge.s32.totalorder %v1375, 0
        %vm1378 = vcmp.ge.s32.totalorder %v1376, 0
        %vm1379 = vcmp.lt.s32.totalorder %v1375, 16
        %vm1380 = vcmp.lt.s32.totalorder %v1376, 16
        %vm1381 = vmand %vm1377, %vm1379
        %vm1382 = vmand %vm1378, %vm1380
        %vm1383 = vmand %vm1381, %vm404
        %vm1384 = vmand %vm1382, %vm405
        %vm1385 = vmand %vm1383, %vm408
        %vm1386 = vmand %vm1384, %vm409
        %1387 = vrot.lane.b32.xlu0 %v378, 115
        %v1388 = vpop.permute.xlu0 %1387
        %1389 = vrot.lane.b32.xlu0 %v379, 115
        %v1390 = vpop.permute.xlu0 %1389
        %vm1391 = vcmp.lt.s32.totalorder %v215, 115
        %v1392 = vsel %vm1391, %v1388, %v1390
        %v1393 = vsel %vm1391, %v1390, %v1388
        %1394 = vrot.lane.b32.xlu0 %v386, 115
        %v1395 = vpop.permute.xlu0 %1394
        %1396 = vrot.lane.b32.xlu0 %v393, 115
        %v1397 = vpop.permute.xlu0 %1396
        %v1398 = vsel %vm1391, %v1395, %v1397
        %v1399 = vsel %vm1391, %v1397, %v1395
        %v1400 = vsel %vm1385, %v1392, 0.0
        %v1401 = vsel %vm1386, %v1393, 0.0
        %v1402 = vsel %vm1385, %v1398, 0.0
        %v1403 = vsel %vm1386, %v1399, 0.0
        %s1404 = sld [smem:[#allocation7 + $0x1c]]
        %v1405 = vstv %s1404
        %v1406 = vmul.f32 %v1405, %v1400
        %v1407 = vmul.f32 %v1405, %v1401
        %v1408 = vadd.f32 %v1373, %v1406
        %v1409 = vadd.f32 %v1374, %v1407
        %s1410 = sld [smem:[#allocation7 + $0x4d]]
        %v1411 = vstv %s1410
        %v1412 = vmul.f32 %v1411, %v1402
        %v1413 = vmul.f32 %v1411, %v1403
        %v1414 = vadd.f32 %v1408, %v1412
        %v1415 = vadd.f32 %v1409, %v1413
        %vm1416 = vmand %vm1381, %vm443
        %vm1417 = vmand %vm1382, %vm444
        %vm1418 = vmand %vm1416, %vm447
        %vm1419 = vmand %vm1417, %vm448
        %1420 = vrot.lane.b32.xlu0 %v378, 114
        %v1421 = vpop.permute.xlu0 %1420
        %1422 = vrot.lane.b32.xlu0 %v379, 114
        %v1423 = vpop.permute.xlu0 %1422
        %vm1424 = vcmp.lt.s32.totalorder %v215, 114
        %v1425 = vsel %vm1424, %v1421, %v1423
        %v1426 = vsel %vm1424, %v1423, %v1421
        %1427 = vrot.lane.b32.xlu0 %v386, 114
        %v1428 = vpop.permute.xlu0 %1427
        %1429 = vrot.lane.b32.xlu0 %v393, 114
        %v1430 = vpop.permute.xlu0 %1429
        %v1431 = vsel %vm1424, %v1428, %v1430
        %v1432 = vsel %vm1424, %v1430, %v1428
        %v1433 = vsel %vm1418, %v1425, 0.0
        %v1434 = vsel %vm1419, %v1426, 0.0
        %v1435 = vsel %vm1418, %v1431, 0.0
        %v1436 = vsel %vm1419, %v1432, 0.0
        %s1437 = sld [smem:[#allocation7 + $0x1d]]
        %v1438 = vstv %s1437
        %v1439 = vmul.f32 %v1438, %v1433
        %v1440 = vmul.f32 %v1438, %v1434
        %v1441 = vadd.f32 %v1414, %v1439
        %v1442 = vadd.f32 %v1415, %v1440
        %s1443 = sld [smem:[#allocation7 + $0x4e]]
        %v1444 = vstv %s1443
        %v1445 = vmul.f32 %v1444, %v1435
        %v1446 = vmul.f32 %v1444, %v1436
        %v1447 = vadd.f32 %v1441, %v1445
        %v1448 = vadd.f32 %v1442, %v1446
        %vm1449 = vmand %vm1381, %vm482
        %vm1450 = vmand %vm1382, %vm483
        %vm1451 = vmand %vm1449, %vm486
        %vm1452 = vmand %vm1450, %vm487
        %1453 = vrot.lane.b32.xlu0 %v378, 113
        %v1454 = vpop.permute.xlu0 %1453
        %1455 = vrot.lane.b32.xlu0 %v379, 113
        %v1456 = vpop.permute.xlu0 %1455
        %vm1457 = vcmp.lt.s32.totalorder %v215, 113
        %v1458 = vsel %vm1457, %v1454, %v1456
        %v1459 = vsel %vm1457, %v1456, %v1454
        %1460 = vrot.lane.b32.xlu0 %v386, 113
        %v1461 = vpop.permute.xlu0 %1460
        %1462 = vrot.lane.b32.xlu0 %v393, 113
        %v1463 = vpop.permute.xlu0 %1462
        %v1464 = vsel %vm1457, %v1461, %v1463
        %v1465 = vsel %vm1457, %v1463, %v1461
        %v1466 = vsel %vm1451, %v1458, 0.0
        %v1467 = vsel %vm1452, %v1459, 0.0
        %v1468 = vsel %vm1451, %v1464, 0.0
        %v1469 = vsel %vm1452, %v1465, 0.0
        %s1470 = sld [smem:[#allocation7 + $0x1e]]
        %v1471 = vstv %s1470
        %v1472 = vmul.f32 %v1471, %v1466
        %v1473 = vmul.f32 %v1471, %v1467
        %v1474 = vadd.f32 %v1447, %v1472
        %v1475 = vadd.f32 %v1448, %v1473
        %s1476 = sld [smem:[#allocation7 + $0x4f]]
        %v1477 = vstv %s1476
        %v1478 = vmul.f32 %v1477, %v1468
        %v1479 = vmul.f32 %v1477, %v1469
        %v1480 = vadd.f32 %v1474, %v1478
        %v1481 = vadd.f32 %v1475, %v1479
        %vm1482 = vmand %vm1381, %vm519
        %vm1483 = vmand %vm1382, %vm520
        %vm1484 = vmand %vm1482, %vm523
        %vm1485 = vmand %vm1483, %vm524
        %1486 = vrot.lane.b32.xlu0 %v378, 112
        %v1487 = vpop.permute.xlu0 %1486
        %1488 = vrot.lane.b32.xlu0 %v379, 112
        %v1489 = vpop.permute.xlu0 %1488
        %vm1490 = vcmp.lt.s32.totalorder %v215, 112
        %v1491 = vsel %vm1490, %v1487, %v1489
        %v1492 = vsel %vm1490, %v1489, %v1487
        %1493 = vrot.lane.b32.xlu0 %v386, 112
        %v1494 = vpop.permute.xlu0 %1493
        %1495 = vrot.lane.b32.xlu0 %v393, 112
        %v1496 = vpop.permute.xlu0 %1495
        %v1497 = vsel %vm1490, %v1494, %v1496
        %v1498 = vsel %vm1490, %v1496, %v1494
        %v1499 = vsel %vm1484, %v1491, 0.0
        %v1500 = vsel %vm1485, %v1492, 0.0
        %v1501 = vsel %vm1484, %v1497, 0.0
        %v1502 = vsel %vm1485, %v1498, 0.0
        %s1503 = sld [smem:[#allocation7 + $0x1f]]
        %v1504 = vstv %s1503
        %v1505 = vmul.f32 %v1504, %v1499
        %v1506 = vmul.f32 %v1504, %v1500
        %v1507 = vadd.f32 %v1480, %v1505
        %v1508 = vadd.f32 %v1481, %v1506
        %s1509 = sld [smem:[#allocation7 + $0x50]]
        %v1510 = vstv %s1509
        %v1511 = vmul.f32 %v1510, %v1501
        %v1512 = vmul.f32 %v1510, %v1502
        %v1513 = vadd.f32 %v1507, %v1511
        %v1514 = vadd.f32 %v1508, %v1512
        %vm1515 = vmand %vm1381, %vm558
        %vm1516 = vmand %vm1382, %vm559
        %vm1517 = vmand %vm1515, %vm562
        %vm1518 = vmand %vm1516, %vm563
        %1519 = vrot.lane.b32.xlu0 %v378, 111
        %v1520 = vpop.permute.xlu0 %1519
        %1521 = vrot.lane.b32.xlu0 %v379, 111
        %v1522 = vpop.permute.xlu0 %1521
        %vm1523 = vcmp.lt.s32.totalorder %v215, 111
        %v1524 = vsel %vm1523, %v1520, %v1522
        %v1525 = vsel %vm1523, %v1522, %v1520
        %1526 = vrot.lane.b32.xlu0 %v386, 111
        %v1527 = vpop.permute.xlu0 %1526
        %1528 = vrot.lane.b32.xlu0 %v393, 111
        %v1529 = vpop.permute.xlu0 %1528
        %v1530 = vsel %vm1523, %v1527, %v1529
        %v1531 = vsel %vm1523, %v1529, %v1527
        %v1532 = vsel %vm1517, %v1524, 0.0
        %v1533 = vsel %vm1518, %v1525, 0.0
        %v1534 = vsel %vm1517, %v1530, 0.0
        %v1535 = vsel %vm1518, %v1531, 0.0
        %s1536 = sld [smem:[#allocation7 + $0x20]]
        %v1537 = vstv %s1536
        %v1538 = vmul.f32 %v1537, %v1532
        %v1539 = vmul.f32 %v1537, %v1533
        %v1540 = vadd.f32 %v1513, %v1538
        %v1541 = vadd.f32 %v1514, %v1539
        %s1542 = sld [smem:[#allocation7 + $0x51]]
        %v1543 = vstv %s1542
        %v1544 = vmul.f32 %v1543, %v1534
        %v1545 = vmul.f32 %v1543, %v1535
        %v1546 = vadd.f32 %v1540, %v1544
        %v1547 = vadd.f32 %v1541, %v1545
        %vm1548 = vmand %vm1381, %vm597
        %vm1549 = vmand %vm1382, %vm598
        %vm1550 = vmand %vm1548, %vm601
        %vm1551 = vmand %vm1549, %vm602
        %1552 = vrot.lane.b32.xlu0 %v378, 110
        %v1553 = vpop.permute.xlu0 %1552
        %1554 = vrot.lane.b32.xlu0 %v379, 110
        %v1555 = vpop.permute.xlu0 %1554
        %vm1556 = vcmp.lt.s32.totalorder %v215, 110
        %v1557 = vsel %vm1556, %v1553, %v1555
        %v1558 = vsel %vm1556, %v1555, %v1553
        %1559 = vrot.lane.b32.xlu0 %v386, 110
        %v1560 = vpop.permute.xlu0 %1559
        %1561 = vrot.lane.b32.xlu0 %v393, 110
        %v1562 = vpop.permute.xlu0 %1561
        %v1563 = vsel %vm1556, %v1560, %v1562
        %v1564 = vsel %vm1556, %v1562, %v1560
        %v1565 = vsel %vm1550, %v1557, 0.0
        %v1566 = vsel %vm1551, %v1558, 0.0
        %v1567 = vsel %vm1550, %v1563, 0.0
        %v1568 = vsel %vm1551, %v1564, 0.0
        %s1569 = sld [smem:[#allocation7 + $0x21]]
        %v1570 = vstv %s1569
        %v1571 = vmul.f32 %v1570, %v1565
        %v1572 = vmul.f32 %v1570, %v1566
        %v1573 = vadd.f32 %v1546, %v1571
        %v1574 = vadd.f32 %v1547, %v1572
        %s1575 = sld [smem:[#allocation7 + $0x52]]
        %v1576 = vstv %s1575
        %v1577 = vmul.f32 %v1576, %v1567
        %v1578 = vmul.f32 %v1576, %v1568
        %v1579 = vadd.f32 %v1573, %v1577
        %v1580 = vadd.f32 %v1574, %v1578
        %vm1581 = vmand %vm1381, %vm636
        %vm1582 = vmand %vm1382, %vm637
        %vm1583 = vmand %vm1581, %vm640
        %vm1584 = vmand %vm1582, %vm641
        %1585 = vrot.lane.b32.xlu0 %v378, 109
        %v1586 = vpop.permute.xlu0 %1585
        %1587 = vrot.lane.b32.xlu0 %v379, 109
        %v1588 = vpop.permute.xlu0 %1587
        %vm1589 = vcmp.lt.s32.totalorder %v215, 109
        %v1590 = vsel %vm1589, %v1586, %v1588
        %v1591 = vsel %vm1589, %v1588, %v1586
        %1592 = vrot.lane.b32.xlu0 %v386, 109
        %v1593 = vpop.permute.xlu0 %1592
        %1594 = vrot.lane.b32.xlu0 %v393, 109
        %v1595 = vpop.permute.xlu0 %1594
        %v1596 = vsel %vm1589, %v1593, %v1595
        %v1597 = vsel %vm1589, %v1595, %v1593
        %v1598 = vsel %vm1583, %v1590, 0.0
        %v1599 = vsel %vm1584, %v1591, 0.0
        %v1600 = vsel %vm1583, %v1596, 0.0
        %v1601 = vsel %vm1584, %v1597, 0.0
        %s1602 = sld [smem:[#allocation7 + $0x22]]
        %v1603 = vstv %s1602
        %v1604 = vmul.f32 %v1603, %v1598
        %v1605 = vmul.f32 %v1603, %v1599
        %v1606 = vadd.f32 %v1579, %v1604
        %v1607 = vadd.f32 %v1580, %v1605
        %s1608 = sld [smem:[#allocation7 + $0x53]]
        %v1609 = vstv %s1608
        %v1610 = vmul.f32 %v1609, %v1600
        %v1611 = vmul.f32 %v1609, %v1601
        %v1612 = vadd.f32 %v1606, %v1610
        %v1613 = vadd.f32 %v1607, %v1611
        %v1614 = vadd.s32 %v240, 2
        %v1615 = vadd.s32 %v241, 2
        %vm1616 = vcmp.ge.s32.totalorder %v1614, 0
        %vm1617 = vcmp.ge.s32.totalorder %v1615, 0
        %vm1618 = vcmp.lt.s32.totalorder %v1614, 16
        %vm1619 = vcmp.lt.s32.totalorder %v1615, 16
        %vm1620 = vmand %vm1616, %vm1618
        %vm1621 = vmand %vm1617, %vm1619
        %vm1622 = vmand %vm1620, %vm404
        %vm1623 = vmand %vm1621, %vm405
        %vm1624 = vmand %vm1622, %vm408
        %vm1625 = vmand %vm1623, %vm409
        %1626 = vrot.lane.b32.xlu0 %v378, 99
        %v1627 = vpop.permute.xlu0 %1626
        %1628 = vrot.lane.b32.xlu0 %v379, 99
        %v1629 = vpop.permute.xlu0 %1628
        %vm1630 = vcmp.lt.s32.totalorder %v215, 99
        %v1631 = vsel %vm1630, %v1627, %v1629
        %v1632 = vsel %vm1630, %v1629, %v1627
        %1633 = vrot.lane.b32.xlu0 %v386, 99
        %v1634 = vpop.permute.xlu0 %1633
        %1635 = vrot.lane.b32.xlu0 %v393, 99
        %v1636 = vpop.permute.xlu0 %1635
        %v1637 = vsel %vm1630, %v1634, %v1636
        %v1638 = vsel %vm1630, %v1636, %v1634
        %v1639 = vsel %vm1624, %v1631, 0.0
        %v1640 = vsel %vm1625, %v1632, 0.0
        %v1641 = vsel %vm1624, %v1637, 0.0
        %v1642 = vsel %vm1625, %v1638, 0.0
        %s1643 = sld [smem:[#allocation7 + $0x23]]
        %v1644 = vstv %s1643
        %v1645 = vmul.f32 %v1644, %v1639
        %v1646 = vmul.f32 %v1644, %v1640
        %v1647 = vadd.f32 %v1612, %v1645
        %v1648 = vadd.f32 %v1613, %v1646
        %s1649 = sld [smem:[#allocation7 + $0x54]]
        %v1650 = vstv %s1649
        %v1651 = vmul.f32 %v1650, %v1641
        %v1652 = vmul.f32 %v1650, %v1642
        %v1653 = vadd.f32 %v1647, %v1651
        %v1654 = vadd.f32 %v1648, %v1652
        %vm1655 = vmand %vm1620, %vm443
        %vm1656 = vmand %vm1621, %vm444
        %vm1657 = vmand %vm1655, %vm447
        %vm1658 = vmand %vm1656, %vm448
        %1659 = vrot.lane.b32.xlu0 %v378, 98
        %v1660 = vpop.permute.xlu0 %1659
        %1661 = vrot.lane.b32.xlu0 %v379, 98
        %v1662 = vpop.permute.xlu0 %1661
        %vm1663 = vcmp.lt.s32.totalorder %v215, 98
        %v1664 = vsel %vm1663, %v1660, %v1662
        %v1665 = vsel %vm1663, %v1662, %v1660
        %1666 = vrot.lane.b32.xlu0 %v386, 98
        %v1667 = vpop.permute.xlu0 %1666
        %1668 = vrot.lane.b32.xlu0 %v393, 98
        %v1669 = vpop.permute.xlu0 %1668
        %v1670 = vsel %vm1663, %v1667, %v1669
        %v1671 = vsel %vm1663, %v1669, %v1667
        %v1672 = vsel %vm1657, %v1664, 0.0
        %v1673 = vsel %vm1658, %v1665, 0.0
        %v1674 = vsel %vm1657, %v1670, 0.0
        %v1675 = vsel %vm1658, %v1671, 0.0
        %s1676 = sld [smem:[#allocation7 + $0x24]]
        %v1677 = vstv %s1676
        %v1678 = vmul.f32 %v1677, %v1672
        %v1679 = vmul.f32 %v1677, %v1673
        %v1680 = vadd.f32 %v1653, %v1678
        %v1681 = vadd.f32 %v1654, %v1679
        %s1682 = sld [smem:[#allocation7 + $0x55]]
        %v1683 = vstv %s1682
        %v1684 = vmul.f32 %v1683, %v1674
        %v1685 = vmul.f32 %v1683, %v1675
        %v1686 = vadd.f32 %v1680, %v1684
        %v1687 = vadd.f32 %v1681, %v1685
        %vm1688 = vmand %vm1620, %vm482
        %vm1689 = vmand %vm1621, %vm483
        %vm1690 = vmand %vm1688, %vm486
        %vm1691 = vmand %vm1689, %vm487
        %1692 = vrot.lane.b32.xlu0 %v378, 97
        %v1693 = vpop.permute.xlu0 %1692
        %1694 = vrot.lane.b32.xlu0 %v379, 97
        %v1695 = vpop.permute.xlu0 %1694
        %vm1696 = vcmp.lt.s32.totalorder %v215, 97
        %v1697 = vsel %vm1696, %v1693, %v1695
        %v1698 = vsel %vm1696, %v1695, %v1693
        %1699 = vrot.lane.b32.xlu0 %v386, 97
        %v1700 = vpop.permute.xlu0 %1699
        %1701 = vrot.lane.b32.xlu0 %v393, 97
        %v1702 = vpop.permute.xlu0 %1701
        %v1703 = vsel %vm1696, %v1700, %v1702
        %v1704 = vsel %vm1696, %v1702, %v1700
        %v1705 = vsel %vm1690, %v1697, 0.0
        %v1706 = vsel %vm1691, %v1698, 0.0
        %v1707 = vsel %vm1690, %v1703, 0.0
        %v1708 = vsel %vm1691, %v1704, 0.0
        %s1709 = sld [smem:[#allocation7 + $0x25]]
        %v1710 = vstv %s1709
        %v1711 = vmul.f32 %v1710, %v1705
        %v1712 = vmul.f32 %v1710, %v1706
        %v1713 = vadd.f32 %v1686, %v1711
        %v1714 = vadd.f32 %v1687, %v1712
        %s1715 = sld [smem:[#allocation7 + $0x56]]
        %v1716 = vstv %s1715
        %v1717 = vmul.f32 %v1716, %v1707
        %v1718 = vmul.f32 %v1716, %v1708
        %v1719 = vadd.f32 %v1713, %v1717
        %v1720 = vadd.f32 %v1714, %v1718
        %vm1721 = vmand %vm1620, %vm519
        %vm1722 = vmand %vm1621, %vm520
        %vm1723 = vmand %vm1721, %vm523
        %vm1724 = vmand %vm1722, %vm524
        %1725 = vrot.lane.b32.xlu0 %v378, 96
        %v1726 = vpop.permute.xlu0 %1725
        %1727 = vrot.lane.b32.xlu0 %v379, 96
        %v1728 = vpop.permute.xlu0 %1727
        %vm1729 = vcmp.lt.s32.totalorder %v215, 96
        %v1730 = vsel %vm1729, %v1726, %v1728
        %v1731 = vsel %vm1729, %v1728, %v1726
        %1732 = vrot.lane.b32.xlu0 %v386, 96
        %v1733 = vpop.permute.xlu0 %1732
        %1734 = vrot.lane.b32.xlu0 %v393, 96
        %v1735 = vpop.permute.xlu0 %1734
        %v1736 = vsel %vm1729, %v1733, %v1735
        %v1737 = vsel %vm1729, %v1735, %v1733
        %v1738 = vsel %vm1723, %v1730, 0.0
        %v1739 = vsel %vm1724, %v1731, 0.0
        %v1740 = vsel %vm1723, %v1736, 0.0
        %v1741 = vsel %vm1724, %v1737, 0.0
        %s1742 = sld [smem:[#allocation7 + $0x26]]
        %v1743 = vstv %s1742
        %v1744 = vmul.f32 %v1743, %v1738
        %v1745 = vmul.f32 %v1743, %v1739
        %v1746 = vadd.f32 %v1719, %v1744
        %v1747 = vadd.f32 %v1720, %v1745
        %s1748 = sld [smem:[#allocation7 + $0x57]]
        %v1749 = vstv %s1748
        %v1750 = vmul.f32 %v1749, %v1740
        %v1751 = vmul.f32 %v1749, %v1741
        %v1752 = vadd.f32 %v1746, %v1750
        %v1753 = vadd.f32 %v1747, %v1751
        %vm1754 = vmand %vm1620, %vm558
        %vm1755 = vmand %vm1621, %vm559
        %vm1756 = vmand %vm1754, %vm562
        %vm1757 = vmand %vm1755, %vm563
        %1758 = vrot.lane.b32.xlu0 %v378, 95
        %v1759 = vpop.permute.xlu0 %1758
        %1760 = vrot.lane.b32.xlu0 %v379, 95
        %v1761 = vpop.permute.xlu0 %1760
        %vm1762 = vcmp.lt.s32.totalorder %v215, 95
        %v1763 = vsel %vm1762, %v1759, %v1761
        %v1764 = vsel %vm1762, %v1761, %v1759
        %1765 = vrot.lane.b32.xlu0 %v386, 95
        %v1766 = vpop.permute.xlu0 %1765
        %1767 = vrot.lane.b32.xlu0 %v393, 95
        %v1768 = vpop.permute.xlu0 %1767
        %v1769 = vsel %vm1762, %v1766, %v1768
        %v1770 = vsel %vm1762, %v1768, %v1766
        %v1771 = vsel %vm1756, %v1763, 0.0
        %v1772 = vsel %vm1757, %v1764, 0.0
        %v1773 = vsel %vm1756, %v1769, 0.0
        %v1774 = vsel %vm1757, %v1770, 0.0
        %s1775 = sld [smem:[#allocation7 + $0x27]]
        %v1776 = vstv %s1775
        %v1777 = vmul.f32 %v1776, %v1771
        %v1778 = vmul.f32 %v1776, %v1772
        %v1779 = vadd.f32 %v1752, %v1777
        %v1780 = vadd.f32 %v1753, %v1778
        %s1781 = sld [smem:[#allocation7 + $0x58]]
        %v1782 = vstv %s1781
        %v1783 = vmul.f32 %v1782, %v1773
        %v1784 = vmul.f32 %v1782, %v1774
        %v1785 = vadd.f32 %v1779, %v1783
        %v1786 = vadd.f32 %v1780, %v1784
        %vm1787 = vmand %vm1620, %vm597
        %vm1788 = vmand %vm1621, %vm598
        %vm1789 = vmand %vm1787, %vm601
        %vm1790 = vmand %vm1788, %vm602
        %1791 = vrot.lane.b32.xlu0 %v378, 94
        %v1792 = vpop.permute.xlu0 %1791
        %1793 = vrot.lane.b32.xlu0 %v379, 94
        %v1794 = vpop.permute.xlu0 %1793
        %vm1795 = vcmp.lt.s32.totalorder %v215, 94
        %v1796 = vsel %vm1795, %v1792, %v1794
        %v1797 = vsel %vm1795, %v1794, %v1792
        %1798 = vrot.lane.b32.xlu0 %v386, 94
        %v1799 = vpop.permute.xlu0 %1798
        %1800 = vrot.lane.b32.xlu0 %v393, 94
        %v1801 = vpop.permute.xlu0 %1800
        %v1802 = vsel %vm1795, %v1799, %v1801
        %v1803 = vsel %vm1795, %v1801, %v1799
        %v1804 = vsel %vm1789, %v1796, 0.0
        %v1805 = vsel %vm1790, %v1797, 0.0
        %v1806 = vsel %vm1789, %v1802, 0.0
        %v1807 = vsel %vm1790, %v1803, 0.0
        %s1808 = sld [smem:[#allocation7 + $0x28]]
        %v1809 = vstv %s1808
        %v1810 = vmul.f32 %v1809, %v1804
        %v1811 = vmul.f32 %v1809, %v1805
        %v1812 = vadd.f32 %v1785, %v1810
        %v1813 = vadd.f32 %v1786, %v1811
        %s1814 = sld [smem:[#allocation7 + $0x59]]
        %v1815 = vstv %s1814
        %v1816 = vmul.f32 %v1815, %v1806
        %v1817 = vmul.f32 %v1815, %v1807
        %v1818 = vadd.f32 %v1812, %v1816
        %v1819 = vadd.f32 %v1813, %v1817
        %vm1820 = vmand %vm1620, %vm636
        %vm1821 = vmand %vm1621, %vm637
        %vm1822 = vmand %vm1820, %vm640
        %vm1823 = vmand %vm1821, %vm641
        %1824 = vrot.lane.b32.xlu0 %v378, 93
        %v1825 = vpop.permute.xlu0 %1824
        %1826 = vrot.lane.b32.xlu0 %v379, 93
        %v1827 = vpop.permute.xlu0 %1826
        %vm1828 = vcmp.lt.s32.totalorder %v215, 93
        %v1829 = vsel %vm1828, %v1825, %v1827
        %v1830 = vsel %vm1828, %v1827, %v1825
        %1831 = vrot.lane.b32.xlu0 %v386, 93
        %v1832 = vpop.permute.xlu0 %1831
        %1833 = vrot.lane.b32.xlu0 %v393, 93
        %v1834 = vpop.permute.xlu0 %1833
        %v1835 = vsel %vm1828, %v1832, %v1834
        %v1836 = vsel %vm1828, %v1834, %v1832
        %v1837 = vsel %vm1822, %v1829, 0.0
        %v1838 = vsel %vm1823, %v1830, 0.0
        %v1839 = vsel %vm1822, %v1835, 0.0
        %v1840 = vsel %vm1823, %v1836, 0.0
        %s1841 = sld [smem:[#allocation7 + $0x29]]
        %v1842 = vstv %s1841
        %v1843 = vmul.f32 %v1842, %v1837
        %v1844 = vmul.f32 %v1842, %v1838
        %v1845 = vadd.f32 %v1818, %v1843
        %v1846 = vadd.f32 %v1819, %v1844
        %s1847 = sld [smem:[#allocation7 + $0x5a]]
        %v1848 = vstv %s1847
        %v1849 = vmul.f32 %v1848, %v1839
        %v1850 = vmul.f32 %v1848, %v1840
        %v1851 = vadd.f32 %v1845, %v1849
        %v1852 = vadd.f32 %v1846, %v1850
        %v1853 = vadd.s32 %v240, 3
        %v1854 = vadd.s32 %v241, 3
        %vm1855 = vcmp.ge.s32.totalorder %v1853, 0
        %vm1856 = vcmp.ge.s32.totalorder %v1854, 0
        %vm1857 = vcmp.lt.s32.totalorder %v1853, 16
        %vm1858 = vcmp.lt.s32.totalorder %v1854, 16
        %vm1859 = vmand %vm1855, %vm1857
        %vm1860 = vmand %vm1856, %vm1858
        %vm1861 = vmand %vm1859, %vm404
        %vm1862 = vmand %vm1860, %vm405
        %vm1863 = vmand %vm1861, %vm408
        %vm1864 = vmand %vm1862, %vm409
        %1865 = vrot.lane.b32.xlu0 %v378, 83
        %v1866 = vpop.permute.xlu0 %1865
        %1867 = vrot.lane.b32.xlu0 %v379, 83
        %v1868 = vpop.permute.xlu0 %1867
        %vm1869 = vcmp.lt.s32.totalorder %v215, 83
        %v1870 = vsel %vm1869, %v1866, %v1868
        %v1871 = vsel %vm1869, %v1868, %v1866
        %1872 = vrot.lane.b32.xlu0 %v386, 83
        %v1873 = vpop.permute.xlu0 %1872
        %1874 = vrot.lane.b32.xlu0 %v393, 83
        %v1875 = vpop.permute.xlu0 %1874
        %v1876 = vsel %vm1869, %v1873, %v1875
        %v1877 = vsel %vm1869, %v1875, %v1873
        %v1878 = vsel %vm1863, %v1870, 0.0
        %v1879 = vsel %vm1864, %v1871, 0.0
        %v1880 = vsel %vm1863, %v1876, 0.0
        %v1881 = vsel %vm1864, %v1877, 0.0
        %s1882 = sld [smem:[#allocation7 + $0x2a]]
        %v1883 = vstv %s1882
        %v1884 = vmul.f32 %v1883, %v1878
        %v1885 = vmul.f32 %v1883, %v1879
        %v1886 = vadd.f32 %v1851, %v1884
        %v1887 = vadd.f32 %v1852, %v1885
        %s1888 = sld [smem:[#allocation7 + $0x5b]]
        %v1889 = vstv %s1888
        %v1890 = vmul.f32 %v1889, %v1880
        %v1891 = vmul.f32 %v1889, %v1881
        %v1892 = vadd.f32 %v1886, %v1890
        %v1893 = vadd.f32 %v1887, %v1891
        %vm1894 = vmand %vm1859, %vm443
        %vm1895 = vmand %vm1860, %vm444
        %vm1896 = vmand %vm1894, %vm447
        %vm1897 = vmand %vm1895, %vm448
        %1898 = vrot.lane.b32.xlu0 %v378, 82
        %v1899 = vpop.permute.xlu0 %1898
        %1900 = vrot.lane.b32.xlu0 %v379, 82
        %v1901 = vpop.permute.xlu0 %1900
        %vm1902 = vcmp.lt.s32.totalorder %v215, 82
        %v1903 = vsel %vm1902, %v1899, %v1901
        %v1904 = vsel %vm1902, %v1901, %v1899
        %1905 = vrot.lane.b32.xlu0 %v386, 82
        %v1906 = vpop.permute.xlu0 %1905
        %1907 = vrot.lane.b32.xlu0 %v393, 82
        %v1908 = vpop.permute.xlu0 %1907
        %v1909 = vsel %vm1902, %v1906, %v1908
        %v1910 = vsel %vm1902, %v1908, %v1906
        %v1911 = vsel %vm1896, %v1903, 0.0
        %v1912 = vsel %vm1897, %v1904, 0.0
        %v1913 = vsel %vm1896, %v1909, 0.0
        %v1914 = vsel %vm1897, %v1910, 0.0
        %s1915 = sld [smem:[#allocation7 + $0x2b]]
        %v1916 = vstv %s1915
        %v1917 = vmul.f32 %v1916, %v1911
        %v1918 = vmul.f32 %v1916, %v1912
        %v1919 = vadd.f32 %v1892, %v1917
        %v1920 = vadd.f32 %v1893, %v1918
        %s1921 = sld [smem:[#allocation7 + $0x5c]]
        %v1922 = vstv %s1921
        %v1923 = vmul.f32 %v1922, %v1913
        %v1924 = vmul.f32 %v1922, %v1914
        %v1925 = vadd.f32 %v1919, %v1923
        %v1926 = vadd.f32 %v1920, %v1924
        %vm1927 = vmand %vm1859, %vm482
        %vm1928 = vmand %vm1860, %vm483
        %vm1929 = vmand %vm1927, %vm486
        %vm1930 = vmand %vm1928, %vm487
        %1931 = vrot.lane.b32.xlu0 %v378, 81
        %v1932 = vpop.permute.xlu0 %1931
        %1933 = vrot.lane.b32.xlu0 %v379, 81
        %v1934 = vpop.permute.xlu0 %1933
        %vm1935 = vcmp.lt.s32.totalorder %v215, 81
        %v1936 = vsel %vm1935, %v1932, %v1934
        %v1937 = vsel %vm1935, %v1934, %v1932
        %1938 = vrot.lane.b32.xlu0 %v386, 81
        %v1939 = vpop.permute.xlu0 %1938
        %1940 = vrot.lane.b32.xlu0 %v393, 81
        %v1941 = vpop.permute.xlu0 %1940
        %v1942 = vsel %vm1935, %v1939, %v1941
        %v1943 = vsel %vm1935, %v1941, %v1939
        %v1944 = vsel %vm1929, %v1936, 0.0
        %v1945 = vsel %vm1930, %v1937, 0.0
        %v1946 = vsel %vm1929, %v1942, 0.0
        %v1947 = vsel %vm1930, %v1943, 0.0
        %s1948 = sld [smem:[#allocation7 + $0x2c]]
        %v1949 = vstv %s1948
        %v1950 = vmul.f32 %v1949, %v1944
        %v1951 = vmul.f32 %v1949, %v1945
        %v1952 = vadd.f32 %v1925, %v1950
        %v1953 = vadd.f32 %v1926, %v1951
        %s1954 = sld [smem:[#allocation7 + $0x5d]]
        %v1955 = vstv %s1954
        %v1956 = vmul.f32 %v1955, %v1946
        %v1957 = vmul.f32 %v1955, %v1947
        %v1958 = vadd.f32 %v1952, %v1956
        %v1959 = vadd.f32 %v1953, %v1957
        %vm1960 = vmand %vm1859, %vm519
        %vm1961 = vmand %vm1860, %vm520
        %vm1962 = vmand %vm1960, %vm523
        %vm1963 = vmand %vm1961, %vm524
        %1964 = vrot.lane.b32.xlu0 %v378, 80
        %v1965 = vpop.permute.xlu0 %1964
        %1966 = vrot.lane.b32.xlu0 %v379, 80
        %v1967 = vpop.permute.xlu0 %1966
        %vm1968 = vcmp.lt.s32.totalorder %v215, 80
        %v1969 = vsel %vm1968, %v1965, %v1967
        %v1970 = vsel %vm1968, %v1967, %v1965
        %1971 = vrot.lane.b32.xlu0 %v386, 80
        %v1972 = vpop.permute.xlu0 %1971
        %1973 = vrot.lane.b32.xlu0 %v393, 80
        %v1974 = vpop.permute.xlu0 %1973
        %v1975 = vsel %vm1968, %v1972, %v1974
        %v1976 = vsel %vm1968, %v1974, %v1972
        %v1977 = vsel %vm1962, %v1969, 0.0
        %v1978 = vsel %vm1963, %v1970, 0.0
        %v1979 = vsel %vm1962, %v1975, 0.0
        %v1980 = vsel %vm1963, %v1976, 0.0
        %s1981 = sld [smem:[#allocation7 + $0x2d]]
        %v1982 = vstv %s1981
        %v1983 = vmul.f32 %v1982, %v1977
        %v1984 = vmul.f32 %v1982, %v1978
        %v1985 = vadd.f32 %v1958, %v1983
        %v1986 = vadd.f32 %v1959, %v1984
        %s1987 = sld [smem:[#allocation7 + $0x5e]]
        %v1988 = vstv %s1987
        %v1989 = vmul.f32 %v1988, %v1979
        %v1990 = vmul.f32 %v1988, %v1980
        %v1991 = vadd.f32 %v1985, %v1989
        %v1992 = vadd.f32 %v1986, %v1990
        %vm1993 = vmand %vm1859, %vm558
        %vm1994 = vmand %vm1860, %vm559
        %vm1995 = vmand %vm1993, %vm562
        %vm1996 = vmand %vm1994, %vm563
        %1997 = vrot.lane.b32.xlu0 %v378, 79
        %v1998 = vpop.permute.xlu0 %1997
        %1999 = vrot.lane.b32.xlu0 %v379, 79
        %v2000 = vpop.permute.xlu0 %1999
        %vm2001 = vcmp.lt.s32.totalorder %v215, 79
        %v2002 = vsel %vm2001, %v1998, %v2000
        %v2003 = vsel %vm2001, %v2000, %v1998
        %2004 = vrot.lane.b32.xlu0 %v386, 79
        %v2005 = vpop.permute.xlu0 %2004
        %2006 = vrot.lane.b32.xlu0 %v393, 79
        %v2007 = vpop.permute.xlu0 %2006
        %v2008 = vsel %vm2001, %v2005, %v2007
        %v2009 = vsel %vm2001, %v2007, %v2005
        %v2010 = vsel %vm1995, %v2002, 0.0
        %v2011 = vsel %vm1996, %v2003, 0.0
        %v2012 = vsel %vm1995, %v2008, 0.0
        %v2013 = vsel %vm1996, %v2009, 0.0
        %s2014 = sld [smem:[#allocation7 + $0x2e]]
        %v2015 = vstv %s2014
        %v2016 = vmul.f32 %v2015, %v2010
        %v2017 = vmul.f32 %v2015, %v2011
        %v2018 = vadd.f32 %v1991, %v2016
        %v2019 = vadd.f32 %v1992, %v2017
        %s2020 = sld [smem:[#allocation7 + $0x5f]]
        %v2021 = vstv %s2020
        %v2022 = vmul.f32 %v2021, %v2012
        %v2023 = vmul.f32 %v2021, %v2013
        %v2024 = vadd.f32 %v2018, %v2022
        %v2025 = vadd.f32 %v2019, %v2023
        %vm2026 = vmand %vm1859, %vm597
        %vm2027 = vmand %vm1860, %vm598
        %vm2028 = vmand %vm2026, %vm601
        %vm2029 = vmand %vm2027, %vm602
        %2030 = vrot.lane.b32.xlu0 %v378, 78
        %v2031 = vpop.permute.xlu0 %2030
        %2032 = vrot.lane.b32.xlu0 %v379, 78
        %v2033 = vpop.permute.xlu0 %2032
        %vm2034 = vcmp.lt.s32.totalorder %v215, 78
        %v2035 = vsel %vm2034, %v2031, %v2033
        %v2036 = vsel %vm2034, %v2033, %v2031
        %2037 = vrot.lane.b32.xlu0 %v386, 78
        %v2038 = vpop.permute.xlu0 %2037
        %2039 = vrot.lane.b32.xlu0 %v393, 78
        %v2040 = vpop.permute.xlu0 %2039
        %v2041 = vsel %vm2034, %v2038, %v2040
        %v2042 = vsel %vm2034, %v2040, %v2038
        %v2043 = vsel %vm2028, %v2035, 0.0
        %v2044 = vsel %vm2029, %v2036, 0.0
        %v2045 = vsel %vm2028, %v2041, 0.0
        %v2046 = vsel %vm2029, %v2042, 0.0
        %s2047 = sld [smem:[#allocation7 + $0x2f]]
        %v2048 = vstv %s2047
        %v2049 = vmul.f32 %v2048, %v2043
        %v2050 = vmul.f32 %v2048, %v2044
        %v2051 = vadd.f32 %v2024, %v2049
        %v2052 = vadd.f32 %v2025, %v2050
        %s2053 = sld [smem:[#allocation7 + $0x60]]
        %v2054 = vstv %s2053
        %v2055 = vmul.f32 %v2054, %v2045
        %v2056 = vmul.f32 %v2054, %v2046
        %v2057 = vadd.f32 %v2051, %v2055
        %v2058 = vadd.f32 %v2052, %v2056
        %vm2059 = vmand %vm1859, %vm636
        %vm2060 = vmand %vm1860, %vm637
        %vm2061 = vmand %vm2059, %vm640
        %vm2062 = vmand %vm2060, %vm641
        %2063 = vrot.lane.b32.xlu0 %v378, 77
        %v2064 = vpop.permute.xlu0 %2063
        %2065 = vrot.lane.b32.xlu0 %v379, 77
        %v2066 = vpop.permute.xlu0 %2065
        %vm2067 = vcmp.lt.s32.totalorder %v215, 77
        %v2068 = vsel %vm2067, %v2064, %v2066
        %v2069 = vsel %vm2067, %v2066, %v2064
        %2070 = vrot.lane.b32.xlu0 %v386, 77
        %v2071 = vpop.permute.xlu0 %2070
        %2072 = vrot.lane.b32.xlu0 %v393, 77
        %v2073 = vpop.permute.xlu0 %2072
        %v2074 = vsel %vm2067, %v2071, %v2073
        %v2075 = vsel %vm2067, %v2073, %v2071
        %v2076 = vsel %vm2061, %v2068, 0.0
        %v2077 = vsel %vm2062, %v2069, 0.0
        %v2078 = vsel %vm2061, %v2074, 0.0
        %v2079 = vsel %vm2062, %v2075, 0.0
        %s2080 = sld [smem:[#allocation7 + $0x30]]
        %v2081 = vstv %s2080
        %v2082 = vmul.f32 %v2081, %v2076
        %v2083 = vmul.f32 %v2081, %v2077
        %v2084 = vadd.f32 %v2057, %v2082
        %v2085 = vadd.f32 %v2058, %v2083
        %s2086 = sld [smem:[#allocation7 + $0x61]]
        %v2087 = vstv %s2086
        %v2088 = vmul.f32 %v2087, %v2078
        %v2089 = vmul.f32 %v2087, %v2079
        %v2090 = vadd.f32 %v2084, %v2088
        %v2091 = vadd.f32 %v2085, %v2089
        %v2092 = vxor.u32 %v2090, 2147483648
        %v2093 = vxor.u32 %v2091, 2147483648
        %v2094 = vmul.f32 %v2092, 1.442695
        %v2095 = vpow.pop %v2094
        %v2096 = vmul.f32 %v2093, 1.442695
        %v2097 = vpow.pop %v2096
        %v2098 = vadd.f32 %v2095, 1.0
        %v2099 = vadd.f32 %v2097, 1.0
        %v2100 = vrcp.pop %v2098
        %v2101 = vmul.f32 1.0, %v2100
        %v2102 = vrcp.pop %v2099
        %v2103 = vmul.f32 1.0, %v2102
        %v2104 = vlaneseq
        %v2105 = vshrl.u32 %v2104, 7
        %v2106 = vsub.s32 0, %v2105
        %v2107 = vrot.slane %v2101, %v2106
        %v2108 = vlaneseq
        %v2109 = vshrl.u32 %v2108, 7
        %v2110 = vsub.s32 0, %v2109
        %v2111 = vrot.slane %v2103, %v2110
        %v2114 = vcombine.low %v2107, %v2111
        %v2116 = vmul.f32 %v360, %v2114
        %2117 = vst [vmem:[%s211] sm:$0xff] %v2116
        %s2118 = sand.u32 %s98, 1
        %s2119 = scalar_lea.sflag [#allocation4], %s2118
        %s2120 = sand.u32 %s98, 1
        %s2121 = smul.addr %s2120, 8
        %s2122 = scalar_lea.vmem [#allocation9], %s2121
        // Predicated region
        $region45: #{tpu_custom_call.1} parent=31 // pred_check
          %p2123 = pneg %p108
        $region46: #{tpu_custom_call.1} parent=31 // pred_check_branch
          %2125 = sbr.rel (%p2123) target = $region48
        $region47: #{tpu_custom_call.1} parent=31 // pred_region
          %s2127 = ssub.s32 128, 128
          %2128 = vsyncadd %s2119, %s2127
          %s2129 = smul.addr %s22, 2
          %s2130 = smul.addr %s2129, 64
          %s2131 = scalar_lea.hbm %s3, %s2130
          %s2133 = sshll.u32 %s2122, 4
          %s2134 = int_to_ptr.vmem [resolvable:$true] %s2133
          %2136 = dma.vmem_to_hbm [thread:$0]  %s2134, 128, %s2131, %s2119
        $region48: #{tpu_custom_call.1} parent=31 // pred_fallthru
          _
      $region32: #{tpu_custom_call.1} parent=5 // pred_fallthru
        _
      %p2137 = scmp.le.s32.totalorder 2, %s17
      // Predicated region
      $region49: #{tpu_custom_call.1} parent=5 // pred_check
        %p2138 = pneg %p2137
      $region50: #{tpu_custom_call.1} parent=5 // pred_check_branch
        %2140 = sbr.rel (%p2138) target = $region52
      $region51: #{tpu_custom_call.1} parent=5 // pred_region
        %s2141 = ssub.s32 %s17, 2
        // Predicated region
        $region53: #{tpu_custom_call.1} parent=51 // pred_check
          %p2142 = pneg %p114
        $region54: #{tpu_custom_call.1} parent=51 // pred_check_branch
          %2144 = sbr.rel (%p2142) target = $region56
        $region55: #{tpu_custom_call.1} parent=51 // pred_region
          %s2145 = sand.u32 %s99, 1
          %s2146 = scalar_lea.sflag [#allocation4], %s2145
          %s2147 = sand.u32 %s99, 1
          %s2148 = smul.addr %s2147, 8
          %s2149 = scalar_lea.vmem [#allocation9], %s2148
          %2150 = dma.done %s2146, 128
        $region56: #{tpu_custom_call.1} parent=51 // pred_fallthru
          _
      $region52: #{tpu_custom_call.1} parent=5 // pred_fallthru
        _
    $region6: #{tpu_custom_call.1} parent=1 // loop_footer
      %s21 = sadd.s32 1, %s17
    $region7: #{tpu_custom_call.1} parent=1 // loop_footer_branch
      %16 = sbr.rel target = $region3
    $region8: #{tpu_custom_call.1} parent=1 // loop_exit
      _
    %2151 = vsyncpa [#allocation3], 1
    %s2152 = scalar_lea.sflag [#allocation3], 1
    %2153 = vsyncpa %s2152, 1
    %2154 = vsyncpa [#allocation4], 1
    %s2155 = scalar_lea.sflag [#allocation4], 1
    %2156 = vsyncpa %s2155, 1
    %2157 = vsyncpa [#allocation5], 1
    %s2158 = scalar_lea.sflag [#allocation5], 1
    %2159 = vsyncpa %s2158, 1
    %2160 = vsyncpa [#allocation6], 1
    %s2161 = scalar_lea.sflag [#allocation6], 1
    %2162 = vsyncpa %s2161, 1

</llo_original>
